<compile_context>
chip_gen: v7x
topology: tpu7x:2x2x1
jax: 0.10.0
libtpu: 0.0.40
codegen_flags: <defaults>
</compile_context>

<pallas_src>
import jax
import jax.numpy as jnp
from jax.experimental import pallas as pl
from jax.experimental.pallas import tpu as pltpu

# ---- small, module-consistent config -------------------------------------
LATENT_DIM = 32
LATENT_PAD = 128                                  # pad K to a full lane tile
CHANNELS = 4
IMG_SIZE = 16
IMG_DIM = CHANNELS * IMG_SIZE * IMG_SIZE          # 4 * 16 * 16 = 1024
HIDDEN = (128, 256, 512, 1024)
BN_EPS = 0.8                                      # nn.BatchNorm1d(out_feat, 0.8) -> eps=0.8
LRELU_SLOPE = 0.2
BATCH = 8                                         # demo batch; any B works and
                                                  # larger B amortizes the
                                                  # once-per-call weight stream


# ---- in-kernel helpers -----------------------------------------------------
def _matmul(x, w_ref):
    # Weights are bf16 (streaming-optimized); accumulate in f32 on the MXU.
    return jnp.dot(x.astype(jnp.bfloat16), w_ref[...],
                   preferred_element_type=jnp.float32)


def _batchnorm(x, gamma_ref, beta_ref):
    # Training-mode BN: per-feature batch mean / biased variance (f32).
    mu = jnp.mean(x, axis=0, keepdims=True)
    var = jnp.mean((x - mu) * (x - mu), axis=0, keepdims=True)
    return (x - mu) * jax.lax.rsqrt(var + BN_EPS) * gamma_ref[...] + beta_ref[...]


def _lrelu(x):
    # Identical to LeakyReLU(0.2) for slope in (0,1); single VALU max op.
    return jnp.maximum(x, LRELU_SLOPE * x)


# ---- the fused generator kernel -------------------------------------------
def generator_kernel(z_ref,
                     w1_ref, b1_ref,
                     w2_ref, g2_ref, be2_ref,
                     w3_ref, g3_ref, be3_ref,
                     w4_ref, g4_ref, be4_ref,
                     w5_ref, b5_ref,
                     out_ref):
    x = z_ref[...].astype(jnp.float32)

    # block(latent_dim, 128, normalize=False)   (K zero-padded to 128)
    x = _lrelu(_matmul(x, w1_ref) + b1_ref[...])
    # block(128, 256)   — Linear bias omitted: exactly cancelled by batch-stat BN
    x = _lrelu(_batchnorm(_matmul(x, w2_ref), g2_ref, be2_ref))
    # block(256, 512)
    x = _lrelu(_batchnorm(_matmul(x, w3_ref), g3_ref, be3_ref))
    # block(512, 1024)
    x = _lrelu(_batchnorm(_matmul(x, w4_ref), g4_ref, be4_ref))
    # Linear(1024, C*H*W) + Tanh
    x = jnp.tanh(_matmul(x, w5_ref) + b5_ref[...])

    out_ref[...] = x.astype(out_ref.dtype)


# ---- wrapper ---------------------------------------------------------------
def generator_forward(z, params):
    """z: (B, LATENT_DIM) float32 -> (B, C, H, W) float32 (NCHW)."""
    B = z.shape[0]
    # Zero-pad latent to a full 128-lane contraction tile (w1 rows are
    # zero-padded at init, so the product is unchanged).
    z_pad = jnp.pad(z.astype(jnp.float32),
                    ((0, 0), (0, LATENT_PAD - z.shape[1])))
    args = (z_pad,) + tuple(params)

    # Single grid step: every array is one full-extent block, weights are
    # DMA'd exactly once per call (no redundant re-streaming, no per-step
    # grid overhead on 1-TC chips).
    def _full2d(a):
        return pl.BlockSpec(a.shape, lambda i: (0, 0))

    in_specs = [_full2d(a) for a in args]
    out_spec = pl.BlockSpec((B, IMG_DIM), lambda i: (0, 0))

    # Advisory cost estimate (memory-bound kernel; helps XLA overlap neighbors).
    flops = 2 * B * (LATENT_DIM * HIDDEN[0]          # true K=32, not the pad
                     + HIDDEN[0] * HIDDEN[1]
                     + HIDDEN[1] * HIDDEN[2]
                     + HIDDEN[2] * HIDDEN[3]
                     + HIDDEN[3] * IMG_DIM)
    transcendentals = B * IMG_DIM + sum(HIDDEN[1:])           # tanh + rsqrt
    bytes_accessed = sum(int(a.size) * a.dtype.itemsize for a in args) \
        + B * IMG_DIM * 4
    cost = pl.CostEstimate(flops=flops,
                           transcendentals=transcendentals,
                           bytes_accessed=bytes_accessed)

    flat = pl.pallas_call(
        generator_kernel,
        out_shape=jax.ShapeDtypeStruct((B, IMG_DIM), jnp.float32),
        grid=(1,),
        in_specs=in_specs,
        out_specs=out_spec,
        compiler_params=pltpu.CompilerParams(
            dimension_semantics=("arbitrary",),
            vmem_limit_bytes=12 << 20,   # ~7 MiB actual (double-buffered bf16
                                         # weights + activations at small B)
        ),
        cost_estimate=cost,
    )(*args)

    # layout: NCHW, same as PyTorch img.view(B, *img_shape)
    return flat.reshape(B, CHANNELS, IMG_SIZE, IMG_SIZE)


# ---- deterministic parameter initialization (PyTorch-style) ---------------
def init_params(key):
    """Linear: U(-1/sqrt(fan_in), 1/sqrt(fan_in)) for W and b (PyTorch default).
    BatchNorm: gamma=1, beta=0.  Weights stored as (in, out) in bf16 (streamed);
    biases/gamma/beta stored as (1, out) f32.  W1 is zero-padded 32->128 rows.
    Biases of the BN-normalized blocks (layers 2-4) are not materialized: they
    are exactly cancelled by the training-mode BatchNorm mean subtraction."""
    dims = [LATENT_DIM] + list(HIDDEN) + [IMG_DIM]
    params = []
    for i in range(len(dims) - 1):
        fan_in, fan_out = dims[i], dims[i + 1]
        key, kw, kb = jax.random.split(key, 3)
        bound = 1.0 / (fan_in ** 0.5)
        w = jax.random.uniform(kw, (fan_in, fan_out), jnp.float32, -bound, bound)
        if i == 0:
            # pad the latent contraction dim to a full lane tile (zeros -> no-op)
            w = jnp.pad(w, ((0, LATENT_PAD - LATENT_DIM), (0, 0)))
        params.append(w.astype(jnp.bfloat16))      # stream weights as bf16
        has_bn = 0 < i < len(dims) - 2             # blocks 2..4 carry BatchNorm
        if has_bn:
            params.append(jnp.ones((1, fan_out), jnp.float32))    # gamma
            params.append(jnp.zeros((1, fan_out), jnp.float32))   # beta
        else:
            b = jax.random.uniform(kb, (1, fan_out), jnp.float32, -bound, bound)
            params.append(b)                       # tiny, keep f32
    # order: [w1, b1, w2, g2, be2, w3, g3, be3, w4, g4, be4, w5, b5]
    return params


# ---- main ------------------------------------------------------------------
if __name__ == "__main__":
    key = jax.random.PRNGKey(0)
    key, kz = jax.random.split(key)
    z = jax.random.normal(kz, (BATCH, LATENT_DIM), jnp.float32)
    params = init_params(key)

    img = generator_forward(z, params)
    jax.block_until_ready(img)

    assert img.shape == (BATCH, CHANNELS, IMG_SIZE, IMG_SIZE), img.shape
    assert bool(jnp.all(jnp.isfinite(img)))
    assert bool(jnp.all(jnp.abs(img) <= 1.0))   # tanh output range
    print("KERNEL_OK")
</pallas_src>

<mosaic_0001>
module attributes {stable_mosaic.version = 11 : i64} {
  func.func @generator_kernel(%arg0: i32, %arg1: memref<8x128xf32, #tpu.memory_space<vmem>>, %arg2: memref<128x128xbf16, #tpu.memory_space<vmem>>, %arg3: memref<1x128xf32, #tpu.memory_space<vmem>>, %arg4: memref<128x256xbf16, #tpu.memory_space<vmem>>, %arg5: memref<1x256xf32, #tpu.memory_space<vmem>>, %arg6: memref<1x256xf32, #tpu.memory_space<vmem>>, %arg7: memref<256x512xbf16, #tpu.memory_space<vmem>>, %arg8: memref<1x512xf32, #tpu.memory_space<vmem>>, %arg9: memref<1x512xf32, #tpu.memory_space<vmem>>, %arg10: memref<512x1024xbf16, #tpu.memory_space<vmem>>, %arg11: memref<1x1024xf32, #tpu.memory_space<vmem>>, %arg12: memref<1x1024xf32, #tpu.memory_space<vmem>>, %arg13: memref<1024x1024xbf16, #tpu.memory_space<vmem>>, %arg14: memref<1x1024xf32, #tpu.memory_space<vmem>>, %arg15: memref<8x1024xf32, #tpu.memory_space<vmem>>) attributes {dimension_semantics = [#tpu.dimension_semantics<arbitrary>], iteration_bounds = array<i64: 1>, scalar_prefetch = 0 : i64, scratch_operands = 0 : i64, tpu.core_type = #tpu.core_type<tc>, window_params = [{pipeline_mode = #tpu.pipeline_mode<synchronous>, transform_indices = @transform_0, window_bounds = array<i64: 8, 128>}, {pipeline_mode = #tpu.pipeline_mode<synchronous>, transform_indices = @transform_1, window_bounds = array<i64: 128, 128>}, {pipeline_mode = #tpu.pipeline_mode<synchronous>, transform_indices = @transform_2, window_bounds = array<i64: 1, 128>}, {pipeline_mode = #tpu.pipeline_mode<synchronous>, transform_indices = @transform_3, window_bounds = array<i64: 128, 256>}, {pipeline_mode = #tpu.pipeline_mode<synchronous>, transform_indices = @transform_4, window_bounds = array<i64: 1, 256>}, {pipeline_mode = #tpu.pipeline_mode<synchronous>, transform_indices = @transform_5, window_bounds = array<i64: 1, 256>}, {pipeline_mode = #tpu.pipeline_mode<synchronous>, transform_indices = @transform_6, window_bounds = array<i64: 256, 512>}, {pipeline_mode = #tpu.pipeline_mode<synchronous>, transform_indices = @transform_7, window_bounds = array<i64: 1, 512>}, {pipeline_mode = #tpu.pipeline_mode<synchronous>, transform_indices = @transform_8, window_bounds = array<i64: 1, 512>}, {pipeline_mode = #tpu.pipeline_mode<synchronous>, transform_indices = @transform_9, window_bounds = array<i64: 512, 1024>}, {pipeline_mode = #tpu.pipeline_mode<synchronous>, transform_indices = @transform_10, window_bounds = array<i64: 1, 1024>}, {pipeline_mode = #tpu.pipeline_mode<synchronous>, transform_indices = @transform_11, window_bounds = array<i64: 1, 1024>}, {pipeline_mode = #tpu.pipeline_mode<synchronous>, transform_indices = @transform_12, window_bounds = array<i64: 1024, 1024>}, {pipeline_mode = #tpu.pipeline_mode<synchronous>, transform_indices = @transform_13, window_bounds = array<i64: 1, 1024>}, {pipeline_mode = #tpu.pipeline_mode<synchronous>, transform_indices = @transform_14, window_bounds = array<i64: 8, 1024>}]} {
    %c0 = arith.constant 0 : index
    %c0_0 = arith.constant 0 : index
    %0 = vector.load %arg1[%c0, %c0_0] : memref<8x128xf32, #tpu.memory_space<vmem>>, vector<8x128xf32>
    %1 = arith.truncf %0 : vector<8x128xf32> to vector<8x128xbf16>
    %c0_1 = arith.constant 0 : index
    %c0_2 = arith.constant 0 : index
    %2 = vector.load %arg2[%c0_1, %c0_2] : memref<128x128xbf16, #tpu.memory_space<vmem>>, vector<128x128xbf16>
    %cst = arith.constant dense<0.000000e+00> : vector<8x128xf32>
    %3 = tpu.matmul %1, %2, %cst {dimension_numbers = #tpu.dot_dimension_numbers<[1], [0], [0], [1], [0, 0, 1, 1], [], []>} : vector<8x128xbf16>, vector<128x128xbf16>, vector<8x128xf32> -> vector<8x128xf32>
    %c0_3 = arith.constant 0 : index
    %c0_4 = arith.constant 0 : index
    %4 = vector.load %arg3[%c0_3, %c0_4] : memref<1x128xf32, #tpu.memory_space<vmem>>, vector<1x128xf32>
    %5 = vector.broadcast %4 : vector<1x128xf32> to vector<8x128xf32>
    %6 = arith.addf %3, %5 : vector<8x128xf32>
    %cst_5 = arith.constant 2.000000e-01 : f32
    %7 = vector.broadcast %cst_5 : f32 to vector<8x128xf32>
    %8 = arith.mulf %7, %6 : vector<8x128xf32>
    %9 = arith.maximumf %6, %8 : vector<8x128xf32>
    %10 = arith.truncf %9 : vector<8x128xf32> to vector<8x128xbf16>
    %c0_6 = arith.constant 0 : index
    %c0_7 = arith.constant 0 : index
    %11 = vector.load %arg4[%c0_6, %c0_7] : memref<128x256xbf16, #tpu.memory_space<vmem>>, vector<128x256xbf16>
    %cst_8 = arith.constant dense<0.000000e+00> : vector<8x256xf32>
    %12 = tpu.matmul %10, %11, %cst_8 {dimension_numbers = #tpu.dot_dimension_numbers<[1], [0], [0], [1], [0, 0, 1, 1], [], []>} : vector<8x128xbf16>, vector<128x256xbf16>, vector<8x256xf32> -> vector<8x256xf32>
    %cst_9 = arith.constant dense<0.000000e+00> : vector<256xf32>
    %13 = vector.multi_reduction <add>, %12, %cst_9 [0] : vector<8x256xf32> to vector<256xf32>
    %14 = vector.shape_cast %13 : vector<256xf32> to vector<1x256xf32>
    %cst_10 = arith.constant 8.000000e+00 : f32
    %15 = vector.broadcast %cst_10 : f32 to vector<1x256xf32>
    %16 = arith.divf %14, %15 : vector<1x256xf32>
    %17 = vector.broadcast %16 : vector<1x256xf32> to vector<8x256xf32>
    %18 = arith.subf %12, %17 : vector<8x256xf32>
    %19 = vector.broadcast %16 : vector<1x256xf32> to vector<8x256xf32>
    %20 = arith.subf %12, %19 : vector<8x256xf32>
    %21 = arith.mulf %18, %20 : vector<8x256xf32>
    %cst_11 = arith.constant dense<0.000000e+00> : vector<256xf32>
    %22 = vector.multi_reduction <add>, %21, %cst_11 [0] : vector<8x256xf32> to vector<256xf32>
    %23 = vector.shape_cast %22 : vector<256xf32> to vector<1x256xf32>
    %cst_12 = arith.constant 8.000000e+00 : f32
    %24 = vector.broadcast %cst_12 : f32 to vector<1x256xf32>
    %25 = arith.divf %23, %24 : vector<1x256xf32>
    %26 = vector.broadcast %16 : vector<1x256xf32> to vector<8x256xf32>
    %27 = arith.subf %12, %26 : vector<8x256xf32>
    %cst_13 = arith.constant 8.000000e-01 : f32
    %28 = vector.broadcast %cst_13 : f32 to vector<1x256xf32>
    %29 = arith.addf %25, %28 : vector<1x256xf32>
    %30 = math.rsqrt %29 : vector<1x256xf32>
    %31 = vector.broadcast %30 : vector<1x256xf32> to vector<8x256xf32>
    %32 = arith.mulf %27, %31 : vector<8x256xf32>
    %c0_14 = arith.constant 0 : index
    %c0_15 = arith.constant 0 : index
    %33 = vector.load %arg5[%c0_14, %c0_15] : memref<1x256xf32, #tpu.memory_space<vmem>>, vector<1x256xf32>
    %34 = vector.broadcast %33 : vector<1x256xf32> to vector<8x256xf32>
    %35 = arith.mulf %32, %34 : vector<8x256xf32>
    %c0_16 = arith.constant 0 : index
    %c0_17 = arith.constant 0 : index
    %36 = vector.load %arg6[%c0_16, %c0_17] : memref<1x256xf32, #tpu.memory_space<vmem>>, vector<1x256xf32>
    %37 = vector.broadcast %36 : vector<1x256xf32> to vector<8x256xf32>
    %38 = arith.addf %35, %37 : vector<8x256xf32>
    %cst_18 = arith.constant 2.000000e-01 : f32
    %39 = vector.broadcast %cst_18 : f32 to vector<8x256xf32>
    %40 = arith.mulf %39, %38 : vector<8x256xf32>
    %41 = arith.maximumf %38, %40 : vector<8x256xf32>
    %42 = arith.truncf %41 : vector<8x256xf32> to vector<8x256xbf16>
    %c0_19 = arith.constant 0 : index
    %c0_20 = arith.constant 0 : index
    %43 = vector.load %arg7[%c0_19, %c0_20] : memref<256x512xbf16, #tpu.memory_space<vmem>>, vector<256x512xbf16>
    %cst_21 = arith.constant dense<0.000000e+00> : vector<8x512xf32>
    %44 = tpu.matmul %42, %43, %cst_21 {dimension_numbers = #tpu.dot_dimension_numbers<[1], [0], [0], [1], [0, 0, 1, 1], [], []>} : vector<8x256xbf16>, vector<256x512xbf16>, vector<8x512xf32> -> vector<8x512xf32>
    %cst_22 = arith.constant dense<0.000000e+00> : vector<512xf32>
    %45 = vector.multi_reduction <add>, %44, %cst_22 [0] : vector<8x512xf32> to vector<512xf32>
    %46 = vector.shape_cast %45 : vector<512xf32> to vector<1x512xf32>
    %cst_23 = arith.constant 8.000000e+00 : f32
    %47 = vector.broadcast %cst_23 : f32 to vector<1x512xf32>
    %48 = arith.divf %46, %47 : vector<1x512xf32>
    %49 = vector.broadcast %48 : vector<1x512xf32> to vector<8x512xf32>
    %50 = arith.subf %44, %49 : vector<8x512xf32>
    %51 = vector.broadcast %48 : vector<1x512xf32> to vector<8x512xf32>
    %52 = arith.subf %44, %51 : vector<8x512xf32>
    %53 = arith.mulf %50, %52 : vector<8x512xf32>
    %cst_24 = arith.constant dense<0.000000e+00> : vector<512xf32>
    %54 = vector.multi_reduction <add>, %53, %cst_24 [0] : vector<8x512xf32> to vector<512xf32>
    %55 = vector.shape_cast %54 : vector<512xf32> to vector<1x512xf32>
    %cst_25 = arith.constant 8.000000e+00 : f32
    %56 = vector.broadcast %cst_25 : f32 to vector<1x512xf32>
    %57 = arith.divf %55, %56 : vector<1x512xf32>
    %58 = vector.broadcast %48 : vector<1x512xf32> to vector<8x512xf32>
    %59 = arith.subf %44, %58 : vector<8x512xf32>
    %cst_26 = arith.constant 8.000000e-01 : f32
    %60 = vector.broadcast %cst_26 : f32 to vector<1x512xf32>
    %61 = arith.addf %57, %60 : vector<1x512xf32>
    %62 = math.rsqrt %61 : vector<1x512xf32>
    %63 = vector.broadcast %62 : vector<1x512xf32> to vector<8x512xf32>
    %64 = arith.mulf %59, %63 : vector<8x512xf32>
    %c0_27 = arith.constant 0 : index
    %c0_28 = arith.constant 0 : index
    %65 = vector.load %arg8[%c0_27, %c0_28] : memref<1x512xf32, #tpu.memory_space<vmem>>, vector<1x512xf32>
    %66 = vector.broadcast %65 : vector<1x512xf32> to vector<8x512xf32>
    %67 = arith.mulf %64, %66 : vector<8x512xf32>
    %c0_29 = arith.constant 0 : index
    %c0_30 = arith.constant 0 : index
    %68 = vector.load %arg9[%c0_29, %c0_30] : memref<1x512xf32, #tpu.memory_space<vmem>>, vector<1x512xf32>
    %69 = vector.broadcast %68 : vector<1x512xf32> to vector<8x512xf32>
    %70 = arith.addf %67, %69 : vector<8x512xf32>
    %cst_31 = arith.constant 2.000000e-01 : f32
    %71 = vector.broadcast %cst_31 : f32 to vector<8x512xf32>
    %72 = arith.mulf %71, %70 : vector<8x512xf32>
    %73 = arith.maximumf %70, %72 : vector<8x512xf32>
    %74 = arith.truncf %73 : vector<8x512xf32> to vector<8x512xbf16>
    %c0_32 = arith.constant 0 : index
    %c0_33 = arith.constant 0 : index
    %75 = vector.load %arg10[%c0_32, %c0_33] : memref<512x1024xbf16, #tpu.memory_space<vmem>>, vector<512x1024xbf16>
    %cst_34 = arith.constant dense<0.000000e+00> : vector<8x1024xf32>
    %76 = tpu.matmul %74, %75, %cst_34 {dimension_numbers = #tpu.dot_dimension_numbers<[1], [0], [0], [1], [0, 0, 1, 1], [], []>} : vector<8x512xbf16>, vector<512x1024xbf16>, vector<8x1024xf32> -> vector<8x1024xf32>
    %cst_35 = arith.constant dense<0.000000e+00> : vector<1024xf32>
    %77 = vector.multi_reduction <add>, %76, %cst_35 [0] : vector<8x1024xf32> to vector<1024xf32>
    %78 = vector.shape_cast %77 : vector<1024xf32> to vector<1x1024xf32>
    %cst_36 = arith.constant 8.000000e+00 : f32
    %79 = vector.broadcast %cst_36 : f32 to vector<1x1024xf32>
    %80 = arith.divf %78, %79 : vector<1x1024xf32>
    %81 = vector.broadcast %80 : vector<1x1024xf32> to vector<8x1024xf32>
    %82 = arith.subf %76, %81 : vector<8x1024xf32>
    %83 = vector.broadcast %80 : vector<1x1024xf32> to vector<8x1024xf32>
    %84 = arith.subf %76, %83 : vector<8x1024xf32>
    %85 = arith.mulf %82, %84 : vector<8x1024xf32>
    %cst_37 = arith.constant dense<0.000000e+00> : vector<1024xf32>
    %86 = vector.multi_reduction <add>, %85, %cst_37 [0] : vector<8x1024xf32> to vector<1024xf32>
    %87 = vector.shape_cast %86 : vector<1024xf32> to vector<1x1024xf32>
    %cst_38 = arith.constant 8.000000e+00 : f32
    %88 = vector.broadcast %cst_38 : f32 to vector<1x1024xf32>
    %89 = arith.divf %87, %88 : vector<1x1024xf32>
    %90 = vector.broadcast %80 : vector<1x1024xf32> to vector<8x1024xf32>
    %91 = arith.subf %76, %90 : vector<8x1024xf32>
    %cst_39 = arith.constant 8.000000e-01 : f32
    %92 = vector.broadcast %cst_39 : f32 to vector<1x1024xf32>
    %93 = arith.addf %89, %92 : vector<1x1024xf32>
    %94 = math.rsqrt %93 : vector<1x1024xf32>
    %95 = vector.broadcast %94 : vector<1x1024xf32> to vector<8x1024xf32>
    %96 = arith.mulf %91, %95 : vector<8x1024xf32>
    %c0_40 = arith.constant 0 : index
    %c0_41 = arith.constant 0 : index
    %97 = vector.load %arg11[%c0_40, %c0_41] : memref<1x1024xf32, #tpu.memory_space<vmem>>, vector<1x1024xf32>
    %98 = vector.broadcast %97 : vector<1x1024xf32> to vector<8x1024xf32>
    %99 = arith.mulf %96, %98 : vector<8x1024xf32>
    %c0_42 = arith.constant 0 : index
    %c0_43 = arith.constant 0 : index
    %100 = vector.load %arg12[%c0_42, %c0_43] : memref<1x1024xf32, #tpu.memory_space<vmem>>, vector<1x1024xf32>
    %101 = vector.broadcast %100 : vector<1x1024xf32> to vector<8x1024xf32>
    %102 = arith.addf %99, %101 : vector<8x1024xf32>
    %cst_44 = arith.constant 2.000000e-01 : f32
    %103 = vector.broadcast %cst_44 : f32 to vector<8x1024xf32>
    %104 = arith.mulf %103, %102 : vector<8x1024xf32>
    %105 = arith.maximumf %102, %104 : vector<8x1024xf32>
    %106 = arith.truncf %105 : vector<8x1024xf32> to vector<8x1024xbf16>
    %c0_45 = arith.constant 0 : index
    %c0_46 = arith.constant 0 : index
    %107 = vector.load %arg13[%c0_45, %c0_46] : memref<1024x1024xbf16, #tpu.memory_space<vmem>>, vector<1024x1024xbf16>
    %cst_47 = arith.constant dense<0.000000e+00> : vector<8x1024xf32>
    %108 = tpu.matmul %106, %107, %cst_47 {dimension_numbers = #tpu.dot_dimension_numbers<[1], [0], [0], [1], [0, 0, 1, 1], [], []>} : vector<8x1024xbf16>, vector<1024x1024xbf16>, vector<8x1024xf32> -> vector<8x1024xf32>
    %c0_48 = arith.constant 0 : index
    %c0_49 = arith.constant 0 : index
    %109 = vector.load %arg14[%c0_48, %c0_49] : memref<1x1024xf32, #tpu.memory_space<vmem>>, vector<1x1024xf32>
    %110 = vector.broadcast %109 : vector<1x1024xf32> to vector<8x1024xf32>
    %111 = arith.addf %108, %110 : vector<8x1024xf32>
    %112 = math.tanh %111 : vector<8x1024xf32>
    %c0_50 = arith.constant 0 : index
    %c0_51 = arith.constant 0 : index
    %113 = vector.load %arg15[%c0_50, %c0_51] : memref<8x1024xf32, #tpu.memory_space<vmem>>, vector<8x1024xf32>
    tpu.vector_store %arg15[%c0_50, %c0_51], %112 {strides = array<i32>} : memref<8x1024xf32, #tpu.memory_space<vmem>>, vector<8x1024xf32>,
    return
  }
  func.func @transform_0(%arg0: i32) -> (i32, i32) {
    %c0_i32 = arith.constant 0 : i32
    %c0_i32_0 = arith.constant 0 : i32
    %c0_i32_1 = arith.constant 0 : i32
    return %c0_i32, %c0_i32_0 : i32, i32
  }
  func.func @transform_1(%arg0: i32) -> (i32, i32) {
    %c0_i32 = arith.constant 0 : i32
    %c0_i32_0 = arith.constant 0 : i32
    %c0_i32_1 = arith.constant 0 : i32
    return %c0_i32, %c0_i32_0 : i32, i32
  }
  func.func @transform_2(%arg0: i32) -> (i32, i32) {
    %c0_i32 = arith.constant 0 : i32
    %c0_i32_0 = arith.constant 0 : i32
    %c0_i32_1 = arith.constant 0 : i32
    return %c0_i32, %c0_i32_0 : i32, i32
  }
  func.func @transform_3(%arg0: i32) -> (i32, i32) {
    %c0_i32 = arith.constant 0 : i32
    %c0_i32_0 = arith.constant 0 : i32
    %c0_i32_1 = arith.constant 0 : i32
    return %c0_i32, %c0_i32_0 : i32, i32
  }
  func.func @transform_4(%arg0: i32) -> (i32, i32) {
    %c0_i32 = arith.constant 0 : i32
    %c0_i32_0 = arith.constant 0 : i32
    %c0_i32_1 = arith.constant 0 : i32
    return %c0_i32, %c0_i32_0 : i32, i32
  }
  func.func @transform_5(%arg0: i32) -> (i32, i32) {
    %c0_i32 = arith.constant 0 : i32
    %c0_i32_0 = arith.constant 0 : i32
    %c0_i32_1 = arith.constant 0 : i32
    return %c0_i32, %c0_i32_0 : i32, i32
  }
  func.func @transform_6(%arg0: i32) -> (i32, i32) {
    %c0_i32 = arith.constant 0 : i32
    %c0_i32_0 = arith.constant 0 : i32
    %c0_i32_1 = arith.constant 0 : i32
    return %c0_i32, %c0_i32_0 : i32, i32
  }
  func.func @transform_7(%arg0: i32) -> (i32, i32) {
    %c0_i32 = arith.constant 0 : i32
    %c0_i32_0 = arith.constant 0 : i32
    %c0_i32_1 = arith.constant 0 : i32
    return %c0_i32, %c0_i32_0 : i32, i32
  }
  func.func @transform_8(%arg0: i32) -> (i32, i32) {
    %c0_i32 = arith.constant 0 : i32
    %c0_i32_0 = arith.constant 0 : i32
    %c0_i32_1 = arith.constant 0 : i32
    return %c0_i32, %c0_i32_0 : i32, i32
  }
  func.func @transform_9(%arg0: i32) -> (i32, i32) {
    %c0_i32 = arith.constant 0 : i32
    %c0_i32_0 = arith.constant 0 : i32
    %c0_i32_1 = arith.constant 0 : i32
    return %c0_i32, %c0_i32_0 : i32, i32
  }
  func.func @transform_10(%arg0: i32) -> (i32, i32) {
    %c0_i32 = arith.constant 0 : i32
    %c0_i32_0 = arith.constant 0 : i32
    %c0_i32_1 = arith.constant 0 : i32
    return %c0_i32, %c0_i32_0 : i32, i32
  }
  func.func @transform_11(%arg0: i32) -> (i32, i32) {
    %c0_i32 = arith.constant 0 : i32
    %c0_i32_0 = arith.constant 0 : i32
    %c0_i32_1 = arith.constant 0 : i32
    return %c0_i32, %c0_i32_0 : i32, i32
  }
  func.func @transform_12(%arg0: i32) -> (i32, i32) {
    %c0_i32 = arith.constant 0 : i32
    %c0_i32_0 = arith.constant 0 : i32
    %c0_i32_1 = arith.constant 0 : i32
    return %c0_i32, %c0_i32_0 : i32, i32
  }
  func.func @transform_13(%arg0: i32) -> (i32, i32) {
    %c0_i32 = arith.constant 0 : i32
    %c0_i32_0 = arith.constant 0 : i32
    %c0_i32_1 = arith.constant 0 : i32
    return %c0_i32, %c0_i32_0 : i32, i32
  }
  func.func @transform_14(%arg0: i32) -> (i32, i32) {
    %c0_i32 = arith.constant 0 : i32
    %c0_i32_0 = arith.constant 0 : i32
    %c0_i32_1 = arith.constant 0 : i32
    return %c0_i32, %c0_i32_0 : i32, i32
  }
}

</mosaic_0001>

<llo_original>
// kernel: tpu_custom_call.1
$region0: #{tpu_custom_call.1}
  #allocation0 [shape = 'u32[]', space=smem, size = 0x4, offset = 0x4, fixed_abs, tag = 'smem constant byte address 0x4 - core index']
  #allocation1 [shape = 'u32[144,128]{1,0:T(1,128)}', space=vmem, size = 0x12000, scoped, tag = 'internal scratch']
  %s0 = inlined_call_operand.hbm [shape: f32[8,128], index: 0, kind: input, shape index: {}]
  %s1 = inlined_call_operand.hbm [shape: bf16[128,128], index: 1, kind: input, shape index: {}]
  %s2 = inlined_call_operand.hbm [shape: f32[1,128], index: 2, kind: input, shape index: {}]
  %s3 = inlined_call_operand.hbm [shape: bf16[128,256], index: 3, kind: input, shape index: {}]
  %s4 = inlined_call_operand.hbm [shape: f32[1,256], index: 4, kind: input, shape index: {}]
  %s5 = inlined_call_operand.hbm [shape: f32[1,256], index: 5, kind: input, shape index: {}]
  %s6 = inlined_call_operand.hbm [shape: bf16[256,512], index: 6, kind: input, shape index: {}]
  %s7 = inlined_call_operand.hbm [shape: f32[1,512], index: 7, kind: input, shape index: {}]
  %s8 = inlined_call_operand.hbm [shape: f32[1,512], index: 8, kind: input, shape index: {}]
  %s9 = inlined_call_operand.hbm [shape: bf16[512,1024], index: 9, kind: input, shape index: {}]
  %s10 = inlined_call_operand.hbm [shape: f32[1,1024], index: 10, kind: input, shape index: {}]
  %s11 = inlined_call_operand.hbm [shape: f32[1,1024], index: 11, kind: input, shape index: {}]
  %s12 = inlined_call_operand.hbm [shape: bf16[1024,1024], index: 12, kind: input, shape index: {}]
  %s13 = inlined_call_operand.hbm [shape: f32[1,1024], index: 13, kind: input, shape index: {}]
  %s14 = inlined_call_operand.hbm [shape: f32[8,1024], index: 14, kind: output, shape index: {}]
  %s15 = sld [smem:[#allocation0]]
  $region122: #{tpu_custom_call.1} parent=0
    _
  %s17 = ssub.s32 1, %s15
  %s18 = scalar_select 0, %s17, %s15
  $region1: #{tpu_custom_call.1} parent=0
    #allocation2 [shape = 'u8[4096]{0}', space=vmem, size = 0x1000, scoped, tag = 'input window, operand 0, single buffered']
    #allocation3 [shape = 's32[1]{0}', space=sflag, size = 0x4, scoped, tag = 'scoped memory for tpu_custom_call.1']
    #allocation4 [shape = 's32[1]{0}', space=sflag, size = 0x4, scoped, tag = 'scoped memory for tpu_custom_call.1']
    #allocation5 [shape = 'u8[32768]{0}', space=vmem, size = 0x8000, scoped, tag = 'input window, operand 1, single buffered']
    #allocation6 [shape = 's32[1]{0}', space=sflag, size = 0x4, scoped, tag = 'scoped memory for tpu_custom_call.1']
    #allocation7 [shape = 'u8[512]{0}', space=vmem, size = 0x400, scoped, tag = 'input window, operand 2, single buffered']
    #allocation8 [shape = 'u8[65536]{0}', space=vmem, size = 0x10000, scoped, tag = 'input window, operand 3, single buffered']
    #allocation9 [shape = 's32[1]{0}', space=sflag, size = 0x4, scoped, tag = 'scoped memory for tpu_custom_call.1']
    #allocation10 [shape = 'u8[1024]{0}', space=vmem, size = 0x400, scoped, tag = 'input window, operand 4, single buffered']
    #allocation11 [shape = 'u8[1024]{0}', space=vmem, size = 0x400, scoped, tag = 'input window, operand 5, single buffered']
    #allocation12 [shape = 's32[1]{0}', space=sflag, size = 0x4, scoped, tag = 'scoped memory for tpu_custom_call.1']
    #allocation13 [shape = 'u8[262144]{0}', space=vmem, size = 0x40000, scoped, tag = 'input window, operand 6, single buffered']
    #allocation14 [shape = 'u8[2048]{0}', space=vmem, size = 0x800, scoped, tag = 'input window, operand 7, single buffered']
    #allocation15 [shape = 's32[1]{0}', space=sflag, size = 0x4, scoped, tag = 'scoped memory for tpu_custom_call.1']
    #allocation16 [shape = 'u8[2048]{0}', space=vmem, size = 0x800, scoped, tag = 'input window, operand 8, single buffered']
    #allocation17 [shape = 'u8[1048576]{0}', space=vmem, size = 0x100000, scoped, tag = 'input window, operand 9, single buffered']
    #allocation18 [shape = 's32[1]{0}', space=sflag, size = 0x4, scoped, tag = 'scoped memory for tpu_custom_call.1']
    #allocation19 [shape = 'u8[4096]{0}', space=vmem, size = 0x1000, scoped, tag = 'input window, operand 10, single buffered']
    #allocation20 [shape = 'u8[4096]{0}', space=vmem, size = 0x1000, scoped, tag = 'input window, operand 11, single buffered']
    #allocation21 [shape = 's32[1]{0}', space=sflag, size = 0x4, scoped, tag = 'scoped memory for tpu_custom_call.1']
    #allocation22 [shape = 'u8[2097152]{0}', space=vmem, size = 0x200000, scoped, tag = 'input window, operand 12, single buffered']
    #allocation23 [shape = 'u8[4096]{0}', space=vmem, size = 0x1000, scoped, tag = 'input window, operand 13, single buffered']
    #allocation24 [shape = 's32[1]{0}', space=sflag, size = 0x4, scoped, tag = 'scoped memory for tpu_custom_call.1']
    #allocation25 [shape = 'u8[32768]{0}', space=vmem, size = 0x8000, scoped, tag = 'output window, operand 0, single buffered']
    %19 = vsyncpa [#allocation3], 0
    %20 = vsyncpa [#allocation6], 0
    %21 = vsyncpa [#allocation9], 0
    %22 = vsyncpa [#allocation12], 0
    %23 = vsyncpa [#allocation15], 0
    %24 = vsyncpa [#allocation18], 0
    %25 = vsyncpa [#allocation21], 0
    %26 = vsyncpa [#allocation24], 0
    %27 = vsyncpa [#allocation4], 0
    // Predicated region
    $region2: #{tpu_custom_call.1} parent=1 // pred_check
      _
    $region3: #{tpu_custom_call.1} parent=1 // pred_check_branch
      %29 = sbr.rel (0) target = $region5
    $region4: #{tpu_custom_call.1} parent=1 // pred_region
      %s31 = ssub.s32 128, 128
      %32 = vsyncadd [#allocation3], %s31
      %s34 = sshll.u32 [#allocation2], 4
      %s35 = int_to_ptr.vmem [resolvable:$true] %s34
      %37 = dma.hbm_to_vmem [thread:$0]  %s0, 128, %s35, [#allocation3]
    $region5: #{tpu_custom_call.1} parent=1 // pred_fallthru
      _
    // Predicated region
    $region6: #{tpu_custom_call.1} parent=1 // pred_check
      _
    $region7: #{tpu_custom_call.1} parent=1 // pred_check_branch
      %39 = sbr.rel (0) target = $region9
    $region8: #{tpu_custom_call.1} parent=1 // pred_region
      %s41 = ssub.s32 1024, 1024
      %42 = vsyncadd [#allocation6], %s41
      %s43 = sshll.u32 [#allocation5], 4
      %s44 = int_to_ptr.vmem [resolvable:$true] %s43
      %49 = dma.hbm_to_vmem [thread:$0]  %s1, 1024, %s44, [#allocation6], 64, 64, 4
    $region9: #{tpu_custom_call.1} parent=1 // pred_fallthru
      _
    // Predicated region
    $region10: #{tpu_custom_call.1} parent=1 // pred_check
      _
    $region11: #{tpu_custom_call.1} parent=1 // pred_check_branch
      %51 = sbr.rel (0) target = $region13
    $region12: #{tpu_custom_call.1} parent=1 // pred_region
      %s53 = ssub.s32 16, 16
      %54 = vsyncadd [#allocation6], %s53
      %s56 = sshll.u32 [#allocation7], 4
      %s57 = int_to_ptr.vmem [resolvable:$true] %s56
      %59 = dma.hbm_to_vmem [thread:$0]  %s2, 16, %s57, [#allocation6]
    $region13: #{tpu_custom_call.1} parent=1 // pred_fallthru
      _
    // Predicated region
    $region14: #{tpu_custom_call.1} parent=1 // pred_check
      _
    $region15: #{tpu_custom_call.1} parent=1 // pred_check_branch
      %61 = sbr.rel (0) target = $region17
    $region16: #{tpu_custom_call.1} parent=1 // pred_region
      %s63 = ssub.s32 2048, 2048
      %64 = vsyncadd [#allocation9], %s63
      %s65 = sshll.u32 [#allocation8], 4
      %s66 = int_to_ptr.vmem [resolvable:$true] %s65
      %71 = dma.hbm_to_vmem [thread:$0]  %s3, 2048, %s66, [#allocation9], 128, 128, 8
    $region17: #{tpu_custom_call.1} parent=1 // pred_fallthru
      _
    // Predicated region
    $region18: #{tpu_custom_call.1} parent=1 // pred_check
      _
    $region19: #{tpu_custom_call.1} parent=1 // pred_check_branch
      %73 = sbr.rel (0) target = $region21
    $region20: #{tpu_custom_call.1} parent=1 // pred_region
      %s75 = ssub.s32 32, 32
      %76 = vsyncadd [#allocation9], %s75
      %s78 = sshll.u32 [#allocation10], 4
      %s79 = int_to_ptr.vmem [resolvable:$true] %s78
      %81 = dma.hbm_to_vmem [thread:$0]  %s4, 32, %s79, [#allocation9]
    $region21: #{tpu_custom_call.1} parent=1 // pred_fallthru
      _
    // Predicated region
    $region22: #{tpu_custom_call.1} parent=1 // pred_check
      _
    $region23: #{tpu_custom_call.1} parent=1 // pred_check_branch
      %83 = sbr.rel (0) target = $region25
    $region24: #{tpu_custom_call.1} parent=1 // pred_region
      %s85 = ssub.s32 32, 32
      %86 = vsyncadd [#allocation12], %s85
      %s88 = sshll.u32 [#allocation11], 4
      %s89 = int_to_ptr.vmem [resolvable:$true] %s88
      %91 = dma.hbm_to_vmem [thread:$0]  %s5, 32, %s89, [#allocation12]
    $region25: #{tpu_custom_call.1} parent=1 // pred_fallthru
      _
    // Predicated region
    $region26: #{tpu_custom_call.1} parent=1 // pred_check
      _
    $region27: #{tpu_custom_call.1} parent=1 // pred_check_branch
      %93 = sbr.rel (0) target = $region29
    $region28: #{tpu_custom_call.1} parent=1 // pred_region
      %s95 = ssub.s32 8192, 8192
      %96 = vsyncadd [#allocation12], %s95
      %s97 = sshll.u32 [#allocation13], 4
      %s98 = int_to_ptr.vmem [resolvable:$true] %s97
      %103 = dma.hbm_to_vmem [thread:$0]  %s6, 8192, %s98, [#allocation12], 256, 256, 16
    $region29: #{tpu_custom_call.1} parent=1 // pred_fallthru
      _
    // Predicated region
    $region30: #{tpu_custom_call.1} parent=1 // pred_check
      _
    $region31: #{tpu_custom_call.1} parent=1 // pred_check_branch
      %105 = sbr.rel (0) target = $region33
    $region32: #{tpu_custom_call.1} parent=1 // pred_region
      %s107 = ssub.s32 64, 64
      %108 = vsyncadd [#allocation15], %s107
      %s110 = sshll.u32 [#allocation14], 4
      %s111 = int_to_ptr.vmem [resolvable:$true] %s110
      %113 = dma.hbm_to_vmem [thread:$0]  %s7, 64, %s111, [#allocation15]
    $region33: #{tpu_custom_call.1} parent=1 // pred_fallthru
      _
    // Predicated region
    $region34: #{tpu_custom_call.1} parent=1 // pred_check
      _
    $region35: #{tpu_custom_call.1} parent=1 // pred_check_branch
      %115 = sbr.rel (0) target = $region37
    $region36: #{tpu_custom_call.1} parent=1 // pred_region
      %s117 = ssub.s32 64, 64
      %118 = vsyncadd [#allocation15], %s117
      %s120 = sshll.u32 [#allocation16], 4
      %s121 = int_to_ptr.vmem [resolvable:$true] %s120
      %123 = dma.hbm_to_vmem [thread:$0]  %s8, 64, %s121, [#allocation15]
    $region37: #{tpu_custom_call.1} parent=1 // pred_fallthru
      _
    // Predicated region
    $region38: #{tpu_custom_call.1} parent=1 // pred_check
      _
    $region39: #{tpu_custom_call.1} parent=1 // pred_check_branch
      %125 = sbr.rel (0) target = $region41
    $region40: #{tpu_custom_call.1} parent=1 // pred_region
      %s127 = ssub.s32 32768, 32768
      %128 = vsyncadd [#allocation18], %s127
      %s129 = sshll.u32 [#allocation17], 4
      %s130 = int_to_ptr.vmem [resolvable:$true] %s129
      %135 = dma.hbm_to_vmem [thread:$0]  %s9, 32768, %s130, [#allocation18], 512, 512, 32
    $region41: #{tpu_custom_call.1} parent=1 // pred_fallthru
      _
    // Predicated region
    $region42: #{tpu_custom_call.1} parent=1 // pred_check
      _
    $region43: #{tpu_custom_call.1} parent=1 // pred_check_branch
      %137 = sbr.rel (0) target = $region45
    $region44: #{tpu_custom_call.1} parent=1 // pred_region
      %s139 = ssub.s32 128, 128
      %140 = vsyncadd [#allocation18], %s139
      %s142 = sshll.u32 [#allocation19], 4
      %s143 = int_to_ptr.vmem [resolvable:$true] %s142
      %145 = dma.hbm_to_vmem [thread:$0]  %s10, 128, %s143, [#allocation18]
    $region45: #{tpu_custom_call.1} parent=1 // pred_fallthru
      _
    // Predicated region
    $region46: #{tpu_custom_call.1} parent=1 // pred_check
      _
    $region47: #{tpu_custom_call.1} parent=1 // pred_check_branch
      %147 = sbr.rel (0) target = $region49
    $region48: #{tpu_custom_call.1} parent=1 // pred_region
      %s149 = ssub.s32 128, 128
      %150 = vsyncadd [#allocation21], %s149
      %s152 = sshll.u32 [#allocation20], 4
      %s153 = int_to_ptr.vmem [resolvable:$true] %s152
      %155 = dma.hbm_to_vmem [thread:$0]  %s11, 128, %s153, [#allocation21]
    $region49: #{tpu_custom_call.1} parent=1 // pred_fallthru
      _
    // Predicated region
    $region50: #{tpu_custom_call.1} parent=1 // pred_check
      _
    $region51: #{tpu_custom_call.1} parent=1 // pred_check_branch
      %157 = sbr.rel (0) target = $region53
    $region52: #{tpu_custom_call.1} parent=1 // pred_region
      %s159 = ssub.s32 65536, 65536
      %160 = vsyncadd [#allocation21], %s159
      %s161 = sshll.u32 [#allocation22], 4
      %s162 = int_to_ptr.vmem [resolvable:$true] %s161
      %167 = dma.hbm_to_vmem [thread:$0]  %s12, 65536, %s162, [#allocation21], 512, 512, 32
    $region53: #{tpu_custom_call.1} parent=1 // pred_fallthru
      _
    // Predicated region
    $region54: #{tpu_custom_call.1} parent=1 // pred_check
      _
    $region55: #{tpu_custom_call.1} parent=1 // pred_check_branch
      %169 = sbr.rel (0) target = $region57
    $region56: #{tpu_custom_call.1} parent=1 // pred_region
      %s171 = ssub.s32 128, 128
      %172 = vsyncadd [#allocation24], %s171
      %s174 = sshll.u32 [#allocation23], 4
      %s175 = int_to_ptr.vmem [resolvable:$true] %s174
      %177 = dma.hbm_to_vmem [thread:$0]  %s13, 128, %s175, [#allocation24]
    $region57: #{tpu_custom_call.1} parent=1 // pred_fallthru
      _
    // Predicated region
    $region58: #{tpu_custom_call.1} parent=1 // pred_check
      _
    $region59: #{tpu_custom_call.1} parent=1 // pred_check_branch
      %179 = sbr.rel (0) target = $region61
    $region60: #{tpu_custom_call.1} parent=1 // pred_region
      %180 = dma.done [#allocation3], 128
    $region61: #{tpu_custom_call.1} parent=1 // pred_fallthru
      _
    // Predicated region
    $region62: #{tpu_custom_call.1} parent=1 // pred_check
      _
    $region63: #{tpu_custom_call.1} parent=1 // pred_check_branch
      %182 = sbr.rel (0) target = $region65
    $region64: #{tpu_custom_call.1} parent=1 // pred_region
      %183 = dma.done [#allocation6], 1024
    $region65: #{tpu_custom_call.1} parent=1 // pred_fallthru
      _
    // Predicated region
    $region66: #{tpu_custom_call.1} parent=1 // pred_check
      _
    $region67: #{tpu_custom_call.1} parent=1 // pred_check_branch
      %185 = sbr.rel (0) target = $region69
    $region68: #{tpu_custom_call.1} parent=1 // pred_region
      %186 = dma.done [#allocation6], 16
    $region69: #{tpu_custom_call.1} parent=1 // pred_fallthru
      _
    // Predicated region
    $region70: #{tpu_custom_call.1} parent=1 // pred_check
      _
    $region71: #{tpu_custom_call.1} parent=1 // pred_check_branch
      %188 = sbr.rel (0) target = $region73
    $region72: #{tpu_custom_call.1} parent=1 // pred_region
      %189 = dma.done [#allocation9], 2048
    $region73: #{tpu_custom_call.1} parent=1 // pred_fallthru
      _
    // Predicated region
    $region74: #{tpu_custom_call.1} parent=1 // pred_check
      _
    $region75: #{tpu_custom_call.1} parent=1 // pred_check_branch
      %191 = sbr.rel (0) target = $region77
    $region76: #{tpu_custom_call.1} parent=1 // pred_region
      %192 = dma.done [#allocation9], 32
    $region77: #{tpu_custom_call.1} parent=1 // pred_fallthru
      _
    // Predicated region
    $region78: #{tpu_custom_call.1} parent=1 // pred_check
      _
    $region79: #{tpu_custom_call.1} parent=1 // pred_check_branch
      %194 = sbr.rel (0) target = $region81
    $region80: #{tpu_custom_call.1} parent=1 // pred_region
      %195 = dma.done [#allocation12], 32
    $region81: #{tpu_custom_call.1} parent=1 // pred_fallthru
      _
    // Predicated region
    $region82: #{tpu_custom_call.1} parent=1 // pred_check
      _
    $region83: #{tpu_custom_call.1} parent=1 // pred_check_branch
      %197 = sbr.rel (0) target = $region85
    $region84: #{tpu_custom_call.1} parent=1 // pred_region
      %198 = dma.done [#allocation12], 8192
    $region85: #{tpu_custom_call.1} parent=1 // pred_fallthru
      _
    // Predicated region
    $region86: #{tpu_custom_call.1} parent=1 // pred_check
      _
    $region87: #{tpu_custom_call.1} parent=1 // pred_check_branch
      %200 = sbr.rel (0) target = $region89
    $region88: #{tpu_custom_call.1} parent=1 // pred_region
      %201 = dma.done [#allocation15], 64
    $region89: #{tpu_custom_call.1} parent=1 // pred_fallthru
      _
    // Predicated region
    $region90: #{tpu_custom_call.1} parent=1 // pred_check
      _
    $region91: #{tpu_custom_call.1} parent=1 // pred_check_branch
      %203 = sbr.rel (0) target = $region93
    $region92: #{tpu_custom_call.1} parent=1 // pred_region
      %204 = dma.done [#allocation15], 64
    $region93: #{tpu_custom_call.1} parent=1 // pred_fallthru
      _
    // Predicated region
    $region94: #{tpu_custom_call.1} parent=1 // pred_check
      _
    $region95: #{tpu_custom_call.1} parent=1 // pred_check_branch
      %206 = sbr.rel (0) target = $region97
    $region96: #{tpu_custom_call.1} parent=1 // pred_region
      %207 = dma.done [#allocation18], 32768
    $region97: #{tpu_custom_call.1} parent=1 // pred_fallthru
      _
    // Predicated region
    $region98: #{tpu_custom_call.1} parent=1 // pred_check
      _
    $region99: #{tpu_custom_call.1} parent=1 // pred_check_branch
      %209 = sbr.rel (0) target = $region101
    $region100: #{tpu_custom_call.1} parent=1 // pred_region
      %210 = dma.done [#allocation18], 128
    $region101: #{tpu_custom_call.1} parent=1 // pred_fallthru
      _
    // Predicated region
    $region102: #{tpu_custom_call.1} parent=1 // pred_check
      _
    $region103: #{tpu_custom_call.1} parent=1 // pred_check_branch
      %212 = sbr.rel (0) target = $region105
    $region104: #{tpu_custom_call.1} parent=1 // pred_region
      %213 = dma.done [#allocation21], 128
    $region105: #{tpu_custom_call.1} parent=1 // pred_fallthru
      _
    // Predicated region
    $region106: #{tpu_custom_call.1} parent=1 // pred_check
      _
    $region107: #{tpu_custom_call.1} parent=1 // pred_check_branch
      %215 = sbr.rel (0) target = $region109
    $region108: #{tpu_custom_call.1} parent=1 // pred_region
      %216 = dma.done [#allocation21], 65536
    $region109: #{tpu_custom_call.1} parent=1 // pred_fallthru
      _
    // Predicated region
    $region110: #{tpu_custom_call.1} parent=1 // pred_check
      _
    $region111: #{tpu_custom_call.1} parent=1 // pred_check_branch
      %218 = sbr.rel (0) target = $region113
    $region112: #{tpu_custom_call.1} parent=1 // pred_region
      %219 = dma.done [#allocation24], 128
    $region113: #{tpu_custom_call.1} parent=1 // pred_fallthru
      _
    %v221 = vld [vmem:[#allocation2] sm:$0xff]
    %v222 = vpack.c.bf16 %v221, %v221
    %v223 = vld [vmem:[#allocation5] sm:$0xf]
    %v224 = vld [vmem:[#allocation5 + $0x4] sm:$0xf]
    %v225 = vld [vmem:[#allocation5 + $0x8] sm:$0xf]
    %v226 = vld [vmem:[#allocation5 + $0xc] sm:$0xf]
    %v227 = vld [vmem:[#allocation5 + $0x10] sm:$0xf]
    %v228 = vld [vmem:[#allocation5 + $0x14] sm:$0xf]
    %v229 = vld [vmem:[#allocation5 + $0x18] sm:$0xf]
    %v230 = vld [vmem:[#allocation5 + $0x1c] sm:$0xf]
    %v231 = vld [vmem:[#allocation5 + $0x20] sm:$0xf]
    %v232 = vld [vmem:[#allocation5 + $0x24] sm:$0xf]
    %v233 = vld [vmem:[#allocation5 + $0x28] sm:$0xf]
    %v234 = vld [vmem:[#allocation5 + $0x2c] sm:$0xf]
    %v235 = vld [vmem:[#allocation5 + $0x30] sm:$0xf]
    %v236 = vld [vmem:[#allocation5 + $0x34] sm:$0xf]
    %v237 = vld [vmem:[#allocation5 + $0x38] sm:$0xf]
    %v238 = vld [vmem:[#allocation5 + $0x3c] sm:$0xf]
    %v239 = vld [vmem:[#allocation7] sm:$0x1]
    %v241 = vlaneseq
    %v242 = vshrl.u32 %v241, 7
    %v243 = vsub.s32 0, %v242
    %v244 = vrot.slane %v239, %v243
    %v262 = vunpack.c.l.b16 %v223
    %v263 = vunpack.c.l.b16 %v224
    %v264 = vunpack.c.l.b16 %v225
    %v265 = vunpack.c.l.b16 %v226
    %v266 = vunpack.c.l.b16 %v227
    %v267 = vunpack.c.l.b16 %v228
    %v268 = vunpack.c.l.b16 %v229
    %v269 = vunpack.c.l.b16 %v230
    %v270 = vunpack.c.l.b16 %v231
    %v271 = vunpack.c.l.b16 %v232
    %v272 = vunpack.c.l.b16 %v233
    %v273 = vunpack.c.l.b16 %v234
    %v274 = vunpack.c.l.b16 %v235
    %v275 = vunpack.c.l.b16 %v236
    %v276 = vunpack.c.l.b16 %v237
    %v277 = vunpack.c.l.b16 %v238
    %v278 = vpack.c.b16 %v263, %v262
    %v279 = vpack.c.b16 %v265, %v264
    %v280 = vpack.c.b16 %v267, %v266
    %v281 = vpack.c.b16 %v269, %v268
    %v282 = vpack.c.b16 %v271, %v270
    %v283 = vpack.c.b16 %v273, %v272
    %v284 = vpack.c.b16 %v275, %v274
    %v285 = vpack.c.b16 %v277, %v276
    %294 = vmatprep.subr.bf16.mxu0 0
    %295 = vmatpush1.bf16.msra.mxu0 %v278
    %296 = vmatprep.subr.bf16.mxu0 0
    %297 = vmatpush1.bf16.msra.mxu0 %v279
    %298 = vmatprep.subr.bf16.mxu0 0
    %299 = vmatpush1.bf16.msra.mxu0 %v280
    %300 = vmatprep.subr.bf16.mxu0 0
    %301 = vmatpush1.bf16.msra.mxu0 %v281
    %302 = vmatprep.subr.bf16.mxu0 0
    %303 = vmatpush1.bf16.msra.mxu0 %v282
    %304 = vmatprep.subr.bf16.mxu0 0
    %305 = vmatpush1.bf16.msra.mxu0 %v283
    %306 = vmatprep.subr.bf16.mxu0 0
    %307 = vmatpush1.bf16.msra.mxu0 %v284
    %308 = vmatprep.subr.bf16.mxu0 0
    %309 = vmatpush1.bf16.msra.mxu0 %v285
    %310 = vmatprep.subr.bf16.mxu0 0
    %311 = vmatpush1.bf16.msra.mxu0 0
    %312 = vmatprep.subr.bf16.mxu0 0
    %313 = vmatpush1.bf16.msra.mxu0 0
    %314 = vmatprep.subr.bf16.mxu0 0
    %315 = vmatpush1.bf16.msra.mxu0 0
    %316 = vmatprep.subr.bf16.mxu0 0
    %317 = vmatpush1.bf16.msra.mxu0 0
    %318 = vmatprep.subr.bf16.mxu0 0
    %319 = vmatpush1.bf16.msra.mxu0 0
    %320 = vmatprep.subr.bf16.mxu0 0
    %321 = vmatpush1.bf16.msra.mxu0 0
    %322 = vmatprep.subr.bf16.mxu0 0
    %323 = vmatpush1.bf16.msra.mxu0 0
    %324 = vmatprep.subr.bf16.mxu0 0
    %325 = vmatpush1.bf16.msra.mxu0 0
    %326 = vmatprep.mubr.bf16.mxu0 0
    %327 = vmatmul.mubr.bf16.gmra.mrb[0].mxu0 %v222
    %v328 = vpop.f32.mrb[0].mxu0
    %v329 = vadd.f32 %v244, %v328
    %v330 = vpop.f32.mrb[0].mxu0
    %v331 = vpop.f32.mrb[0].mxu0
    %v332 = vpop.f32.mrb[0].mxu0
    %333 = vdwg.mxu0
    %v334 = vmul.f32 %v329, 0.2
    %v335 = vmax.f32 %v329, %v334
    %v336 = vpack.c.bf16 %v335, %v335
    %v337 = vld [vmem:[#allocation8] sm:$0xff]
    %v338 = vld [vmem:[#allocation8 + $0x8] sm:$0xff]
    %v339 = vld [vmem:[#allocation8 + $0x10] sm:$0xff]
    %v340 = vld [vmem:[#allocation8 + $0x18] sm:$0xff]
    %v341 = vld [vmem:[#allocation8 + $0x20] sm:$0xff]
    %v342 = vld [vmem:[#allocation8 + $0x28] sm:$0xff]
    %v343 = vld [vmem:[#allocation8 + $0x30] sm:$0xff]
    %v344 = vld [vmem:[#allocation8 + $0x38] sm:$0xff]
    %v345 = vld [vmem:[#allocation8 + $0x40] sm:$0xff]
    %v346 = vld [vmem:[#allocation8 + $0x48] sm:$0xff]
    %v347 = vld [vmem:[#allocation8 + $0x50] sm:$0xff]
    %v348 = vld [vmem:[#allocation8 + $0x58] sm:$0xff]
    %v349 = vld [vmem:[#allocation8 + $0x60] sm:$0xff]
    %v350 = vld [vmem:[#allocation8 + $0x68] sm:$0xff]
    %v351 = vld [vmem:[#allocation8 + $0x70] sm:$0xff]
    %v352 = vld [vmem:[#allocation8 + $0x78] sm:$0xff]
    %v369 = vunpack.c.l.b16 %v337
    %v370 = vunpack.c.h.b16 %v337
    %v371 = vunpack.c.l.b16 %v338
    %v372 = vunpack.c.h.b16 %v338
    %v373 = vunpack.c.l.b16 %v339
    %v374 = vunpack.c.h.b16 %v339
    %v375 = vunpack.c.l.b16 %v340
    %v376 = vunpack.c.h.b16 %v340
    %v377 = vunpack.c.l.b16 %v341
    %v378 = vunpack.c.h.b16 %v341
    %v379 = vunpack.c.l.b16 %v342
    %v380 = vunpack.c.h.b16 %v342
    %v381 = vunpack.c.l.b16 %v343
    %v382 = vunpack.c.h.b16 %v343
    %v383 = vunpack.c.l.b16 %v344
    %v384 = vunpack.c.h.b16 %v344
    %v385 = vunpack.c.l.b16 %v345
    %v386 = vunpack.c.h.b16 %v345
    %v387 = vunpack.c.l.b16 %v346
    %v388 = vunpack.c.h.b16 %v346
    %v389 = vunpack.c.l.b16 %v347
    %v390 = vunpack.c.h.b16 %v347
    %v391 = vunpack.c.l.b16 %v348
    %v392 = vunpack.c.h.b16 %v348
    %v393 = vunpack.c.l.b16 %v349
    %v394 = vunpack.c.h.b16 %v349
    %v395 = vunpack.c.l.b16 %v350
    %v396 = vunpack.c.h.b16 %v350
    %v397 = vunpack.c.l.b16 %v351
    %v398 = vunpack.c.h.b16 %v351
    %v399 = vunpack.c.l.b16 %v352
    %v400 = vunpack.c.h.b16 %v352
    %v401 = vpack.c.b16 %v371, %v369
    %v402 = vpack.c.b16 %v372, %v370
    %v403 = vpack.c.b16 %v375, %v373
    %v404 = vpack.c.b16 %v376, %v374
    %v405 = vpack.c.b16 %v379, %v377
    %v406 = vpack.c.b16 %v380, %v378
    %v407 = vpack.c.b16 %v383, %v381
    %v408 = vpack.c.b16 %v384, %v382
    %v409 = vpack.c.b16 %v387, %v385
    %v410 = vpack.c.b16 %v388, %v386
    %v411 = vpack.c.b16 %v391, %v389
    %v412 = vpack.c.b16 %v392, %v390
    %v413 = vpack.c.b16 %v395, %v393
    %v414 = vpack.c.b16 %v396, %v394
    %v415 = vpack.c.b16 %v399, %v397
    %v416 = vpack.c.b16 %v400, %v398
    %433 = vmatprep.subr.bf16.mxu0 %v402
    %434 = vmatpush1.bf16.msra.mxu0 %v401
    %435 = vmatprep.subr.bf16.mxu0 %v404
    %436 = vmatpush1.bf16.msra.mxu0 %v403
    %437 = vmatprep.subr.bf16.mxu0 %v406
    %438 = vmatpush1.bf16.msra.mxu0 %v405
    %439 = vmatprep.subr.bf16.mxu0 %v408
    %440 = vmatpush1.bf16.msra.mxu0 %v407
    %441 = vmatprep.subr.bf16.mxu0 %v410
    %442 = vmatpush1.bf16.msra.mxu0 %v409
    %443 = vmatprep.subr.bf16.mxu0 %v412
    %444 = vmatpush1.bf16.msra.mxu0 %v411
    %445 = vmatprep.subr.bf16.mxu0 %v414
    %446 = vmatpush1.bf16.msra.mxu0 %v413
    %447 = vmatprep.subr.bf16.mxu0 %v416
    %448 = vmatpush1.bf16.msra.mxu0 %v415
    %449 = vmatprep.subr.bf16.mxu0 0
    %450 = vmatpush1.bf16.msra.mxu0 0
    %451 = vmatprep.subr.bf16.mxu0 0
    %452 = vmatpush1.bf16.msra.mxu0 0
    %453 = vmatprep.subr.bf16.mxu0 0
    %454 = vmatpush1.bf16.msra.mxu0 0
    %455 = vmatprep.subr.bf16.mxu0 0
    %456 = vmatpush1.bf16.msra.mxu0 0
    %457 = vmatprep.subr.bf16.mxu0 0
    %458 = vmatpush1.bf16.msra.mxu0 0
    %459 = vmatprep.subr.bf16.mxu0 0
    %460 = vmatpush1.bf16.msra.mxu0 0
    %461 = vmatprep.subr.bf16.mxu0 0
    %462 = vmatpush1.bf16.msra.mxu0 0
    %463 = vmatprep.subr.bf16.mxu0 0
    %464 = vmatpush1.bf16.msra.mxu0 0
    %465 = vmatprep.mubr.bf16.mxu0 0
    %466 = vmatmul.mubr.bf16.gmra.mrb[0].mxu0 %v336
    %v467 = vpop.f32.mrb[0].mxu0
    %v468 = vadd.f32 0.0, %v467
    %v469 = vpop.f32.mrb[0].mxu0
    %v470 = vadd.f32 0.0, %v469
    %v471 = vpop.f32.mrb[0].mxu0
    %v472 = vpop.f32.mrb[0].mxu0
    %473 = vdwg.mxu0
    %v474 = vrot.slane %v468, 4
    %v475 = vadd.f32 %v468, %v474
    %v476 = vrot.slane %v475, 2
    %v477 = vadd.f32 %v475, %v476
    %v478 = vrot.slane %v477, 1
    %v479 = vadd.f32 %v477, %v478
    %v480 = vrot.slane %v470, 4
    %v481 = vadd.f32 %v470, %v480
    %v482 = vrot.slane %v481, 2
    %v483 = vadd.f32 %v481, %v482
    %v484 = vrot.slane %v483, 1
    %v485 = vadd.f32 %v483, %v484
    %v486 = vrcp.pop 8.0
    %v487 = vmul.f32 %v479, %v486
    %v488 = vmul.f32 %v485, %v486
    %v489 = vsub.f32 %v468, %v487
    %v490 = vsub.f32 %v470, %v488
    %v491 = vmul.f32 %v489, %v489
    %v492 = vmul.f32 %v490, %v490
    %v493 = vrot.slane %v491, 4
    %v494 = vadd.f32 %v491, %v493
    %v495 = vrot.slane %v494, 2
    %v496 = vadd.f32 %v494, %v495
    %v497 = vrot.slane %v496, 1
    %v498 = vadd.f32 %v496, %v497
    %v499 = vrot.slane %v492, 4
    %v500 = vadd.f32 %v492, %v499
    %v501 = vrot.slane %v500, 2
    %v502 = vadd.f32 %v500, %v501
    %v503 = vrot.slane %v502, 1
    %v504 = vadd.f32 %v502, %v503
    %v505 = vmul.f32 %v498, %v486
    %v506 = vmul.f32 %v504, %v486
    %v507 = vadd.f32 %v505, 0.8
    %v508 = vadd.f32 %v506, 0.8
    %v509 = vrsqrt.pop %v507
    %v510 = vrsqrt.pop %v508
    %v511 = vmul.f32 %v489, %v509
    %v512 = vmul.f32 %v490, %v510
    %v513 = vld [vmem:[#allocation10] sm:$0x3]
    %v515 = vlaneseq
    %v516 = vshrl.u32 %v515, 7
    %v517 = vsub.s32 0, %v516
    %v518 = vrot.slane %v513, %v517
    %v519 = vlaneseq
    %v520 = vshrl.u32 %v519, 7
    %v521 = vsub.s32 1, %v520
    %v522 = vrot.slane %v513, %v521
    %v525 = vmul.f32 %v511, %v518
    %v526 = vmul.f32 %v512, %v522
    %v527 = vld [vmem:[#allocation11] sm:$0x3]
    %v529 = vlaneseq
    %v530 = vshrl.u32 %v529, 7
    %v531 = vsub.s32 0, %v530
    %v532 = vrot.slane %v527, %v531
    %v533 = vlaneseq
    %v534 = vshrl.u32 %v533, 7
    %v535 = vsub.s32 1, %v534
    %v536 = vrot.slane %v527, %v535
    %v539 = vadd.f32 %v525, %v532
    %v540 = vadd.f32 %v526, %v536
    %v541 = vmul.f32 %v539, 0.2
    %v542 = vmul.f32 %v540, 0.2
    %v543 = vmax.f32 %v539, %v541
    %v544 = vmax.f32 %v540, %v542
    %v545 = vpack.c.bf16 %v543, %v543
    %v546 = vpack.c.bf16 %v544, %v544
    %v547 = vld [vmem:[#allocation13] sm:$0xff]
    %v548 = vld [vmem:[#allocation13 + $0x8] sm:$0xff]
    %v549 = vld [vmem:[#allocation13 + $0x10] sm:$0xff]
    %v550 = vld [vmem:[#allocation13 + $0x18] sm:$0xff]
    %v551 = vld [vmem:[#allocation13 + $0x20] sm:$0xff]
    %v552 = vld [vmem:[#allocation13 + $0x28] sm:$0xff]
    %v553 = vld [vmem:[#allocation13 + $0x30] sm:$0xff]
    %v554 = vld [vmem:[#allocation13 + $0x38] sm:$0xff]
    %v555 = vld [vmem:[#allocation13 + $0x40] sm:$0xff]
    %v556 = vld [vmem:[#allocation13 + $0x48] sm:$0xff]
    %v557 = vld [vmem:[#allocation13 + $0x50] sm:$0xff]
    %v558 = vld [vmem:[#allocation13 + $0x58] sm:$0xff]
    %v559 = vld [vmem:[#allocation13 + $0x60] sm:$0xff]
    %v560 = vld [vmem:[#allocation13 + $0x68] sm:$0xff]
    %v561 = vld [vmem:[#allocation13 + $0x70] sm:$0xff]
    %v562 = vld [vmem:[#allocation13 + $0x78] sm:$0xff]
    %v563 = vld [vmem:[#allocation13 + $0x80] sm:$0xff]
    %v564 = vld [vmem:[#allocation13 + $0x88] sm:$0xff]
    %v565 = vld [vmem:[#allocation13 + $0x90] sm:$0xff]
    %v566 = vld [vmem:[#allocation13 + $0x98] sm:$0xff]
    %v567 = vld [vmem:[#allocation13 + $0xa0] sm:$0xff]
    %v568 = vld [vmem:[#allocation13 + $0xa8] sm:$0xff]
    %v569 = vld [vmem:[#allocation13 + $0xb0] sm:$0xff]
    %v570 = vld [vmem:[#allocation13 + $0xb8] sm:$0xff]
    %v571 = vld [vmem:[#allocation13 + $0xc0] sm:$0xff]
    %v572 = vld [vmem:[#allocation13 + $0xc8] sm:$0xff]
    %v573 = vld [vmem:[#allocation13 + $0xd0] sm:$0xff]
    %v574 = vld [vmem:[#allocation13 + $0xd8] sm:$0xff]
    %v575 = vld [vmem:[#allocation13 + $0xe0] sm:$0xff]
    %v576 = vld [vmem:[#allocation13 + $0xe8] sm:$0xff]
    %v577 = vld [vmem:[#allocation13 + $0xf0] sm:$0xff]
    %v578 = vld [vmem:[#allocation13 + $0xf8] sm:$0xff]
    %v579 = vld [vmem:[#allocation13 + $0x100] sm:$0xff]
    %v580 = vld [vmem:[#allocation13 + $0x108] sm:$0xff]
    %v581 = vld [vmem:[#allocation13 + $0x110] sm:$0xff]
    %v582 = vld [vmem:[#allocation13 + $0x118] sm:$0xff]
    %v583 = vld [vmem:[#allocation13 + $0x120] sm:$0xff]
    %v584 = vld [vmem:[#allocation13 + $0x128] sm:$0xff]
    %v585 = vld [vmem:[#allocation13 + $0x130] sm:$0xff]
    %v586 = vld [vmem:[#allocation13 + $0x138] sm:$0xff]
    %v587 = vld [vmem:[#allocation13 + $0x140] sm:$0xff]
    %v588 = vld [vmem:[#allocation13 + $0x148] sm:$0xff]
    %v589 = vld [vmem:[#allocation13 + $0x150] sm:$0xff]
    %v590 = vld [vmem:[#allocation13 + $0x158] sm:$0xff]
    %v591 = vld [vmem:[#allocation13 + $0x160] sm:$0xff]
    %v592 = vld [vmem:[#allocation13 + $0x168] sm:$0xff]
    %v593 = vld [vmem:[#allocation13 + $0x170] sm:$0xff]
    %v594 = vld [vmem:[#allocation13 + $0x178] sm:$0xff]
    %v595 = vld [vmem:[#allocation13 + $0x180] sm:$0xff]
    %v596 = vld [vmem:[#allocation13 + $0x188] sm:$0xff]
    %v597 = vld [vmem:[#allocation13 + $0x190] sm:$0xff]
    %v598 = vld [vmem:[#allocation13 + $0x198] sm:$0xff]
    %v599 = vld [vmem:[#allocation13 + $0x1a0] sm:$0xff]
    %v600 = vld [vmem:[#allocation13 + $0x1a8] sm:$0xff]
    %v601 = vld [vmem:[#allocation13 + $0x1b0] sm:$0xff]
    %v602 = vld [vmem:[#allocation13 + $0x1b8] sm:$0xff]
    %v603 = vld [vmem:[#allocation13 + $0x1c0] sm:$0xff]
    %v604 = vld [vmem:[#allocation13 + $0x1c8] sm:$0xff]
    %v605 = vld [vmem:[#allocation13 + $0x1d0] sm:$0xff]
    %v606 = vld [vmem:[#allocation13 + $0x1d8] sm:$0xff]
    %v607 = vld [vmem:[#allocation13 + $0x1e0] sm:$0xff]
    %v608 = vld [vmem:[#allocation13 + $0x1e8] sm:$0xff]
    %v609 = vld [vmem:[#allocation13 + $0x1f0] sm:$0xff]
    %v610 = vld [vmem:[#allocation13 + $0x1f8] sm:$0xff]
    %v675 = vunpack.c.l.b16 %v547
    %v676 = vunpack.c.h.b16 %v547
    %v677 = vunpack.c.l.b16 %v548
    %v678 = vunpack.c.h.b16 %v548
    %v679 = vunpack.c.l.b16 %v549
    %v680 = vunpack.c.h.b16 %v549
    %v681 = vunpack.c.l.b16 %v550
    %v682 = vunpack.c.h.b16 %v550
    %v683 = vunpack.c.l.b16 %v551
    %v684 = vunpack.c.h.b16 %v551
    %v685 = vunpack.c.l.b16 %v552
    %v686 = vunpack.c.h.b16 %v552
    %v687 = vunpack.c.l.b16 %v553
    %v688 = vunpack.c.h.b16 %v553
    %v689 = vunpack.c.l.b16 %v554
    %v690 = vunpack.c.h.b16 %v554
    %v691 = vunpack.c.l.b16 %v555
    %v692 = vunpack.c.h.b16 %v555
    %v693 = vunpack.c.l.b16 %v556
    %v694 = vunpack.c.h.b16 %v556
    %v695 = vunpack.c.l.b16 %v557
    %v696 = vunpack.c.h.b16 %v557
    %v697 = vunpack.c.l.b16 %v558
    %v698 = vunpack.c.h.b16 %v558
    %v699 = vunpack.c.l.b16 %v559
    %v700 = vunpack.c.h.b16 %v559
    %v701 = vunpack.c.l.b16 %v560
    %v702 = vunpack.c.h.b16 %v560
    %v703 = vunpack.c.l.b16 %v561
    %v704 = vunpack.c.h.b16 %v561
    %v705 = vunpack.c.l.b16 %v562
    %v706 = vunpack.c.h.b16 %v562
    %v707 = vunpack.c.l.b16 %v563
    %v708 = vunpack.c.h.b16 %v563
    %v709 = vunpack.c.l.b16 %v564
    %v710 = vunpack.c.h.b16 %v564
    %v711 = vunpack.c.l.b16 %v565
    %v712 = vunpack.c.h.b16 %v565
    %v713 = vunpack.c.l.b16 %v566
    %v714 = vunpack.c.h.b16 %v566
    %v715 = vunpack.c.l.b16 %v567
    %v716 = vunpack.c.h.b16 %v567
    %v717 = vunpack.c.l.b16 %v568
    %v718 = vunpack.c.h.b16 %v568
    %v719 = vunpack.c.l.b16 %v569
    %v720 = vunpack.c.h.b16 %v569
    %v721 = vunpack.c.l.b16 %v570
    %v722 = vunpack.c.h.b16 %v570
    %v723 = vunpack.c.l.b16 %v571
    %v724 = vunpack.c.h.b16 %v571
    %v725 = vunpack.c.l.b16 %v572
    %v726 = vunpack.c.h.b16 %v572
    %v727 = vunpack.c.l.b16 %v573
    %v728 = vunpack.c.h.b16 %v573
    %v729 = vunpack.c.l.b16 %v574
    %v730 = vunpack.c.h.b16 %v574
    %v731 = vunpack.c.l.b16 %v575
    %v732 = vunpack.c.h.b16 %v575
    %v733 = vunpack.c.l.b16 %v576
    %v734 = vunpack.c.h.b16 %v576
    %v735 = vunpack.c.l.b16 %v577
    %v736 = vunpack.c.h.b16 %v577
    %v737 = vunpack.c.l.b16 %v578
    %v738 = vunpack.c.h.b16 %v578
    %v739 = vunpack.c.l.b16 %v579
    %v740 = vunpack.c.h.b16 %v579
    %v741 = vunpack.c.l.b16 %v580
    %v742 = vunpack.c.h.b16 %v580
    %v743 = vunpack.c.l.b16 %v581
    %v744 = vunpack.c.h.b16 %v581
    %v745 = vunpack.c.l.b16 %v582
    %v746 = vunpack.c.h.b16 %v582
    %v747 = vunpack.c.l.b16 %v583
    %v748 = vunpack.c.h.b16 %v583
    %v749 = vunpack.c.l.b16 %v584
    %v750 = vunpack.c.h.b16 %v584
    %v751 = vunpack.c.l.b16 %v585
    %v752 = vunpack.c.h.b16 %v585
    %v753 = vunpack.c.l.b16 %v586
    %v754 = vunpack.c.h.b16 %v586
    %v755 = vunpack.c.l.b16 %v587
    %v756 = vunpack.c.h.b16 %v587
    %v757 = vunpack.c.l.b16 %v588
    %v758 = vunpack.c.h.b16 %v588
    %v759 = vunpack.c.l.b16 %v589
    %v760 = vunpack.c.h.b16 %v589
    %v761 = vunpack.c.l.b16 %v590
    %v762 = vunpack.c.h.b16 %v590
    %v763 = vunpack.c.l.b16 %v591
    %v764 = vunpack.c.h.b16 %v591
    %v765 = vunpack.c.l.b16 %v592
    %v766 = vunpack.c.h.b16 %v592
    %v767 = vunpack.c.l.b16 %v593
    %v768 = vunpack.c.h.b16 %v593
    %v769 = vunpack.c.l.b16 %v594
    %v770 = vunpack.c.h.b16 %v594
    %v771 = vunpack.c.l.b16 %v595
    %v772 = vunpack.c.h.b16 %v595
    %v773 = vunpack.c.l.b16 %v596
    %v774 = vunpack.c.h.b16 %v596
    %v775 = vunpack.c.l.b16 %v597
    %v776 = vunpack.c.h.b16 %v597
    %v777 = vunpack.c.l.b16 %v598
    %v778 = vunpack.c.h.b16 %v598
    %v779 = vunpack.c.l.b16 %v599
    %v780 = vunpack.c.h.b16 %v599
    %v781 = vunpack.c.l.b16 %v600
    %v782 = vunpack.c.h.b16 %v600
    %v783 = vunpack.c.l.b16 %v601
    %v784 = vunpack.c.h.b16 %v601
    %v785 = vunpack.c.l.b16 %v602
    %v786 = vunpack.c.h.b16 %v602
    %v787 = vunpack.c.l.b16 %v603
    %v788 = vunpack.c.h.b16 %v603
    %v789 = vunpack.c.l.b16 %v604
    %v790 = vunpack.c.h.b16 %v604
    %v791 = vunpack.c.l.b16 %v605
    %v792 = vunpack.c.h.b16 %v605
    %v793 = vunpack.c.l.b16 %v606
    %v794 = vunpack.c.h.b16 %v606
    %v795 = vunpack.c.l.b16 %v607
    %v796 = vunpack.c.h.b16 %v607
    %v797 = vunpack.c.l.b16 %v608
    %v798 = vunpack.c.h.b16 %v608
    %v799 = vunpack.c.l.b16 %v609
    %v800 = vunpack.c.h.b16 %v609
    %v801 = vunpack.c.l.b16 %v610
    %v802 = vunpack.c.h.b16 %v610
    %v803 = vpack.c.b16 %v679, %v675
    %v804 = vpack.c.b16 %v680, %v676
    %v805 = vpack.c.b16 %v681, %v677
    %v806 = vpack.c.b16 %v682, %v678
    %v807 = vpack.c.b16 %v687, %v683
    %v808 = vpack.c.b16 %v688, %v684
    %v809 = vpack.c.b16 %v689, %v685
    %v810 = vpack.c.b16 %v690, %v686
    %v811 = vpack.c.b16 %v695, %v691
    %v812 = vpack.c.b16 %v696, %v692
    %v813 = vpack.c.b16 %v697, %v693
    %v814 = vpack.c.b16 %v698, %v694
    %v815 = vpack.c.b16 %v703, %v699
    %v816 = vpack.c.b16 %v704, %v700
    %v817 = vpack.c.b16 %v705, %v701
    %v818 = vpack.c.b16 %v706, %v702
    %v819 = vpack.c.b16 %v711, %v707
    %v820 = vpack.c.b16 %v712, %v708
    %v821 = vpack.c.b16 %v713, %v709
    %v822 = vpack.c.b16 %v714, %v710
    %v823 = vpack.c.b16 %v719, %v715
    %v824 = vpack.c.b16 %v720, %v716
    %v825 = vpack.c.b16 %v721, %v717
    %v826 = vpack.c.b16 %v722, %v718
    %v827 = vpack.c.b16 %v727, %v723
    %v828 = vpack.c.b16 %v728, %v724
    %v829 = vpack.c.b16 %v729, %v725
    %v830 = vpack.c.b16 %v730, %v726
    %v831 = vpack.c.b16 %v735, %v731
    %v832 = vpack.c.b16 %v736, %v732
    %v833 = vpack.c.b16 %v737, %v733
    %v834 = vpack.c.b16 %v738, %v734
    %v835 = vpack.c.b16 %v743, %v739
    %v836 = vpack.c.b16 %v744, %v740
    %v837 = vpack.c.b16 %v745, %v741
    %v838 = vpack.c.b16 %v746, %v742
    %v839 = vpack.c.b16 %v751, %v747
    %v840 = vpack.c.b16 %v752, %v748
    %v841 = vpack.c.b16 %v753, %v749
    %v842 = vpack.c.b16 %v754, %v750
    %v843 = vpack.c.b16 %v759, %v755
    %v844 = vpack.c.b16 %v760, %v756
    %v845 = vpack.c.b16 %v761, %v757
    %v846 = vpack.c.b16 %v762, %v758
    %v847 = vpack.c.b16 %v767, %v763
    %v848 = vpack.c.b16 %v768, %v764
    %v849 = vpack.c.b16 %v769, %v765
    %v850 = vpack.c.b16 %v770, %v766
    %v851 = vpack.c.b16 %v775, %v771
    %v852 = vpack.c.b16 %v776, %v772
    %v853 = vpack.c.b16 %v777, %v773
    %v854 = vpack.c.b16 %v778, %v774
    %v855 = vpack.c.b16 %v783, %v779
    %v856 = vpack.c.b16 %v784, %v780
    %v857 = vpack.c.b16 %v785, %v781
    %v858 = vpack.c.b16 %v786, %v782
    %v859 = vpack.c.b16 %v791, %v787
    %v860 = vpack.c.b16 %v792, %v788
    %v861 = vpack.c.b16 %v793, %v789
    %v862 = vpack.c.b16 %v794, %v790
    %v863 = vpack.c.b16 %v799, %v795
    %v864 = vpack.c.b16 %v800, %v796
    %v865 = vpack.c.b16 %v801, %v797
    %v866 = vpack.c.b16 %v802, %v798
    %931 = vmatprep.subr.bf16.mxu0 %v804
    %932 = vmatpush1.bf16.msra.mxu0 %v803
    %933 = vmatprep.subr.bf16.mxu0 %v808
    %934 = vmatpush1.bf16.msra.mxu0 %v807
    %935 = vmatprep.subr.bf16.mxu0 %v812
    %936 = vmatpush1.bf16.msra.mxu0 %v811
    %937 = vmatprep.subr.bf16.mxu0 %v816
    %938 = vmatpush1.bf16.msra.mxu0 %v815
    %939 = vmatprep.subr.bf16.mxu0 %v820
    %940 = vmatpush1.bf16.msra.mxu0 %v819
    %941 = vmatprep.subr.bf16.mxu0 %v824
    %942 = vmatpush1.bf16.msra.mxu0 %v823
    %943 = vmatprep.subr.bf16.mxu0 %v828
    %944 = vmatpush1.bf16.msra.mxu0 %v827
    %945 = vmatprep.subr.bf16.mxu0 %v832
    %946 = vmatpush1.bf16.msra.mxu0 %v831
    %947 = vmatprep.subr.bf16.mxu0 %v836
    %948 = vmatpush1.bf16.msra.mxu0 %v835
    %949 = vmatprep.subr.bf16.mxu0 %v840
    %950 = vmatpush1.bf16.msra.mxu0 %v839
    %951 = vmatprep.subr.bf16.mxu0 %v844
    %952 = vmatpush1.bf16.msra.mxu0 %v843
    %953 = vmatprep.subr.bf16.mxu0 %v848
    %954 = vmatpush1.bf16.msra.mxu0 %v847
    %955 = vmatprep.subr.bf16.mxu0 %v852
    %956 = vmatpush1.bf16.msra.mxu0 %v851
    %957 = vmatprep.subr.bf16.mxu0 %v856
    %958 = vmatpush1.bf16.msra.mxu0 %v855
    %959 = vmatprep.subr.bf16.mxu0 %v860
    %960 = vmatpush1.bf16.msra.mxu0 %v859
    %961 = vmatprep.subr.bf16.mxu0 %v864
    %962 = vmatpush1.bf16.msra.mxu0 %v863
    %963 = vmatprep.mubr.bf16.mxu0 %v546
    %964 = vmatmul.mubr.bf16.gmra.mrb[0].mxu0 %v545
    %v965 = vpop.f32.mrb[0].mxu0
    %v966 = vadd.f32 0.0, %v965
    %v967 = vpop.f32.mrb[0].mxu0
    %v968 = vadd.f32 0.0, %v967
    %v969 = vpop.f32.mrb[0].mxu0
    %v970 = vpop.f32.mrb[0].mxu0
    %971 = vdwg.mxu0
    %972 = vmatprep.subr.bf16.mxu0 %v806
    %973 = vmatpush1.bf16.msra.mxu0 %v805
    %974 = vmatprep.subr.bf16.mxu0 %v810
    %975 = vmatpush1.bf16.msra.mxu0 %v809
    %976 = vmatprep.subr.bf16.mxu0 %v814
    %977 = vmatpush1.bf16.msra.mxu0 %v813
    %978 = vmatprep.subr.bf16.mxu0 %v818
    %979 = vmatpush1.bf16.msra.mxu0 %v817
    %980 = vmatprep.subr.bf16.mxu0 %v822
    %981 = vmatpush1.bf16.msra.mxu0 %v821
    %982 = vmatprep.subr.bf16.mxu0 %v826
    %983 = vmatpush1.bf16.msra.mxu0 %v825
    %984 = vmatprep.subr.bf16.mxu0 %v830
    %985 = vmatpush1.bf16.msra.mxu0 %v829
    %986 = vmatprep.subr.bf16.mxu0 %v834
    %987 = vmatpush1.bf16.msra.mxu0 %v833
    %988 = vmatprep.subr.bf16.mxu0 %v838
    %989 = vmatpush1.bf16.msra.mxu0 %v837
    %990 = vmatprep.subr.bf16.mxu0 %v842
    %991 = vmatpush1.bf16.msra.mxu0 %v841
    %992 = vmatprep.subr.bf16.mxu0 %v846
    %993 = vmatpush1.bf16.msra.mxu0 %v845
    %994 = vmatprep.subr.bf16.mxu0 %v850
    %995 = vmatpush1.bf16.msra.mxu0 %v849
    %996 = vmatprep.subr.bf16.mxu0 %v854
    %997 = vmatpush1.bf16.msra.mxu0 %v853
    %998 = vmatprep.subr.bf16.mxu0 %v858
    %999 = vmatpush1.bf16.msra.mxu0 %v857
    %1000 = vmatprep.subr.bf16.mxu0 %v862
    %1001 = vmatpush1.bf16.msra.mxu0 %v861
    %1002 = vmatprep.subr.bf16.mxu0 %v866
    %1003 = vmatpush1.bf16.msra.mxu0 %v865
    %1004 = vmatprep.mubr.bf16.mxu0 %v546
    %1005 = vmatmul.mubr.bf16.gmra.mrb[0].mxu0 %v545
    %v1006 = vpop.f32.mrb[0].mxu0
    %v1007 = vadd.f32 0.0, %v1006
    %v1008 = vpop.f32.mrb[0].mxu0
    %v1009 = vadd.f32 0.0, %v1008
    %v1010 = vpop.f32.mrb[0].mxu0
    %v1011 = vpop.f32.mrb[0].mxu0
    %1012 = vdwg.mxu0
    %v1013 = vrot.slane %v966, 4
    %v1014 = vadd.f32 %v966, %v1013
    %v1015 = vrot.slane %v1014, 2
    %v1016 = vadd.f32 %v1014, %v1015
    %v1017 = vrot.slane %v1016, 1
    %v1018 = vadd.f32 %v1016, %v1017
    %v1019 = vrot.slane %v968, 4
    %v1020 = vadd.f32 %v968, %v1019
    %v1021 = vrot.slane %v1020, 2
    %v1022 = vadd.f32 %v1020, %v1021
    %v1023 = vrot.slane %v1022, 1
    %v1024 = vadd.f32 %v1022, %v1023
    %v1025 = vrot.slane %v1007, 4
    %v1026 = vadd.f32 %v1007, %v1025
    %v1027 = vrot.slane %v1026, 2
    %v1028 = vadd.f32 %v1026, %v1027
    %v1029 = vrot.slane %v1028, 1
    %v1030 = vadd.f32 %v1028, %v1029
    %v1031 = vrot.slane %v1009, 4
    %v1032 = vadd.f32 %v1009, %v1031
    %v1033 = vrot.slane %v1032, 2
    %v1034 = vadd.f32 %v1032, %v1033
    %v1035 = vrot.slane %v1034, 1
    %v1036 = vadd.f32 %v1034, %v1035
    %v1037 = vmul.f32 %v1018, %v486
    %v1038 = vmul.f32 %v1024, %v486
    %v1039 = vmul.f32 %v1030, %v486
    %v1040 = vmul.f32 %v1036, %v486
    %v1041 = vsub.f32 %v966, %v1037
    %v1042 = vsub.f32 %v968, %v1038
    %v1043 = vsub.f32 %v1007, %v1039
    %v1044 = vsub.f32 %v1009, %v1040
    %v1045 = vmul.f32 %v1041, %v1041
    %v1046 = vmul.f32 %v1042, %v1042
    %v1047 = vmul.f32 %v1043, %v1043
    %v1048 = vmul.f32 %v1044, %v1044
    %v1049 = vrot.slane %v1045, 4
    %v1050 = vadd.f32 %v1045, %v1049
    %v1051 = vrot.slane %v1050, 2
    %v1052 = vadd.f32 %v1050, %v1051
    %v1053 = vrot.slane %v1052, 1
    %v1054 = vadd.f32 %v1052, %v1053
    %v1055 = vrot.slane %v1046, 4
    %v1056 = vadd.f32 %v1046, %v1055
    %v1057 = vrot.slane %v1056, 2
    %v1058 = vadd.f32 %v1056, %v1057
    %v1059 = vrot.slane %v1058, 1
    %v1060 = vadd.f32 %v1058, %v1059
    %v1061 = vrot.slane %v1047, 4
    %v1062 = vadd.f32 %v1047, %v1061
    %v1063 = vrot.slane %v1062, 2
    %v1064 = vadd.f32 %v1062, %v1063
    %v1065 = vrot.slane %v1064, 1
    %v1066 = vadd.f32 %v1064, %v1065
    %v1067 = vrot.slane %v1048, 4
    %v1068 = vadd.f32 %v1048, %v1067
    %v1069 = vrot.slane %v1068, 2
    %v1070 = vadd.f32 %v1068, %v1069
    %v1071 = vrot.slane %v1070, 1
    %v1072 = vadd.f32 %v1070, %v1071
    %v1073 = vmul.f32 %v1054, %v486
    %v1074 = vmul.f32 %v1060, %v486
    %v1075 = vmul.f32 %v1066, %v486
    %v1076 = vmul.f32 %v1072, %v486
    %v1077 = vadd.f32 %v1073, 0.8
    %v1078 = vadd.f32 %v1074, 0.8
    %v1079 = vadd.f32 %v1075, 0.8
    %v1080 = vadd.f32 %v1076, 0.8
    %v1081 = vrsqrt.pop %v1077
    %v1082 = vrsqrt.pop %v1078
    %v1083 = vrsqrt.pop %v1079
    %v1084 = vrsqrt.pop %v1080
    %v1085 = vmul.f32 %v1041, %v1081
    %v1086 = vmul.f32 %v1042, %v1082
    %v1087 = vmul.f32 %v1043, %v1083
    %v1088 = vmul.f32 %v1044, %v1084
    %v1089 = vld [vmem:[#allocation14] sm:$0xf]
    %v1091 = vlaneseq
    %v1092 = vshrl.u32 %v1091, 7
    %v1093 = vsub.s32 0, %v1092
    %v1094 = vrot.slane %v1089, %v1093
    %v1095 = vlaneseq
    %v1096 = vshrl.u32 %v1095, 7
    %v1097 = vsub.s32 1, %v1096
    %v1098 = vrot.slane %v1089, %v1097
    %v1099 = vlaneseq
    %v1100 = vshrl.u32 %v1099, 7
    %v1101 = vsub.s32 2, %v1100
    %v1102 = vrot.slane %v1089, %v1101
    %v1103 = vlaneseq
    %v1104 = vshrl.u32 %v1103, 7
    %v1105 = vsub.s32 3, %v1104
    %v1106 = vrot.slane %v1089, %v1105
    %v1111 = vmul.f32 %v1085, %v1094
    %v1112 = vmul.f32 %v1086, %v1098
    %v1113 = vmul.f32 %v1087, %v1102
    %v1114 = vmul.f32 %v1088, %v1106
    %v1115 = vld [vmem:[#allocation16] sm:$0xf]
    %v1117 = vlaneseq
    %v1118 = vshrl.u32 %v1117, 7
    %v1119 = vsub.s32 0, %v1118
    %v1120 = vrot.slane %v1115, %v1119
    %v1121 = vlaneseq
    %v1122 = vshrl.u32 %v1121, 7
    %v1123 = vsub.s32 1, %v1122
    %v1124 = vrot.slane %v1115, %v1123
    %v1125 = vlaneseq
    %v1126 = vshrl.u32 %v1125, 7
    %v1127 = vsub.s32 2, %v1126
    %v1128 = vrot.slane %v1115, %v1127
    %v1129 = vlaneseq
    %v1130 = vshrl.u32 %v1129, 7
    %v1131 = vsub.s32 3, %v1130
    %v1132 = vrot.slane %v1115, %v1131
    %v1137 = vadd.f32 %v1111, %v1120
    %v1138 = vadd.f32 %v1112, %v1124
    %v1139 = vadd.f32 %v1113, %v1128
    %v1140 = vadd.f32 %v1114, %v1132
    %v1141 = vmul.f32 %v1137, 0.2
    %v1142 = vmul.f32 %v1138, 0.2
    %v1143 = vmul.f32 %v1139, 0.2
    %v1144 = vmul.f32 %v1140, 0.2
    %v1145 = vmax.f32 %v1137, %v1141
    %v1146 = vmax.f32 %v1138, %v1142
    %v1147 = vmax.f32 %v1139, %v1143
    %v1148 = vmax.f32 %v1140, %v1144
    %v1149 = vpack.c.bf16 %v1145, %v1145
    %v1150 = vpack.c.bf16 %v1146, %v1146
    %v1151 = vpack.c.bf16 %v1147, %v1147
    %v1152 = vpack.c.bf16 %v1148, %v1148
    %v1153 = vld [vmem:[#allocation17] sm:$0xff]
    %v1154 = vld [vmem:[#allocation17 + $0x8] sm:$0xff]
    %v1155 = vld [vmem:[#allocation17 + $0x10] sm:$0xff]
    %v1156 = vld [vmem:[#allocation17 + $0x18] sm:$0xff]
    %v1157 = vld [vmem:[#allocation17 + $0x20] sm:$0xff]
    %v1158 = vld [vmem:[#allocation17 + $0x28] sm:$0xff]
    %v1159 = vld [vmem:[#allocation17 + $0x30] sm:$0xff]
    %v1160 = vld [vmem:[#allocation17 + $0x38] sm:$0xff]
    %v1161 = vld [vmem:[#allocation17 + $0x40] sm:$0xff]
    %v1162 = vld [vmem:[#allocation17 + $0x48] sm:$0xff]
    %v1163 = vld [vmem:[#allocation17 + $0x50] sm:$0xff]
    %v1164 = vld [vmem:[#allocation17 + $0x58] sm:$0xff]
    %v1165 = vld [vmem:[#allocation17 + $0x60] sm:$0xff]
    %v1166 = vld [vmem:[#allocation17 + $0x68] sm:$0xff]
    %v1167 = vld [vmem:[#allocation17 + $0x70] sm:$0xff]
    %v1168 = vld [vmem:[#allocation17 + $0x78] sm:$0xff]
    %v1169 = vld [vmem:[#allocation17 + $0x80] sm:$0xff]
    %v1170 = vld [vmem:[#allocation17 + $0x88] sm:$0xff]
    %v1171 = vld [vmem:[#allocation17 + $0x90] sm:$0xff]
    %v1172 = vld [vmem:[#allocation17 + $0x98] sm:$0xff]
    %v1173 = vld [vmem:[#allocation17 + $0xa0] sm:$0xff]
    %v1174 = vld [vmem:[#allocation17 + $0xa8] sm:$0xff]
    %v1175 = vld [vmem:[#allocation17 + $0xb0] sm:$0xff]
    %v1176 = vld [vmem:[#allocation17 + $0xb8] sm:$0xff]
    %v1177 = vld [vmem:[#allocation17 + $0xc0] sm:$0xff]
    %v1178 = vld [vmem:[#allocation17 + $0xc8] sm:$0xff]
    %v1179 = vld [vmem:[#allocation17 + $0xd0] sm:$0xff]
    %v1180 = vld [vmem:[#allocation17 + $0xd8] sm:$0xff]
    %v1181 = vld [vmem:[#allocation17 + $0xe0] sm:$0xff]
    %v1182 = vld [vmem:[#allocation17 + $0xe8] sm:$0xff]
    %v1183 = vld [vmem:[#allocation17 + $0xf0] sm:$0xff]
    %v1184 = vld [vmem:[#allocation17 + $0xf8] sm:$0xff]
    %v1185 = vld [vmem:[#allocation17 + $0x100] sm:$0xff]
    %v1186 = vld [vmem:[#allocation17 + $0x108] sm:$0xff]
    %v1187 = vld [vmem:[#allocation17 + $0x110] sm:$0xff]
    %v1188 = vld [vmem:[#allocation17 + $0x118] sm:$0xff]
    %v1189 = vld [vmem:[#allocation17 + $0x120] sm:$0xff]
    %v1190 = vld [vmem:[#allocation17 + $0x128] sm:$0xff]
    %v1191 = vld [vmem:[#allocation17 + $0x130] sm:$0xff]
    %v1192 = vld [vmem:[#allocation17 + $0x138] sm:$0xff]
    %v1193 = vld [vmem:[#allocation17 + $0x140] sm:$0xff]
    %v1194 = vld [vmem:[#allocation17 + $0x148] sm:$0xff]
    %v1195 = vld [vmem:[#allocation17 + $0x150] sm:$0xff]
    %v1196 = vld [vmem:[#allocation17 + $0x158] sm:$0xff]
    %v1197 = vld [vmem:[#allocation17 + $0x160] sm:$0xff]
    %v1198 = vld [vmem:[#allocation17 + $0x168] sm:$0xff]
    %v1199 = vld [vmem:[#allocation17 + $0x170] sm:$0xff]
    %v1200 = vld [vmem:[#allocation17 + $0x178] sm:$0xff]
    %v1201 = vld [vmem:[#allocation17 + $0x180] sm:$0xff]
    %v1202 = vld [vmem:[#allocation17 + $0x188] sm:$0xff]
    %v1203 = vld [vmem:[#allocation17 + $0x190] sm:$0xff]
    %v1204 = vld [vmem:[#allocation17 + $0x198] sm:$0xff]
    %v1205 = vld [vmem:[#allocation17 + $0x1a0] sm:$0xff]
    %v1206 = vld [vmem:[#allocation17 + $0x1a8] sm:$0xff]
    %v1207 = vld [vmem:[#allocation17 + $0x1b0] sm:$0xff]
    %v1208 = vld [vmem:[#allocation17 + $0x1b8] sm:$0xff]
    %v1209 = vld [vmem:[#allocation17 + $0x1c0] sm:$0xff]
    %v1210 = vld [vmem:[#allocation17 + $0x1c8] sm:$0xff]
    %v1211 = vld [vmem:[#allocation17 + $0x1d0] sm:$0xff]
    %v1212 = vld [vmem:[#allocation17 + $0x1d8] sm:$0xff]
    %v1213 = vld [vmem:[#allocation17 + $0x1e0] sm:$0xff]
    %v1214 = vld [vmem:[#allocation17 + $0x1e8] sm:$0xff]
    %v1215 = vld [vmem:[#allocation17 + $0x1f0] sm:$0xff]
    %v1216 = vld [vmem:[#allocation17 + $0x1f8] sm:$0xff]
    %v1217 = vld [vmem:[#allocation17 + $0x200] sm:$0xff]
    %v1218 = vld [vmem:[#allocation17 + $0x208] sm:$0xff]
    %v1219 = vld [vmem:[#allocation17 + $0x210] sm:$0xff]
    %v1220 = vld [vmem:[#allocation17 + $0x218] sm:$0xff]
    %v1221 = vld [vmem:[#allocation17 + $0x220] sm:$0xff]
    %v1222 = vld [vmem:[#allocation17 + $0x228] sm:$0xff]
    %v1223 = vld [vmem:[#allocation17 + $0x230] sm:$0xff]
    %v1224 = vld [vmem:[#allocation17 + $0x238] sm:$0xff]
    %v1225 = vld [vmem:[#allocation17 + $0x240] sm:$0xff]
    %v1226 = vld [vmem:[#allocation17 + $0x248] sm:$0xff]
    %v1227 = vld [vmem:[#allocation17 + $0x250] sm:$0xff]
    %v1228 = vld [vmem:[#allocation17 + $0x258] sm:$0xff]
    %v1229 = vld [vmem:[#allocation17 + $0x260] sm:$0xff]
    %v1230 = vld [vmem:[#allocation17 + $0x268] sm:$0xff]
    %v1231 = vld [vmem:[#allocation17 + $0x270] sm:$0xff]
    %v1232 = vld [vmem:[#allocation17 + $0x278] sm:$0xff]
    %v1233 = vld [vmem:[#allocation17 + $0x280] sm:$0xff]
    %v1234 = vld [vmem:[#allocation17 + $0x288] sm:$0xff]
    %v1235 = vld [vmem:[#allocation17 + $0x290] sm:$0xff]
    %v1236 = vld [vmem:[#allocation17 + $0x298] sm:$0xff]
    %v1237 = vld [vmem:[#allocation17 + $0x2a0] sm:$0xff]
    %v1238 = vld [vmem:[#allocation17 + $0x2a8] sm:$0xff]
    %v1239 = vld [vmem:[#allocation17 + $0x2b0] sm:$0xff]
    %v1240 = vld [vmem:[#allocation17 + $0x2b8] sm:$0xff]
    %v1241 = vld [vmem:[#allocation17 + $0x2c0] sm:$0xff]
    %v1242 = vld [vmem:[#allocation17 + $0x2c8] sm:$0xff]
    %v1243 = vld [vmem:[#allocation17 + $0x2d0] sm:$0xff]
    %v1244 = vld [vmem:[#allocation17 + $0x2d8] sm:$0xff]
    %v1245 = vld [vmem:[#allocation17 + $0x2e0] sm:$0xff]
    %v1246 = vld [vmem:[#allocation17 + $0x2e8] sm:$0xff]
    %v1247 = vld [vmem:[#allocation17 + $0x2f0] sm:$0xff]
    %v1248 = vld [vmem:[#allocation17 + $0x2f8] sm:$0xff]
    %v1249 = vld [vmem:[#allocation17 + $0x300] sm:$0xff]
    %v1250 = vld [vmem:[#allocation17 + $0x308] sm:$0xff]
    %v1251 = vld [vmem:[#allocation17 + $0x310] sm:$0xff]
    %v1252 = vld [vmem:[#allocation17 + $0x318] sm:$0xff]
    %v1253 = vld [vmem:[#allocation17 + $0x320] sm:$0xff]
    %v1254 = vld [vmem:[#allocation17 + $0x328] sm:$0xff]
    %v1255 = vld [vmem:[#allocation17 + $0x330] sm:$0xff]
    %v1256 = vld [vmem:[#allocation17 + $0x338] sm:$0xff]
    %v1257 = vld [vmem:[#allocation17 + $0x340] sm:$0xff]
    %v1258 = vld [vmem:[#allocation17 + $0x348] sm:$0xff]
    %v1259 = vld [vmem:[#allocation17 + $0x350] sm:$0xff]
    %v1260 = vld [vmem:[#allocation17 + $0x358] sm:$0xff]
    %v1261 = vld [vmem:[#allocation17 + $0x360] sm:$0xff]
    %v1262 = vld [vmem:[#allocation17 + $0x368] sm:$0xff]
    %v1263 = vld [vmem:[#allocation17 + $0x370] sm:$0xff]
    %v1264 = vld [vmem:[#allocation17 + $0x378] sm:$0xff]
    %v1265 = vld [vmem:[#allocation17 + $0x380] sm:$0xff]
    %v1266 = vld [vmem:[#allocation17 + $0x388] sm:$0xff]
    %v1267 = vld [vmem:[#allocation17 + $0x390] sm:$0xff]
    %v1268 = vld [vmem:[#allocation17 + $0x398] sm:$0xff]
    %v1269 = vld [vmem:[#allocation17 + $0x3a0] sm:$0xff]
    %v1270 = vld [vmem:[#allocation17 + $0x3a8] sm:$0xff]
    %v1271 = vld [vmem:[#allocation17 + $0x3b0] sm:$0xff]
    %v1272 = vld [vmem:[#allocation17 + $0x3b8] sm:$0xff]
    %v1273 = vld [vmem:[#allocation17 + $0x3c0] sm:$0xff]
    %v1274 = vld [vmem:[#allocation17 + $0x3c8] sm:$0xff]
    %v1275 = vld [vmem:[#allocation17 + $0x3d0] sm:$0xff]
    %v1276 = vld [vmem:[#allocation17 + $0x3d8] sm:$0xff]
    %v1277 = vld [vmem:[#allocation17 + $0x3e0] sm:$0xff]
    %v1278 = vld [vmem:[#allocation17 + $0x3e8] sm:$0xff]
    %v1279 = vld [vmem:[#allocation17 + $0x3f0] sm:$0xff]
    %v1280 = vld [vmem:[#allocation17 + $0x3f8] sm:$0xff]
    %v1281 = vld [vmem:[#allocation17 + $0x400] sm:$0xff]
    %v1282 = vld [vmem:[#allocation17 + $0x408] sm:$0xff]
    %v1283 = vld [vmem:[#allocation17 + $0x410] sm:$0xff]
    %v1284 = vld [vmem:[#allocation17 + $0x418] sm:$0xff]
    %v1285 = vld [vmem:[#allocation17 + $0x420] sm:$0xff]
    %v1286 = vld [vmem:[#allocation17 + $0x428] sm:$0xff]
    %v1287 = vld [vmem:[#allocation17 + $0x430] sm:$0xff]
    %v1288 = vld [vmem:[#allocation17 + $0x438] sm:$0xff]
    %v1289 = vld [vmem:[#allocation17 + $0x440] sm:$0xff]
    %v1290 = vld [vmem:[#allocation17 + $0x448] sm:$0xff]
    %v1291 = vld [vmem:[#allocation17 + $0x450] sm:$0xff]
    %v1292 = vld [vmem:[#allocation17 + $0x458] sm:$0xff]
    %v1293 = vld [vmem:[#allocation17 + $0x460] sm:$0xff]
    %v1294 = vld [vmem:[#allocation17 + $0x468] sm:$0xff]
    %v1295 = vld [vmem:[#allocation17 + $0x470] sm:$0xff]
    %v1296 = vld [vmem:[#allocation17 + $0x478] sm:$0xff]
    %v1297 = vld [vmem:[#allocation17 + $0x480] sm:$0xff]
    %v1298 = vld [vmem:[#allocation17 + $0x488] sm:$0xff]
    %v1299 = vld [vmem:[#allocation17 + $0x490] sm:$0xff]
    %v1300 = vld [vmem:[#allocation17 + $0x498] sm:$0xff]
    %v1301 = vld [vmem:[#allocation17 + $0x4a0] sm:$0xff]
    %v1302 = vld [vmem:[#allocation17 + $0x4a8] sm:$0xff]
    %v1303 = vld [vmem:[#allocation17 + $0x4b0] sm:$0xff]
    %v1304 = vld [vmem:[#allocation17 + $0x4b8] sm:$0xff]
    %v1305 = vld [vmem:[#allocation17 + $0x4c0] sm:$0xff]
    %v1306 = vld [vmem:[#allocation17 + $0x4c8] sm:$0xff]
    %v1307 = vld [vmem:[#allocation17 + $0x4d0] sm:$0xff]
    %v1308 = vld [vmem:[#allocation17 + $0x4d8] sm:$0xff]
    %v1309 = vld [vmem:[#allocation17 + $0x4e0] sm:$0xff]
    %v1310 = vld [vmem:[#allocation17 + $0x4e8] sm:$0xff]
    %v1311 = vld [vmem:[#allocation17 + $0x4f0] sm:$0xff]
    %v1312 = vld [vmem:[#allocation17 + $0x4f8] sm:$0xff]
    %v1313 = vld [vmem:[#allocation17 + $0x500] sm:$0xff]
    %v1314 = vld [vmem:[#allocation17 + $0x508] sm:$0xff]
    %v1315 = vld [vmem:[#allocation17 + $0x510] sm:$0xff]
    %v1316 = vld [vmem:[#allocation17 + $0x518] sm:$0xff]
    %v1317 = vld [vmem:[#allocation17 + $0x520] sm:$0xff]
    %v1318 = vld [vmem:[#allocation17 + $0x528] sm:$0xff]
    %v1319 = vld [vmem:[#allocation17 + $0x530] sm:$0xff]
    %v1320 = vld [vmem:[#allocation17 + $0x538] sm:$0xff]
    %v1321 = vld [vmem:[#allocation17 + $0x540] sm:$0xff]
    %v1322 = vld [vmem:[#allocation17 + $0x548] sm:$0xff]
    %v1323 = vld [vmem:[#allocation17 + $0x550] sm:$0xff]
    %v1324 = vld [vmem:[#allocation17 + $0x558] sm:$0xff]
    %v1325 = vld [vmem:[#allocation17 + $0x560] sm:$0xff]
    %v1326 = vld [vmem:[#allocation17 + $0x568] sm:$0xff]
    %v1327 = vld [vmem:[#allocation17 + $0x570] sm:$0xff]
    %v1328 = vld [vmem:[#allocation17 + $0x578] sm:$0xff]
    %v1329 = vld [vmem:[#allocation17 + $0x580] sm:$0xff]
    %v1330 = vld [vmem:[#allocation17 + $0x588] sm:$0xff]
    %v1331 = vld [vmem:[#allocation17 + $0x590] sm:$0xff]
    %v1332 = vld [vmem:[#allocation17 + $0x598] sm:$0xff]
    %v1333 = vld [vmem:[#allocation17 + $0x5a0] sm:$0xff]
    %v1334 = vld [vmem:[#allocation17 + $0x5a8] sm:$0xff]
    %v1335 = vld [vmem:[#allocation17 + $0x5b0] sm:$0xff]
    %v1336 = vld [vmem:[#allocation17 + $0x5b8] sm:$0xff]
    %v1337 = vld [vmem:[#allocation17 + $0x5c0] sm:$0xff]
    %v1338 = vld [vmem:[#allocation17 + $0x5c8] sm:$0xff]
    %v1339 = vld [vmem:[#allocation17 + $0x5d0] sm:$0xff]
    %v1340 = vld [vmem:[#allocation17 + $0x5d8] sm:$0xff]
    %v1341 = vld [vmem:[#allocation17 + $0x5e0] sm:$0xff]
    %v1342 = vld [vmem:[#allocation17 + $0x5e8] sm:$0xff]
    %v1343 = vld [vmem:[#allocation17 + $0x5f0] sm:$0xff]
    %v1344 = vld [vmem:[#allocation17 + $0x5f8] sm:$0xff]
    %v1345 = vld [vmem:[#allocation17 + $0x600] sm:$0xff]
    %v1346 = vld [vmem:[#allocation17 + $0x608] sm:$0xff]
    %v1347 = vld [vmem:[#allocation17 + $0x610] sm:$0xff]
    %v1348 = vld [vmem:[#allocation17 + $0x618] sm:$0xff]
    %v1349 = vld [vmem:[#allocation17 + $0x620] sm:$0xff]
    %v1350 = vld [vmem:[#allocation17 + $0x628] sm:$0xff]
    %v1351 = vld [vmem:[#allocation17 + $0x630] sm:$0xff]
    %v1352 = vld [vmem:[#allocation17 + $0x638] sm:$0xff]
    %v1353 = vld [vmem:[#allocation17 + $0x640] sm:$0xff]
    %v1354 = vld [vmem:[#allocation17 + $0x648] sm:$0xff]
    %v1355 = vld [vmem:[#allocation17 + $0x650] sm:$0xff]
    %v1356 = vld [vmem:[#allocation17 + $0x658] sm:$0xff]
    %v1357 = vld [vmem:[#allocation17 + $0x660] sm:$0xff]
    %v1358 = vld [vmem:[#allocation17 + $0x668] sm:$0xff]
    %v1359 = vld [vmem:[#allocation17 + $0x670] sm:$0xff]
    %v1360 = vld [vmem:[#allocation17 + $0x678] sm:$0xff]
    %v1361 = vld [vmem:[#allocation17 + $0x680] sm:$0xff]
    %v1362 = vld [vmem:[#allocation17 + $0x688] sm:$0xff]
    %v1363 = vld [vmem:[#allocation17 + $0x690] sm:$0xff]
    %v1364 = vld [vmem:[#allocation17 + $0x698] sm:$0xff]
    %v1365 = vld [vmem:[#allocation17 + $0x6a0] sm:$0xff]
    %v1366 = vld [vmem:[#allocation17 + $0x6a8] sm:$0xff]
    %v1367 = vld [vmem:[#allocation17 + $0x6b0] sm:$0xff]
    %v1368 = vld [vmem:[#allocation17 + $0x6b8] sm:$0xff]
    %v1369 = vld [vmem:[#allocation17 + $0x6c0] sm:$0xff]
    %v1370 = vld [vmem:[#allocation17 + $0x6c8] sm:$0xff]
    %v1371 = vld [vmem:[#allocation17 + $0x6d0] sm:$0xff]
    %v1372 = vld [vmem:[#allocation17 + $0x6d8] sm:$0xff]
    %v1373 = vld [vmem:[#allocation17 + $0x6e0] sm:$0xff]
    %v1374 = vld [vmem:[#allocation17 + $0x6e8] sm:$0xff]
    %v1375 = vld [vmem:[#allocation17 + $0x6f0] sm:$0xff]
    %v1376 = vld [vmem:[#allocation17 + $0x6f8] sm:$0xff]
    %v1377 = vld [vmem:[#allocation17 + $0x700] sm:$0xff]
    %v1378 = vld [vmem:[#allocation17 + $0x708] sm:$0xff]
    %v1379 = vld [vmem:[#allocation17 + $0x710] sm:$0xff]
    %v1380 = vld [vmem:[#allocation17 + $0x718] sm:$0xff]
    %v1381 = vld [vmem:[#allocation17 + $0x720] sm:$0xff]
    %v1382 = vld [vmem:[#allocation17 + $0x728] sm:$0xff]
    %v1383 = vld [vmem:[#allocation17 + $0x730] sm:$0xff]
    %v1384 = vld [vmem:[#allocation17 + $0x738] sm:$0xff]
    %v1385 = vld [vmem:[#allocation17 + $0x740] sm:$0xff]
    %v1386 = vld [vmem:[#allocation17 + $0x748] sm:$0xff]
    %v1387 = vld [vmem:[#allocation17 + $0x750] sm:$0xff]
    %v1388 = vld [vmem:[#allocation17 + $0x758] sm:$0xff]
    %v1389 = vld [vmem:[#allocation17 + $0x760] sm:$0xff]
    %v1390 = vld [vmem:[#allocation17 + $0x768] sm:$0xff]
    %v1391 = vld [vmem:[#allocation17 + $0x770] sm:$0xff]
    %v1392 = vld [vmem:[#allocation17 + $0x778] sm:$0xff]
    %v1393 = vld [vmem:[#allocation17 + $0x780] sm:$0xff]
    %v1394 = vld [vmem:[#allocation17 + $0x788] sm:$0xff]
    %v1395 = vld [vmem:[#allocation17 + $0x790] sm:$0xff]
    %v1396 = vld [vmem:[#allocation17 + $0x798] sm:$0xff]
    %v1397 = vld [vmem:[#allocation17 + $0x7a0] sm:$0xff]
    %v1398 = vld [vmem:[#allocation17 + $0x7a8] sm:$0xff]
    %v1399 = vld [vmem:[#allocation17 + $0x7b0] sm:$0xff]
    %v1400 = vld [vmem:[#allocation17 + $0x7b8] sm:$0xff]
    %v1401 = vld [vmem:[#allocation17 + $0x7c0] sm:$0xff]
    %v1402 = vld [vmem:[#allocation17 + $0x7c8] sm:$0xff]
    %v1403 = vld [vmem:[#allocation17 + $0x7d0] sm:$0xff]
    %v1404 = vld [vmem:[#allocation17 + $0x7d8] sm:$0xff]
    %v1405 = vld [vmem:[#allocation17 + $0x7e0] sm:$0xff]
    %v1406 = vld [vmem:[#allocation17 + $0x7e8] sm:$0xff]
    %v1407 = vld [vmem:[#allocation17 + $0x7f0] sm:$0xff]
    %v1408 = vld [vmem:[#allocation17 + $0x7f8] sm:$0xff]
    %v1665 = vunpack.c.l.b16 %v1153
    %v1666 = vunpack.c.h.b16 %v1153
    %v1667 = vunpack.c.l.b16 %v1154
    %v1668 = vunpack.c.h.b16 %v1154
    %v1669 = vunpack.c.l.b16 %v1155
    %v1670 = vunpack.c.h.b16 %v1155
    %v1671 = vunpack.c.l.b16 %v1156
    %v1672 = vunpack.c.h.b16 %v1156
    %v1673 = vunpack.c.l.b16 %v1157
    %v1674 = vunpack.c.h.b16 %v1157
    %v1675 = vunpack.c.l.b16 %v1158
    %v1676 = vunpack.c.h.b16 %v1158
    %v1677 = vunpack.c.l.b16 %v1159
    %v1678 = vunpack.c.h.b16 %v1159
    %v1679 = vunpack.c.l.b16 %v1160
    %v1680 = vunpack.c.h.b16 %v1160
    %v1681 = vunpack.c.l.b16 %v1161
    %v1682 = vunpack.c.h.b16 %v1161
    %v1683 = vunpack.c.l.b16 %v1162
    %v1684 = vunpack.c.h.b16 %v1162
    %v1685 = vunpack.c.l.b16 %v1163
    %v1686 = vunpack.c.h.b16 %v1163
    %v1687 = vunpack.c.l.b16 %v1164
    %v1688 = vunpack.c.h.b16 %v1164
    %v1689 = vunpack.c.l.b16 %v1165
    %v1690 = vunpack.c.h.b16 %v1165
    %v1691 = vunpack.c.l.b16 %v1166
    %v1692 = vunpack.c.h.b16 %v1166
    %v1693 = vunpack.c.l.b16 %v1167
    %v1694 = vunpack.c.h.b16 %v1167
    %v1695 = vunpack.c.l.b16 %v1168
    %v1696 = vunpack.c.h.b16 %v1168
    %v1697 = vunpack.c.l.b16 %v1169
    %v1698 = vunpack.c.h.b16 %v1169
    %v1699 = vunpack.c.l.b16 %v1170
    %v1700 = vunpack.c.h.b16 %v1170
    %v1701 = vunpack.c.l.b16 %v1171
    %v1702 = vunpack.c.h.b16 %v1171
    %v1703 = vunpack.c.l.b16 %v1172
    %v1704 = vunpack.c.h.b16 %v1172
    %v1705 = vunpack.c.l.b16 %v1173
    %v1706 = vunpack.c.h.b16 %v1173
    %v1707 = vunpack.c.l.b16 %v1174
    %v1708 = vunpack.c.h.b16 %v1174
    %v1709 = vunpack.c.l.b16 %v1175
    %v1710 = vunpack.c.h.b16 %v1175
    %v1711 = vunpack.c.l.b16 %v1176
    %v1712 = vunpack.c.h.b16 %v1176
    %v1713 = vunpack.c.l.b16 %v1177
    %v1714 = vunpack.c.h.b16 %v1177
    %v1715 = vunpack.c.l.b16 %v1178
    %v1716 = vunpack.c.h.b16 %v1178
    %v1717 = vunpack.c.l.b16 %v1179
    %v1718 = vunpack.c.h.b16 %v1179
    %v1719 = vunpack.c.l.b16 %v1180
    %v1720 = vunpack.c.h.b16 %v1180
    %v1721 = vunpack.c.l.b16 %v1181
    %v1722 = vunpack.c.h.b16 %v1181
    %v1723 = vunpack.c.l.b16 %v1182
    %v1724 = vunpack.c.h.b16 %v1182
    %v1725 = vunpack.c.l.b16 %v1183
    %v1726 = vunpack.c.h.b16 %v1183
    %v1727 = vunpack.c.l.b16 %v1184
    %v1728 = vunpack.c.h.b16 %v1184
    %v1729 = vunpack.c.l.b16 %v1185
    %v1730 = vunpack.c.h.b16 %v1185
    %v1731 = vunpack.c.l.b16 %v1186
    %v1732 = vunpack.c.h.b16 %v1186
    %v1733 = vunpack.c.l.b16 %v1187
    %v1734 = vunpack.c.h.b16 %v1187
    %v1735 = vunpack.c.l.b16 %v1188
    %v1736 = vunpack.c.h.b16 %v1188
    %v1737 = vunpack.c.l.b16 %v1189
    %v1738 = vunpack.c.h.b16 %v1189
    %v1739 = vunpack.c.l.b16 %v1190
    %v1740 = vunpack.c.h.b16 %v1190
    %v1741 = vunpack.c.l.b16 %v1191
    %v1742 = vunpack.c.h.b16 %v1191
    %v1743 = vunpack.c.l.b16 %v1192
    %v1744 = vunpack.c.h.b16 %v1192
    %v1745 = vunpack.c.l.b16 %v1193
    %v1746 = vunpack.c.h.b16 %v1193
    %v1747 = vunpack.c.l.b16 %v1194
    %v1748 = vunpack.c.h.b16 %v1194
    %v1749 = vunpack.c.l.b16 %v1195
    %v1750 = vunpack.c.h.b16 %v1195
    %v1751 = vunpack.c.l.b16 %v1196
    %v1752 = vunpack.c.h.b16 %v1196
    %v1753 = vunpack.c.l.b16 %v1197
    %v1754 = vunpack.c.h.b16 %v1197
    %v1755 = vunpack.c.l.b16 %v1198
    %v1756 = vunpack.c.h.b16 %v1198
    %v1757 = vunpack.c.l.b16 %v1199
    %v1758 = vunpack.c.h.b16 %v1199
    %v1759 = vunpack.c.l.b16 %v1200
    %v1760 = vunpack.c.h.b16 %v1200
    %v1761 = vunpack.c.l.b16 %v1201
    %v1762 = vunpack.c.h.b16 %v1201
    %v1763 = vunpack.c.l.b16 %v1202
    %v1764 = vunpack.c.h.b16 %v1202
    %v1765 = vunpack.c.l.b16 %v1203
    %v1766 = vunpack.c.h.b16 %v1203
    %v1767 = vunpack.c.l.b16 %v1204
    %v1768 = vunpack.c.h.b16 %v1204
    %v1769 = vunpack.c.l.b16 %v1205
    %v1770 = vunpack.c.h.b16 %v1205
    %v1771 = vunpack.c.l.b16 %v1206
    %v1772 = vunpack.c.h.b16 %v1206
    %v1773 = vunpack.c.l.b16 %v1207
    %v1774 = vunpack.c.h.b16 %v1207
    %v1775 = vunpack.c.l.b16 %v1208
    %v1776 = vunpack.c.h.b16 %v1208
    %v1777 = vunpack.c.l.b16 %v1209
    %v1778 = vunpack.c.h.b16 %v1209
    %v1779 = vunpack.c.l.b16 %v1210
    %v1780 = vunpack.c.h.b16 %v1210
    %v1781 = vunpack.c.l.b16 %v1211
    %v1782 = vunpack.c.h.b16 %v1211
    %v1783 = vunpack.c.l.b16 %v1212
    %v1784 = vunpack.c.h.b16 %v1212
    %v1785 = vunpack.c.l.b16 %v1213
    %v1786 = vunpack.c.h.b16 %v1213
    %v1787 = vunpack.c.l.b16 %v1214
    %v1788 = vunpack.c.h.b16 %v1214
    %v1789 = vunpack.c.l.b16 %v1215
    %v1790 = vunpack.c.h.b16 %v1215
    %v1791 = vunpack.c.l.b16 %v1216
    %v1792 = vunpack.c.h.b16 %v1216
    %v1793 = vunpack.c.l.b16 %v1217
    %v1794 = vunpack.c.h.b16 %v1217
    %v1795 = vunpack.c.l.b16 %v1218
    %v1796 = vunpack.c.h.b16 %v1218
    %v1797 = vunpack.c.l.b16 %v1219
    %v1798 = vunpack.c.h.b16 %v1219
    %v1799 = vunpack.c.l.b16 %v1220
    %v1800 = vunpack.c.h.b16 %v1220
    %v1801 = vunpack.c.l.b16 %v1221
    %v1802 = vunpack.c.h.b16 %v1221
    %v1803 = vunpack.c.l.b16 %v1222
    %v1804 = vunpack.c.h.b16 %v1222
    %v1805 = vunpack.c.l.b16 %v1223
    %v1806 = vunpack.c.h.b16 %v1223
    %v1807 = vunpack.c.l.b16 %v1224
    %v1808 = vunpack.c.h.b16 %v1224
    %v1809 = vunpack.c.l.b16 %v1225
    %v1810 = vunpack.c.h.b16 %v1225
    %v1811 = vunpack.c.l.b16 %v1226
    %v1812 = vunpack.c.h.b16 %v1226
    %v1813 = vunpack.c.l.b16 %v1227
    %v1814 = vunpack.c.h.b16 %v1227
    %v1815 = vunpack.c.l.b16 %v1228
    %v1816 = vunpack.c.h.b16 %v1228
    %v1817 = vunpack.c.l.b16 %v1229
    %v1818 = vunpack.c.h.b16 %v1229
    %v1819 = vunpack.c.l.b16 %v1230
    %v1820 = vunpack.c.h.b16 %v1230
    %v1821 = vunpack.c.l.b16 %v1231
    %v1822 = vunpack.c.h.b16 %v1231
    %v1823 = vunpack.c.l.b16 %v1232
    %v1824 = vunpack.c.h.b16 %v1232
    %v1825 = vunpack.c.l.b16 %v1233
    %v1826 = vunpack.c.h.b16 %v1233
    %v1827 = vunpack.c.l.b16 %v1234
    %v1828 = vunpack.c.h.b16 %v1234
    %v1829 = vunpack.c.l.b16 %v1235
    %v1830 = vunpack.c.h.b16 %v1235
    %v1831 = vunpack.c.l.b16 %v1236
    %v1832 = vunpack.c.h.b16 %v1236
    %v1833 = vunpack.c.l.b16 %v1237
    %v1834 = vunpack.c.h.b16 %v1237
    %v1835 = vunpack.c.l.b16 %v1238
    %v1836 = vunpack.c.h.b16 %v1238
    %v1837 = vunpack.c.l.b16 %v1239
    %v1838 = vunpack.c.h.b16 %v1239
    %v1839 = vunpack.c.l.b16 %v1240
    %v1840 = vunpack.c.h.b16 %v1240
    %v1841 = vunpack.c.l.b16 %v1241
    %v1842 = vunpack.c.h.b16 %v1241
    %v1843 = vunpack.c.l.b16 %v1242
    %v1844 = vunpack.c.h.b16 %v1242
    %v1845 = vunpack.c.l.b16 %v1243
    %v1846 = vunpack.c.h.b16 %v1243
    %v1847 = vunpack.c.l.b16 %v1244
    %v1848 = vunpack.c.h.b16 %v1244
    %v1849 = vunpack.c.l.b16 %v1245
    %v1850 = vunpack.c.h.b16 %v1245
    %v1851 = vunpack.c.l.b16 %v1246
    %v1852 = vunpack.c.h.b16 %v1246
    %v1853 = vunpack.c.l.b16 %v1247
    %v1854 = vunpack.c.h.b16 %v1247
    %v1855 = vunpack.c.l.b16 %v1248
    %v1856 = vunpack.c.h.b16 %v1248
    %v1857 = vunpack.c.l.b16 %v1249
    %v1858 = vunpack.c.h.b16 %v1249
    %v1859 = vunpack.c.l.b16 %v1250
    %v1860 = vunpack.c.h.b16 %v1250
    %v1861 = vunpack.c.l.b16 %v1251
    %v1862 = vunpack.c.h.b16 %v1251
    %v1863 = vunpack.c.l.b16 %v1252
    %v1864 = vunpack.c.h.b16 %v1252
    %v1865 = vunpack.c.l.b16 %v1253
    %v1866 = vunpack.c.h.b16 %v1253
    %v1867 = vunpack.c.l.b16 %v1254
    %v1868 = vunpack.c.h.b16 %v1254
    %v1869 = vunpack.c.l.b16 %v1255
    %v1870 = vunpack.c.h.b16 %v1255
    %v1871 = vunpack.c.l.b16 %v1256
    %v1872 = vunpack.c.h.b16 %v1256
    %v1873 = vunpack.c.l.b16 %v1257
    %v1874 = vunpack.c.h.b16 %v1257
    %v1875 = vunpack.c.l.b16 %v1258
    %v1876 = vunpack.c.h.b16 %v1258
    %v1877 = vunpack.c.l.b16 %v1259
    %v1878 = vunpack.c.h.b16 %v1259
    %v1879 = vunpack.c.l.b16 %v1260
    %v1880 = vunpack.c.h.b16 %v1260
    %v1881 = vunpack.c.l.b16 %v1261
    %v1882 = vunpack.c.h.b16 %v1261
    %v1883 = vunpack.c.l.b16 %v1262
    %v1884 = vunpack.c.h.b16 %v1262
    %v1885 = vunpack.c.l.b16 %v1263
    %v1886 = vunpack.c.h.b16 %v1263
    %v1887 = vunpack.c.l.b16 %v1264
    %v1888 = vunpack.c.h.b16 %v1264
    %v1889 = vunpack.c.l.b16 %v1265
    %v1890 = vunpack.c.h.b16 %v1265
    %v1891 = vunpack.c.l.b16 %v1266
    %v1892 = vunpack.c.h.b16 %v1266
    %v1893 = vunpack.c.l.b16 %v1267
    %v1894 = vunpack.c.h.b16 %v1267
    %v1895 = vunpack.c.l.b16 %v1268
    %v1896 = vunpack.c.h.b16 %v1268
    %v1897 = vunpack.c.l.b16 %v1269
    %v1898 = vunpack.c.h.b16 %v1269
    %v1899 = vunpack.c.l.b16 %v1270
    %v1900 = vunpack.c.h.b16 %v1270
    %v1901 = vunpack.c.l.b16 %v1271
    %v1902 = vunpack.c.h.b16 %v1271
    %v1903 = vunpack.c.l.b16 %v1272
    %v1904 = vunpack.c.h.b16 %v1272
    %v1905 = vunpack.c.l.b16 %v1273
    %v1906 = vunpack.c.h.b16 %v1273
    %v1907 = vunpack.c.l.b16 %v1274
    %v1908 = vunpack.c.h.b16 %v1274
    %v1909 = vunpack.c.l.b16 %v1275
    %v1910 = vunpack.c.h.b16 %v1275
    %v1911 = vunpack.c.l.b16 %v1276
    %v1912 = vunpack.c.h.b16 %v1276
    %v1913 = vunpack.c.l.b16 %v1277
    %v1914 = vunpack.c.h.b16 %v1277
    %v1915 = vunpack.c.l.b16 %v1278
    %v1916 = vunpack.c.h.b16 %v1278
    %v1917 = vunpack.c.l.b16 %v1279
    %v1918 = vunpack.c.h.b16 %v1279
    %v1919 = vunpack.c.l.b16 %v1280
    %v1920 = vunpack.c.h.b16 %v1280
    %v1921 = vunpack.c.l.b16 %v1281
    %v1922 = vunpack.c.h.b16 %v1281
    %v1923 = vunpack.c.l.b16 %v1282
    %v1924 = vunpack.c.h.b16 %v1282
    %v1925 = vunpack.c.l.b16 %v1283
    %v1926 = vunpack.c.h.b16 %v1283
    %v1927 = vunpack.c.l.b16 %v1284
    %v1928 = vunpack.c.h.b16 %v1284
    %v1929 = vunpack.c.l.b16 %v1285
    %v1930 = vunpack.c.h.b16 %v1285
    %v1931 = vunpack.c.l.b16 %v1286
    %v1932 = vunpack.c.h.b16 %v1286
    %v1933 = vunpack.c.l.b16 %v1287
    %v1934 = vunpack.c.h.b16 %v1287
    %v1935 = vunpack.c.l.b16 %v1288
    %v1936 = vunpack.c.h.b16 %v1288
    %v1937 = vunpack.c.l.b16 %v1289
    %v1938 = vunpack.c.h.b16 %v1289
    %v1939 = vunpack.c.l.b16 %v1290
    %v1940 = vunpack.c.h.b16 %v1290
    %v1941 = vunpack.c.l.b16 %v1291
    %v1942 = vunpack.c.h.b16 %v1291
    %v1943 = vunpack.c.l.b16 %v1292
    %v1944 = vunpack.c.h.b16 %v1292
    %v1945 = vunpack.c.l.b16 %v1293
    %v1946 = vunpack.c.h.b16 %v1293
    %v1947 = vunpack.c.l.b16 %v1294
    %v1948 = vunpack.c.h.b16 %v1294
    %v1949 = vunpack.c.l.b16 %v1295
    %v1950 = vunpack.c.h.b16 %v1295
    %v1951 = vunpack.c.l.b16 %v1296
    %v1952 = vunpack.c.h.b16 %v1296
    %v1953 = vunpack.c.l.b16 %v1297
    %v1954 = vunpack.c.h.b16 %v1297
    %v1955 = vunpack.c.l.b16 %v1298
    %v1956 = vunpack.c.h.b16 %v1298
    %v1957 = vunpack.c.l.b16 %v1299
    %v1958 = vunpack.c.h.b16 %v1299
    %v1959 = vunpack.c.l.b16 %v1300
    %v1960 = vunpack.c.h.b16 %v1300
    %v1961 = vunpack.c.l.b16 %v1301
    %v1962 = vunpack.c.h.b16 %v1301
    %v1963 = vunpack.c.l.b16 %v1302
    %v1964 = vunpack.c.h.b16 %v1302
    %v1965 = vunpack.c.l.b16 %v1303
    %v1966 = vunpack.c.h.b16 %v1303
    %v1967 = vunpack.c.l.b16 %v1304
    %v1968 = vunpack.c.h.b16 %v1304
    %v1969 = vunpack.c.l.b16 %v1305
    %v1970 = vunpack.c.h.b16 %v1305
    %v1971 = vunpack.c.l.b16 %v1306
    %v1972 = vunpack.c.h.b16 %v1306
    %v1973 = vunpack.c.l.b16 %v1307
    %v1974 = vunpack.c.h.b16 %v1307
    %v1975 = vunpack.c.l.b16 %v1308
    %v1976 = vunpack.c.h.b16 %v1308
    %v1977 = vunpack.c.l.b16 %v1309
    %v1978 = vunpack.c.h.b16 %v1309
    %v1979 = vunpack.c.l.b16 %v1310
    %v1980 = vunpack.c.h.b16 %v1310
    %v1981 = vunpack.c.l.b16 %v1311
    %v1982 = vunpack.c.h.b16 %v1311
    %v1983 = vunpack.c.l.b16 %v1312
    %v1984 = vunpack.c.h.b16 %v1312
    %v1985 = vunpack.c.l.b16 %v1313
    %v1986 = vunpack.c.h.b16 %v1313
    %v1987 = vunpack.c.l.b16 %v1314
    %v1988 = vunpack.c.h.b16 %v1314
    %v1989 = vunpack.c.l.b16 %v1315
    %v1990 = vunpack.c.h.b16 %v1315
    %v1991 = vunpack.c.l.b16 %v1316
    %v1992 = vunpack.c.h.b16 %v1316
    %v1993 = vunpack.c.l.b16 %v1317
    %v1994 = vunpack.c.h.b16 %v1317
    %v1995 = vunpack.c.l.b16 %v1318
    %v1996 = vunpack.c.h.b16 %v1318
    %v1997 = vunpack.c.l.b16 %v1319
    %v1998 = vunpack.c.h.b16 %v1319
    %v1999 = vunpack.c.l.b16 %v1320
    %v2000 = vunpack.c.h.b16 %v1320
    %v2001 = vunpack.c.l.b16 %v1321
    %v2002 = vunpack.c.h.b16 %v1321
    %v2003 = vunpack.c.l.b16 %v1322
    %v2004 = vunpack.c.h.b16 %v1322
    %v2005 = vunpack.c.l.b16 %v1323
    %v2006 = vunpack.c.h.b16 %v1323
    %v2007 = vunpack.c.l.b16 %v1324
    %v2008 = vunpack.c.h.b16 %v1324
    %v2009 = vunpack.c.l.b16 %v1325
    %v2010 = vunpack.c.h.b16 %v1325
    %v2011 = vunpack.c.l.b16 %v1326
    %v2012 = vunpack.c.h.b16 %v1326
    %v2013 = vunpack.c.l.b16 %v1327
    %v2014 = vunpack.c.h.b16 %v1327
    %v2015 = vunpack.c.l.b16 %v1328
    %v2016 = vunpack.c.h.b16 %v1328
    %v2017 = vunpack.c.l.b16 %v1329
    %v2018 = vunpack.c.h.b16 %v1329
    %v2019 = vunpack.c.l.b16 %v1330
    %v2020 = vunpack.c.h.b16 %v1330
    %v2021 = vunpack.c.l.b16 %v1331
    %v2022 = vunpack.c.h.b16 %v1331
    %v2023 = vunpack.c.l.b16 %v1332
    %v2024 = vunpack.c.h.b16 %v1332
    %v2025 = vunpack.c.l.b16 %v1333
    %v2026 = vunpack.c.h.b16 %v1333
    %v2027 = vunpack.c.l.b16 %v1334
    %v2028 = vunpack.c.h.b16 %v1334
    %v2029 = vunpack.c.l.b16 %v1335
    %v2030 = vunpack.c.h.b16 %v1335
    %v2031 = vunpack.c.l.b16 %v1336
    %v2032 = vunpack.c.h.b16 %v1336
    %v2033 = vunpack.c.l.b16 %v1337
    %v2034 = vunpack.c.h.b16 %v1337
    %v2035 = vunpack.c.l.b16 %v1338
    %v2036 = vunpack.c.h.b16 %v1338
    %v2037 = vunpack.c.l.b16 %v1339
    %v2038 = vunpack.c.h.b16 %v1339
    %v2039 = vunpack.c.l.b16 %v1340
    %v2040 = vunpack.c.h.b16 %v1340
    %v2041 = vunpack.c.l.b16 %v1341
    %v2042 = vunpack.c.h.b16 %v1341
    %v2043 = vunpack.c.l.b16 %v1342
    %v2044 = vunpack.c.h.b16 %v1342
    %v2045 = vunpack.c.l.b16 %v1343
    %v2046 = vunpack.c.h.b16 %v1343
    %v2047 = vunpack.c.l.b16 %v1344
    %v2048 = vunpack.c.h.b16 %v1344
    %v2049 = vunpack.c.l.b16 %v1345
    %v2050 = vunpack.c.h.b16 %v1345
    %v2051 = vunpack.c.l.b16 %v1346
    %v2052 = vunpack.c.h.b16 %v1346
    %v2053 = vunpack.c.l.b16 %v1347
    %v2054 = vunpack.c.h.b16 %v1347
    %v2055 = vunpack.c.l.b16 %v1348
    %v2056 = vunpack.c.h.b16 %v1348
    %v2057 = vunpack.c.l.b16 %v1349
    %v2058 = vunpack.c.h.b16 %v1349
    %v2059 = vunpack.c.l.b16 %v1350
    %v2060 = vunpack.c.h.b16 %v1350
    %v2061 = vunpack.c.l.b16 %v1351
    %v2062 = vunpack.c.h.b16 %v1351
    %v2063 = vunpack.c.l.b16 %v1352
    %v2064 = vunpack.c.h.b16 %v1352
    %v2065 = vunpack.c.l.b16 %v1353
    %v2066 = vunpack.c.h.b16 %v1353
    %v2067 = vunpack.c.l.b16 %v1354
    %v2068 = vunpack.c.h.b16 %v1354
    %v2069 = vunpack.c.l.b16 %v1355
    %v2070 = vunpack.c.h.b16 %v1355
    %v2071 = vunpack.c.l.b16 %v1356
    %v2072 = vunpack.c.h.b16 %v1356
    %v2073 = vunpack.c.l.b16 %v1357
    %v2074 = vunpack.c.h.b16 %v1357
    %v2075 = vunpack.c.l.b16 %v1358
    %v2076 = vunpack.c.h.b16 %v1358
    %v2077 = vunpack.c.l.b16 %v1359
    %v2078 = vunpack.c.h.b16 %v1359
    %v2079 = vunpack.c.l.b16 %v1360
    %v2080 = vunpack.c.h.b16 %v1360
    %v2081 = vunpack.c.l.b16 %v1361
    %v2082 = vunpack.c.h.b16 %v1361
    %v2083 = vunpack.c.l.b16 %v1362
    %v2084 = vunpack.c.h.b16 %v1362
    %v2085 = vunpack.c.l.b16 %v1363
    %v2086 = vunpack.c.h.b16 %v1363
    %v2087 = vunpack.c.l.b16 %v1364
    %v2088 = vunpack.c.h.b16 %v1364
    %v2089 = vunpack.c.l.b16 %v1365
    %v2090 = vunpack.c.h.b16 %v1365
    %v2091 = vunpack.c.l.b16 %v1366
    %v2092 = vunpack.c.h.b16 %v1366
    %v2093 = vunpack.c.l.b16 %v1367
    %v2094 = vunpack.c.h.b16 %v1367
    %v2095 = vunpack.c.l.b16 %v1368
    %v2096 = vunpack.c.h.b16 %v1368
    %v2097 = vunpack.c.l.b16 %v1369
    %v2098 = vunpack.c.h.b16 %v1369
    %v2099 = vunpack.c.l.b16 %v1370
    %v2100 = vunpack.c.h.b16 %v1370
    %v2101 = vunpack.c.l.b16 %v1371
    %v2102 = vunpack.c.h.b16 %v1371
    %v2103 = vunpack.c.l.b16 %v1372
    %v2104 = vunpack.c.h.b16 %v1372
    %v2105 = vunpack.c.l.b16 %v1373
    %v2106 = vunpack.c.h.b16 %v1373
    %v2107 = vunpack.c.l.b16 %v1374
    %v2108 = vunpack.c.h.b16 %v1374
    %v2109 = vunpack.c.l.b16 %v1375
    %v2110 = vunpack.c.h.b16 %v1375
    %v2111 = vunpack.c.l.b16 %v1376
    %v2112 = vunpack.c.h.b16 %v1376
    %v2113 = vunpack.c.l.b16 %v1377
    %v2114 = vunpack.c.h.b16 %v1377
    %v2115 = vunpack.c.l.b16 %v1378
    %v2116 = vunpack.c.h.b16 %v1378
    %v2117 = vunpack.c.l.b16 %v1379
    %v2118 = vunpack.c.h.b16 %v1379
    %v2119 = vunpack.c.l.b16 %v1380
    %v2120 = vunpack.c.h.b16 %v1380
    %v2121 = vunpack.c.l.b16 %v1381
    %v2122 = vunpack.c.h.b16 %v1381
    %v2123 = vunpack.c.l.b16 %v1382
    %v2124 = vunpack.c.h.b16 %v1382
    %v2125 = vunpack.c.l.b16 %v1383
    %v2126 = vunpack.c.h.b16 %v1383
    %v2127 = vunpack.c.l.b16 %v1384
    %v2128 = vunpack.c.h.b16 %v1384
    %v2129 = vunpack.c.l.b16 %v1385
    %v2130 = vunpack.c.h.b16 %v1385
    %v2131 = vunpack.c.l.b16 %v1386
    %v2132 = vunpack.c.h.b16 %v1386
    %v2133 = vunpack.c.l.b16 %v1387
    %v2134 = vunpack.c.h.b16 %v1387
    %v2135 = vunpack.c.l.b16 %v1388
    %v2136 = vunpack.c.h.b16 %v1388
    %v2137 = vunpack.c.l.b16 %v1389
    %v2138 = vunpack.c.h.b16 %v1389
    %v2139 = vunpack.c.l.b16 %v1390
    %v2140 = vunpack.c.h.b16 %v1390
    %v2141 = vunpack.c.l.b16 %v1391
    %v2142 = vunpack.c.h.b16 %v1391
    %v2143 = vunpack.c.l.b16 %v1392
    %v2144 = vunpack.c.h.b16 %v1392
    %v2145 = vunpack.c.l.b16 %v1393
    %v2146 = vunpack.c.h.b16 %v1393
    %v2147 = vunpack.c.l.b16 %v1394
    %v2148 = vunpack.c.h.b16 %v1394
    %v2149 = vunpack.c.l.b16 %v1395
    %v2150 = vunpack.c.h.b16 %v1395
    %v2151 = vunpack.c.l.b16 %v1396
    %v2152 = vunpack.c.h.b16 %v1396
    %v2153 = vunpack.c.l.b16 %v1397
    %v2154 = vunpack.c.h.b16 %v1397
    %v2155 = vunpack.c.l.b16 %v1398
    %v2156 = vunpack.c.h.b16 %v1398
    %v2157 = vunpack.c.l.b16 %v1399
    %v2158 = vunpack.c.h.b16 %v1399
    %v2159 = vunpack.c.l.b16 %v1400
    %v2160 = vunpack.c.h.b16 %v1400
    %v2161 = vunpack.c.l.b16 %v1401
    %v2162 = vunpack.c.h.b16 %v1401
    %v2163 = vunpack.c.l.b16 %v1402
    %v2164 = vunpack.c.h.b16 %v1402
    %v2165 = vunpack.c.l.b16 %v1403
    %v2166 = vunpack.c.h.b16 %v1403
    %v2167 = vunpack.c.l.b16 %v1404
    %v2168 = vunpack.c.h.b16 %v1404
    %v2169 = vunpack.c.l.b16 %v1405
    %v2170 = vunpack.c.h.b16 %v1405
    %v2171 = vunpack.c.l.b16 %v1406
    %v2172 = vunpack.c.h.b16 %v1406
    %v2173 = vunpack.c.l.b16 %v1407
    %v2174 = vunpack.c.h.b16 %v1407
    %v2175 = vunpack.c.l.b16 %v1408
    %v2176 = vunpack.c.h.b16 %v1408
    %v2177 = vpack.c.b16 %v1673, %v1665
    %v2178 = vpack.c.b16 %v1674, %v1666
    %v2179 = vpack.c.b16 %v1675, %v1667
    %v2180 = vpack.c.b16 %v1676, %v1668
    %v2181 = vpack.c.b16 %v1677, %v1669
    %v2182 = vpack.c.b16 %v1678, %v1670
    %v2183 = vpack.c.b16 %v1679, %v1671
    %v2184 = vpack.c.b16 %v1680, %v1672
    %v2185 = vpack.c.b16 %v1689, %v1681
    %v2186 = vpack.c.b16 %v1690, %v1682
    %v2187 = vpack.c.b16 %v1691, %v1683
    %v2188 = vpack.c.b16 %v1692, %v1684
    %v2189 = vpack.c.b16 %v1693, %v1685
    %v2190 = vpack.c.b16 %v1694, %v1686
    %v2191 = vpack.c.b16 %v1695, %v1687
    %v2192 = vpack.c.b16 %v1696, %v1688
    %v2193 = vpack.c.b16 %v1705, %v1697
    %v2194 = vpack.c.b16 %v1706, %v1698
    %v2195 = vpack.c.b16 %v1707, %v1699
    %v2196 = vpack.c.b16 %v1708, %v1700
    %v2197 = vpack.c.b16 %v1709, %v1701
    %v2198 = vpack.c.b16 %v1710, %v1702
    %v2199 = vpack.c.b16 %v1711, %v1703
    %v2200 = vpack.c.b16 %v1712, %v1704
    %v2201 = vpack.c.b16 %v1721, %v1713
    %v2202 = vpack.c.b16 %v1722, %v1714
    %v2203 = vpack.c.b16 %v1723, %v1715
    %v2204 = vpack.c.b16 %v1724, %v1716
    %v2205 = vpack.c.b16 %v1725, %v1717
    %v2206 = vpack.c.b16 %v1726, %v1718
    %v2207 = vpack.c.b16 %v1727, %v1719
    %v2208 = vpack.c.b16 %v1728, %v1720
    %v2209 = vpack.c.b16 %v1737, %v1729
    %v2210 = vpack.c.b16 %v1738, %v1730
    %v2211 = vpack.c.b16 %v1739, %v1731
    %v2212 = vpack.c.b16 %v1740, %v1732
    %v2213 = vpack.c.b16 %v1741, %v1733
    %v2214 = vpack.c.b16 %v1742, %v1734
    %v2215 = vpack.c.b16 %v1743, %v1735
    %v2216 = vpack.c.b16 %v1744, %v1736
    %v2217 = vpack.c.b16 %v1753, %v1745
    %v2218 = vpack.c.b16 %v1754, %v1746
    %v2219 = vpack.c.b16 %v1755, %v1747
    %v2220 = vpack.c.b16 %v1756, %v1748
    %v2221 = vpack.c.b16 %v1757, %v1749
    %v2222 = vpack.c.b16 %v1758, %v1750
    %v2223 = vpack.c.b16 %v1759, %v1751
    %v2224 = vpack.c.b16 %v1760, %v1752
    %v2225 = vpack.c.b16 %v1769, %v1761
    %v2226 = vpack.c.b16 %v1770, %v1762
    %v2227 = vpack.c.b16 %v1771, %v1763
    %v2228 = vpack.c.b16 %v1772, %v1764
    %v2229 = vpack.c.b16 %v1773, %v1765
    %v2230 = vpack.c.b16 %v1774, %v1766
    %v2231 = vpack.c.b16 %v1775, %v1767
    %v2232 = vpack.c.b16 %v1776, %v1768
    %v2233 = vpack.c.b16 %v1785, %v1777
    %v2234 = vpack.c.b16 %v1786, %v1778
    %v2235 = vpack.c.b16 %v1787, %v1779
    %v2236 = vpack.c.b16 %v1788, %v1780
    %v2237 = vpack.c.b16 %v1789, %v1781
    %v2238 = vpack.c.b16 %v1790, %v1782
    %v2239 = vpack.c.b16 %v1791, %v1783
    %v2240 = vpack.c.b16 %v1792, %v1784
    %v2241 = vpack.c.b16 %v1801, %v1793
    %v2242 = vpack.c.b16 %v1802, %v1794
    %v2243 = vpack.c.b16 %v1803, %v1795
    %v2244 = vpack.c.b16 %v1804, %v1796
    %v2245 = vpack.c.b16 %v1805, %v1797
    %v2246 = vpack.c.b16 %v1806, %v1798
    %v2247 = vpack.c.b16 %v1807, %v1799
    %v2248 = vpack.c.b16 %v1808, %v1800
    %v2249 = vpack.c.b16 %v1817, %v1809
    %v2250 = vpack.c.b16 %v1818, %v1810
    %v2251 = vpack.c.b16 %v1819, %v1811
    %v2252 = vpack.c.b16 %v1820, %v1812
    %v2253 = vpack.c.b16 %v1821, %v1813
    %v2254 = vpack.c.b16 %v1822, %v1814
    %v2255 = vpack.c.b16 %v1823, %v1815
    %v2256 = vpack.c.b16 %v1824, %v1816
    %v2257 = vpack.c.b16 %v1833, %v1825
    %v2258 = vpack.c.b16 %v1834, %v1826
    %v2259 = vpack.c.b16 %v1835, %v1827
    %v2260 = vpack.c.b16 %v1836, %v1828
    %v2261 = vpack.c.b16 %v1837, %v1829
    %v2262 = vpack.c.b16 %v1838, %v1830
    %v2263 = vpack.c.b16 %v1839, %v1831
    %v2264 = vpack.c.b16 %v1840, %v1832
    %v2265 = vpack.c.b16 %v1849, %v1841
    %v2266 = vpack.c.b16 %v1850, %v1842
    %v2267 = vpack.c.b16 %v1851, %v1843
    %v2268 = vpack.c.b16 %v1852, %v1844
    %v2269 = vpack.c.b16 %v1853, %v1845
    %v2270 = vpack.c.b16 %v1854, %v1846
    %v2271 = vpack.c.b16 %v1855, %v1847
    %v2272 = vpack.c.b16 %v1856, %v1848
    %v2273 = vpack.c.b16 %v1865, %v1857
    %v2274 = vpack.c.b16 %v1866, %v1858
    %v2275 = vpack.c.b16 %v1867, %v1859
    %v2276 = vpack.c.b16 %v1868, %v1860
    %v2277 = vpack.c.b16 %v1869, %v1861
    %v2278 = vpack.c.b16 %v1870, %v1862
    %v2279 = vpack.c.b16 %v1871, %v1863
    %v2280 = vpack.c.b16 %v1872, %v1864
    %v2281 = vpack.c.b16 %v1881, %v1873
    %v2282 = vpack.c.b16 %v1882, %v1874
    %v2283 = vpack.c.b16 %v1883, %v1875
    %v2284 = vpack.c.b16 %v1884, %v1876
    %v2285 = vpack.c.b16 %v1885, %v1877
    %v2286 = vpack.c.b16 %v1886, %v1878
    %v2287 = vpack.c.b16 %v1887, %v1879
    %v2288 = vpack.c.b16 %v1888, %v1880
    %v2289 = vpack.c.b16 %v1897, %v1889
    %v2290 = vpack.c.b16 %v1898, %v1890
    %v2291 = vpack.c.b16 %v1899, %v1891
    %v2292 = vpack.c.b16 %v1900, %v1892
    %v2293 = vpack.c.b16 %v1901, %v1893
    %v2294 = vpack.c.b16 %v1902, %v1894
    %v2295 = vpack.c.b16 %v1903, %v1895
    %v2296 = vpack.c.b16 %v1904, %v1896
    %v2297 = vpack.c.b16 %v1913, %v1905
    %v2298 = vpack.c.b16 %v1914, %v1906
    %v2299 = vpack.c.b16 %v1915, %v1907
    %v2300 = vpack.c.b16 %v1916, %v1908
    %v2301 = vpack.c.b16 %v1917, %v1909
    %v2302 = vpack.c.b16 %v1918, %v1910
    %v2303 = vpack.c.b16 %v1919, %v1911
    %v2304 = vpack.c.b16 %v1920, %v1912
    %v2305 = vpack.c.b16 %v1929, %v1921
    %v2306 = vpack.c.b16 %v1930, %v1922
    %v2307 = vpack.c.b16 %v1931, %v1923
    %v2308 = vpack.c.b16 %v1932, %v1924
    %v2309 = vpack.c.b16 %v1933, %v1925
    %v2310 = vpack.c.b16 %v1934, %v1926
    %v2311 = vpack.c.b16 %v1935, %v1927
    %v2312 = vpack.c.b16 %v1936, %v1928
    %v2313 = vpack.c.b16 %v1945, %v1937
    %v2314 = vpack.c.b16 %v1946, %v1938
    %v2315 = vpack.c.b16 %v1947, %v1939
    %v2316 = vpack.c.b16 %v1948, %v1940
    %v2317 = vpack.c.b16 %v1949, %v1941
    %v2318 = vpack.c.b16 %v1950, %v1942
    %v2319 = vpack.c.b16 %v1951, %v1943
    %v2320 = vpack.c.b16 %v1952, %v1944
    %v2321 = vpack.c.b16 %v1961, %v1953
    %v2322 = vpack.c.b16 %v1962, %v1954
    %v2323 = vpack.c.b16 %v1963, %v1955
    %v2324 = vpack.c.b16 %v1964, %v1956
    %v2325 = vpack.c.b16 %v1965, %v1957
    %v2326 = vpack.c.b16 %v1966, %v1958
    %v2327 = vpack.c.b16 %v1967, %v1959
    %v2328 = vpack.c.b16 %v1968, %v1960
    %v2329 = vpack.c.b16 %v1977, %v1969
    %v2330 = vpack.c.b16 %v1978, %v1970
    %v2331 = vpack.c.b16 %v1979, %v1971
    %v2332 = vpack.c.b16 %v1980, %v1972
    %v2333 = vpack.c.b16 %v1981, %v1973
    %v2334 = vpack.c.b16 %v1982, %v1974
    %v2335 = vpack.c.b16 %v1983, %v1975
    %v2336 = vpack.c.b16 %v1984, %v1976
    %v2337 = vpack.c.b16 %v1993, %v1985
    %v2338 = vpack.c.b16 %v1994, %v1986
    %v2339 = vpack.c.b16 %v1995, %v1987
    %v2340 = vpack.c.b16 %v1996, %v1988
    %v2341 = vpack.c.b16 %v1997, %v1989
    %v2342 = vpack.c.b16 %v1998, %v1990
    %v2343 = vpack.c.b16 %v1999, %v1991
    %v2344 = vpack.c.b16 %v2000, %v1992
    %v2345 = vpack.c.b16 %v2009, %v2001
    %v2346 = vpack.c.b16 %v2010, %v2002
    %v2347 = vpack.c.b16 %v2011, %v2003
    %v2348 = vpack.c.b16 %v2012, %v2004
    %v2349 = vpack.c.b16 %v2013, %v2005
    %v2350 = vpack.c.b16 %v2014, %v2006
    %v2351 = vpack.c.b16 %v2015, %v2007
    %v2352 = vpack.c.b16 %v2016, %v2008
    %v2353 = vpack.c.b16 %v2025, %v2017
    %v2354 = vpack.c.b16 %v2026, %v2018
    %v2355 = vpack.c.b16 %v2027, %v2019
    %v2356 = vpack.c.b16 %v2028, %v2020
    %v2357 = vpack.c.b16 %v2029, %v2021
    %v2358 = vpack.c.b16 %v2030, %v2022
    %v2359 = vpack.c.b16 %v2031, %v2023
    %v2360 = vpack.c.b16 %v2032, %v2024
    %v2361 = vpack.c.b16 %v2041, %v2033
    %v2362 = vpack.c.b16 %v2042, %v2034
    %v2363 = vpack.c.b16 %v2043, %v2035
    %v2364 = vpack.c.b16 %v2044, %v2036
    %v2365 = vpack.c.b16 %v2045, %v2037
    %v2366 = vpack.c.b16 %v2046, %v2038
    %v2367 = vpack.c.b16 %v2047, %v2039
    %v2368 = vpack.c.b16 %v2048, %v2040
    %v2369 = vpack.c.b16 %v2057, %v2049
    %v2370 = vpack.c.b16 %v2058, %v2050
    %v2371 = vpack.c.b16 %v2059, %v2051
    %v2372 = vpack.c.b16 %v2060, %v2052
    %v2373 = vpack.c.b16 %v2061, %v2053
    %v2374 = vpack.c.b16 %v2062, %v2054
    %v2375 = vpack.c.b16 %v2063, %v2055
    %v2376 = vpack.c.b16 %v2064, %v2056
    %v2377 = vpack.c.b16 %v2073, %v2065
    %v2378 = vpack.c.b16 %v2074, %v2066
    %v2379 = vpack.c.b16 %v2075, %v2067
    %v2380 = vpack.c.b16 %v2076, %v2068
    %v2381 = vpack.c.b16 %v2077, %v2069
    %v2382 = vpack.c.b16 %v2078, %v2070
    %v2383 = vpack.c.b16 %v2079, %v2071
    %v2384 = vpack.c.b16 %v2080, %v2072
    %v2385 = vpack.c.b16 %v2089, %v2081
    %v2386 = vpack.c.b16 %v2090, %v2082
    %v2387 = vpack.c.b16 %v2091, %v2083
    %v2388 = vpack.c.b16 %v2092, %v2084
    %v2389 = vpack.c.b16 %v2093, %v2085
    %v2390 = vpack.c.b16 %v2094, %v2086
    %v2391 = vpack.c.b16 %v2095, %v2087
    %v2392 = vpack.c.b16 %v2096, %v2088
    %v2393 = vpack.c.b16 %v2105, %v2097
    %v2394 = vpack.c.b16 %v2106, %v2098
    %v2395 = vpack.c.b16 %v2107, %v2099
    %v2396 = vpack.c.b16 %v2108, %v2100
    %v2397 = vpack.c.b16 %v2109, %v2101
    %v2398 = vpack.c.b16 %v2110, %v2102
    %v2399 = vpack.c.b16 %v2111, %v2103
    %v2400 = vpack.c.b16 %v2112, %v2104
    %v2401 = vpack.c.b16 %v2121, %v2113
    %v2402 = vpack.c.b16 %v2122, %v2114
    %v2403 = vpack.c.b16 %v2123, %v2115
    %v2404 = vpack.c.b16 %v2124, %v2116
    %v2405 = vpack.c.b16 %v2125, %v2117
    %v2406 = vpack.c.b16 %v2126, %v2118
    %v2407 = vpack.c.b16 %v2127, %v2119
    %v2408 = vpack.c.b16 %v2128, %v2120
    %v2409 = vpack.c.b16 %v2137, %v2129
    %v2410 = vpack.c.b16 %v2138, %v2130
    %v2411 = vpack.c.b16 %v2139, %v2131
    %v2412 = vpack.c.b16 %v2140, %v2132
    %v2413 = vpack.c.b16 %v2141, %v2133
    %v2414 = vpack.c.b16 %v2142, %v2134
    %v2415 = vpack.c.b16 %v2143, %v2135
    %v2416 = vpack.c.b16 %v2144, %v2136
    %v2417 = vpack.c.b16 %v2153, %v2145
    %v2418 = vpack.c.b16 %v2154, %v2146
    %v2419 = vpack.c.b16 %v2155, %v2147
    %v2420 = vpack.c.b16 %v2156, %v2148
    %v2421 = vpack.c.b16 %v2157, %v2149
    %v2422 = vpack.c.b16 %v2158, %v2150
    %v2423 = vpack.c.b16 %v2159, %v2151
    %v2424 = vpack.c.b16 %v2160, %v2152
    %v2425 = vpack.c.b16 %v2169, %v2161
    %v2426 = vpack.c.b16 %v2170, %v2162
    %v2427 = vpack.c.b16 %v2171, %v2163
    %v2428 = vpack.c.b16 %v2172, %v2164
    %v2429 = vpack.c.b16 %v2173, %v2165
    %v2430 = vpack.c.b16 %v2174, %v2166
    %v2431 = vpack.c.b16 %v2175, %v2167
    %v2432 = vpack.c.b16 %v2176, %v2168
    %2689 = vmatprep.subr.bf16.mxu0 %v2178
    %2690 = vmatpush1.bf16.msra.mxu0 %v2177
    %2691 = vmatprep.subr.bf16.mxu0 %v2186
    %2692 = vmatpush1.bf16.msra.mxu0 %v2185
    %2693 = vmatprep.subr.bf16.mxu0 %v2194
    %2694 = vmatpush1.bf16.msra.mxu0 %v2193
    %2695 = vmatprep.subr.bf16.mxu0 %v2202
    %2696 = vmatpush1.bf16.msra.mxu0 %v2201
    %2697 = vmatprep.subr.bf16.mxu0 %v2210
    %2698 = vmatpush1.bf16.msra.mxu0 %v2209
    %2699 = vmatprep.subr.bf16.mxu0 %v2218
    %2700 = vmatpush1.bf16.msra.mxu0 %v2217
    %2701 = vmatprep.subr.bf16.mxu0 %v2226
    %2702 = vmatpush1.bf16.msra.mxu0 %v2225
    %2703 = vmatprep.subr.bf16.mxu0 %v2234
    %2704 = vmatpush1.bf16.msra.mxu0 %v2233
    %2705 = vmatprep.subr.bf16.mxu0 %v2242
    %2706 = vmatpush1.bf16.msra.mxu0 %v2241
    %2707 = vmatprep.subr.bf16.mxu0 %v2250
    %2708 = vmatpush1.bf16.msra.mxu0 %v2249
    %2709 = vmatprep.subr.bf16.mxu0 %v2258
    %2710 = vmatpush1.bf16.msra.mxu0 %v2257
    %2711 = vmatprep.subr.bf16.mxu0 %v2266
    %2712 = vmatpush1.bf16.msra.mxu0 %v2265
    %2713 = vmatprep.subr.bf16.mxu0 %v2274
    %2714 = vmatpush1.bf16.msra.mxu0 %v2273
    %2715 = vmatprep.subr.bf16.mxu0 %v2282
    %2716 = vmatpush1.bf16.msra.mxu0 %v2281
    %2717 = vmatprep.subr.bf16.mxu0 %v2290
    %2718 = vmatpush1.bf16.msra.mxu0 %v2289
    %2719 = vmatprep.subr.bf16.mxu0 %v2298
    %2720 = vmatpush1.bf16.msra.mxu0 %v2297
    %2721 = vmatprep.mubr.bf16.mxu0 %v1150
    %2722 = vmatmul.mubr.bf16.gmra.mrb[0].mxu0 %v1149
    %v2723 = vpop.f32.mrb[0].mxu0
    %v2724 = vadd.f32 0.0, %v2723
    %v2725 = vpop.f32.mrb[0].mxu0
    %v2726 = vadd.f32 0.0, %v2725
    %v2727 = vpop.f32.mrb[0].mxu0
    %v2728 = vpop.f32.mrb[0].mxu0
    %2729 = vdwg.mxu0
    %2730 = vmatprep.subr.bf16.mxu0 %v2306
    %2731 = vmatpush1.bf16.msra.mxu0 %v2305
    %2732 = vmatprep.subr.bf16.mxu0 %v2314
    %2733 = vmatpush1.bf16.msra.mxu0 %v2313
    %2734 = vmatprep.subr.bf16.mxu0 %v2322
    %2735 = vmatpush1.bf16.msra.mxu0 %v2321
    %2736 = vmatprep.subr.bf16.mxu0 %v2330
    %2737 = vmatpush1.bf16.msra.mxu0 %v2329
    %2738 = vmatprep.subr.bf16.mxu0 %v2338
    %2739 = vmatpush1.bf16.msra.mxu0 %v2337
    %2740 = vmatprep.subr.bf16.mxu0 %v2346
    %2741 = vmatpush1.bf16.msra.mxu0 %v2345
    %2742 = vmatprep.subr.bf16.mxu0 %v2354
    %2743 = vmatpush1.bf16.msra.mxu0 %v2353
    %2744 = vmatprep.subr.bf16.mxu0 %v2362
    %2745 = vmatpush1.bf16.msra.mxu0 %v2361
    %2746 = vmatprep.subr.bf16.mxu0 %v2370
    %2747 = vmatpush1.bf16.msra.mxu0 %v2369
    %2748 = vmatprep.subr.bf16.mxu0 %v2378
    %2749 = vmatpush1.bf16.msra.mxu0 %v2377
    %2750 = vmatprep.subr.bf16.mxu0 %v2386
    %2751 = vmatpush1.bf16.msra.mxu0 %v2385
    %2752 = vmatprep.subr.bf16.mxu0 %v2394
    %2753 = vmatpush1.bf16.msra.mxu0 %v2393
    %2754 = vmatprep.subr.bf16.mxu0 %v2402
    %2755 = vmatpush1.bf16.msra.mxu0 %v2401
    %2756 = vmatprep.subr.bf16.mxu0 %v2410
    %2757 = vmatpush1.bf16.msra.mxu0 %v2409
    %2758 = vmatprep.subr.bf16.mxu0 %v2418
    %2759 = vmatpush1.bf16.msra.mxu0 %v2417
    %2760 = vmatprep.subr.bf16.mxu0 %v2426
    %2761 = vmatpush1.bf16.msra.mxu0 %v2425
    %2762 = vmatprep.mubr.bf16.mxu0 %v1152
    %2763 = vmatmul.mubr.bf16.gmra.mrb[0].mxu0 %v1151
    %v2764 = vpop.f32.mrb[0].mxu0
    %v2765 = vadd.f32 %v2724, %v2764
    %v2766 = vpop.f32.mrb[0].mxu0
    %v2767 = vadd.f32 %v2726, %v2766
    %v2768 = vpop.f32.mrb[0].mxu0
    %v2769 = vpop.f32.mrb[0].mxu0
    %2770 = vdwg.mxu0
    %2771 = vmatprep.subr.bf16.mxu0 %v2180
    %2772 = vmatpush1.bf16.msra.mxu0 %v2179
    %2773 = vmatprep.subr.bf16.mxu0 %v2188
    %2774 = vmatpush1.bf16.msra.mxu0 %v2187
    %2775 = vmatprep.subr.bf16.mxu0 %v2196
    %2776 = vmatpush1.bf16.msra.mxu0 %v2195
    %2777 = vmatprep.subr.bf16.mxu0 %v2204
    %2778 = vmatpush1.bf16.msra.mxu0 %v2203
    %2779 = vmatprep.subr.bf16.mxu0 %v2212
    %2780 = vmatpush1.bf16.msra.mxu0 %v2211
    %2781 = vmatprep.subr.bf16.mxu0 %v2220
    %2782 = vmatpush1.bf16.msra.mxu0 %v2219
    %2783 = vmatprep.subr.bf16.mxu0 %v2228
    %2784 = vmatpush1.bf16.msra.mxu0 %v2227
    %2785 = vmatprep.subr.bf16.mxu0 %v2236
    %2786 = vmatpush1.bf16.msra.mxu0 %v2235
    %2787 = vmatprep.subr.bf16.mxu0 %v2244
    %2788 = vmatpush1.bf16.msra.mxu0 %v2243
    %2789 = vmatprep.subr.bf16.mxu0 %v2252
    %2790 = vmatpush1.bf16.msra.mxu0 %v2251
    %2791 = vmatprep.subr.bf16.mxu0 %v2260
    %2792 = vmatpush1.bf16.msra.mxu0 %v2259
    %2793 = vmatprep.subr.bf16.mxu0 %v2268
    %2794 = vmatpush1.bf16.msra.mxu0 %v2267
    %2795 = vmatprep.subr.bf16.mxu0 %v2276
    %2796 = vmatpush1.bf16.msra.mxu0 %v2275
    %2797 = vmatprep.subr.bf16.mxu0 %v2284
    %2798 = vmatpush1.bf16.msra.mxu0 %v2283
    %2799 = vmatprep.subr.bf16.mxu0 %v2292
    %2800 = vmatpush1.bf16.msra.mxu0 %v2291
    %2801 = vmatprep.subr.bf16.mxu0 %v2300
    %2802 = vmatpush1.bf16.msra.mxu0 %v2299
    %2803 = vmatprep.mubr.bf16.mxu0 %v1150
    %2804 = vmatmul.mubr.bf16.gmra.mrb[0].mxu0 %v1149
    %v2805 = vpop.f32.mrb[0].mxu0
    %v2806 = vadd.f32 0.0, %v2805
    %v2807 = vpop.f32.mrb[0].mxu0
    %v2808 = vadd.f32 0.0, %v2807
    %v2809 = vpop.f32.mrb[0].mxu0
    %v2810 = vpop.f32.mrb[0].mxu0
    %2811 = vdwg.mxu0
    %2812 = vmatprep.subr.bf16.mxu0 %v2308
    %2813 = vmatpush1.bf16.msra.mxu0 %v2307
    %2814 = vmatprep.subr.bf16.mxu0 %v2316
    %2815 = vmatpush1.bf16.msra.mxu0 %v2315
    %2816 = vmatprep.subr.bf16.mxu0 %v2324
    %2817 = vmatpush1.bf16.msra.mxu0 %v2323
    %2818 = vmatprep.subr.bf16.mxu0 %v2332
    %2819 = vmatpush1.bf16.msra.mxu0 %v2331
    %2820 = vmatprep.subr.bf16.mxu0 %v2340
    %2821 = vmatpush1.bf16.msra.mxu0 %v2339
    %2822 = vmatprep.subr.bf16.mxu0 %v2348
    %2823 = vmatpush1.bf16.msra.mxu0 %v2347
    %2824 = vmatprep.subr.bf16.mxu0 %v2356
    %2825 = vmatpush1.bf16.msra.mxu0 %v2355
    %2826 = vmatprep.subr.bf16.mxu0 %v2364
    %2827 = vmatpush1.bf16.msra.mxu0 %v2363
    %2828 = vmatprep.subr.bf16.mxu0 %v2372
    %2829 = vmatpush1.bf16.msra.mxu0 %v2371
    %2830 = vmatprep.subr.bf16.mxu0 %v2380
    %2831 = vmatpush1.bf16.msra.mxu0 %v2379
    %2832 = vmatprep.subr.bf16.mxu0 %v2388
    %2833 = vmatpush1.bf16.msra.mxu0 %v2387
    %2834 = vmatprep.subr.bf16.mxu0 %v2396
    %2835 = vmatpush1.bf16.msra.mxu0 %v2395
    %2836 = vmatprep.subr.bf16.mxu0 %v2404
    %2837 = vmatpush1.bf16.msra.mxu0 %v2403
    %2838 = vmatprep.subr.bf16.mxu0 %v2412
    %2839 = vmatpush1.bf16.msra.mxu0 %v2411
    %2840 = vmatprep.subr.bf16.mxu0 %v2420
    %2841 = vmatpush1.bf16.msra.mxu0 %v2419
    %2842 = vmatprep.subr.bf16.mxu0 %v2428
    %2843 = vmatpush1.bf16.msra.mxu0 %v2427
    %2844 = vmatprep.mubr.bf16.mxu0 %v1152
    %2845 = vmatmul.mubr.bf16.gmra.mrb[0].mxu0 %v1151
    %v2846 = vpop.f32.mrb[0].mxu0
    %v2847 = vadd.f32 %v2806, %v2846
    %v2848 = vpop.f32.mrb[0].mxu0
    %v2849 = vadd.f32 %v2808, %v2848
    %v2850 = vpop.f32.mrb[0].mxu0
    %v2851 = vpop.f32.mrb[0].mxu0
    %2852 = vdwg.mxu0
    %2853 = vmatprep.subr.bf16.mxu0 %v2182
    %2854 = vmatpush1.bf16.msra.mxu0 %v2181
    %2855 = vmatprep.subr.bf16.mxu0 %v2190
    %2856 = vmatpush1.bf16.msra.mxu0 %v2189
    %2857 = vmatprep.subr.bf16.mxu0 %v2198
    %2858 = vmatpush1.bf16.msra.mxu0 %v2197
    %2859 = vmatprep.subr.bf16.mxu0 %v2206
    %2860 = vmatpush1.bf16.msra.mxu0 %v2205
    %2861 = vmatprep.subr.bf16.mxu0 %v2214
    %2862 = vmatpush1.bf16.msra.mxu0 %v2213
    %2863 = vmatprep.subr.bf16.mxu0 %v2222
    %2864 = vmatpush1.bf16.msra.mxu0 %v2221
    %2865 = vmatprep.subr.bf16.mxu0 %v2230
    %2866 = vmatpush1.bf16.msra.mxu0 %v2229
    %2867 = vmatprep.subr.bf16.mxu0 %v2238
    %2868 = vmatpush1.bf16.msra.mxu0 %v2237
    %2869 = vmatprep.subr.bf16.mxu0 %v2246
    %2870 = vmatpush1.bf16.msra.mxu0 %v2245
    %2871 = vmatprep.subr.bf16.mxu0 %v2254
    %2872 = vmatpush1.bf16.msra.mxu0 %v2253
    %2873 = vmatprep.subr.bf16.mxu0 %v2262
    %2874 = vmatpush1.bf16.msra.mxu0 %v2261
    %2875 = vmatprep.subr.bf16.mxu0 %v2270
    %2876 = vmatpush1.bf16.msra.mxu0 %v2269
    %2877 = vmatprep.subr.bf16.mxu0 %v2278
    %2878 = vmatpush1.bf16.msra.mxu0 %v2277
    %2879 = vmatprep.subr.bf16.mxu0 %v2286
    %2880 = vmatpush1.bf16.msra.mxu0 %v2285
    %2881 = vmatprep.subr.bf16.mxu0 %v2294
    %2882 = vmatpush1.bf16.msra.mxu0 %v2293
    %2883 = vmatprep.subr.bf16.mxu0 %v2302
    %2884 = vmatpush1.bf16.msra.mxu0 %v2301
    %2885 = vmatprep.mubr.bf16.mxu0 %v1150
    %2886 = vmatmul.mubr.bf16.gmra.mrb[0].mxu0 %v1149
    %v2887 = vpop.f32.mrb[0].mxu0
    %v2888 = vadd.f32 0.0, %v2887
    %v2889 = vpop.f32.mrb[0].mxu0
    %v2890 = vadd.f32 0.0, %v2889
    %v2891 = vpop.f32.mrb[0].mxu0
    %v2892 = vpop.f32.mrb[0].mxu0
    %2893 = vdwg.mxu0
    %2894 = vmatprep.subr.bf16.mxu0 %v2310
    %2895 = vmatpush1.bf16.msra.mxu0 %v2309
    %2896 = vmatprep.subr.bf16.mxu0 %v2318
    %2897 = vmatpush1.bf16.msra.mxu0 %v2317
    %2898 = vmatprep.subr.bf16.mxu0 %v2326
    %2899 = vmatpush1.bf16.msra.mxu0 %v2325
    %2900 = vmatprep.subr.bf16.mxu0 %v2334
    %2901 = vmatpush1.bf16.msra.mxu0 %v2333
    %2902 = vmatprep.subr.bf16.mxu0 %v2342
    %2903 = vmatpush1.bf16.msra.mxu0 %v2341
    %2904 = vmatprep.subr.bf16.mxu0 %v2350
    %2905 = vmatpush1.bf16.msra.mxu0 %v2349
    %2906 = vmatprep.subr.bf16.mxu0 %v2358
    %2907 = vmatpush1.bf16.msra.mxu0 %v2357
    %2908 = vmatprep.subr.bf16.mxu0 %v2366
    %2909 = vmatpush1.bf16.msra.mxu0 %v2365
    %2910 = vmatprep.subr.bf16.mxu0 %v2374
    %2911 = vmatpush1.bf16.msra.mxu0 %v2373
    %2912 = vmatprep.subr.bf16.mxu0 %v2382
    %2913 = vmatpush1.bf16.msra.mxu0 %v2381
    %2914 = vmatprep.subr.bf16.mxu0 %v2390
    %2915 = vmatpush1.bf16.msra.mxu0 %v2389
    %2916 = vmatprep.subr.bf16.mxu0 %v2398
    %2917 = vmatpush1.bf16.msra.mxu0 %v2397
    %2918 = vmatprep.subr.bf16.mxu0 %v2406
    %2919 = vmatpush1.bf16.msra.mxu0 %v2405
    %2920 = vmatprep.subr.bf16.mxu0 %v2414
    %2921 = vmatpush1.bf16.msra.mxu0 %v2413
    %2922 = vmatprep.subr.bf16.mxu0 %v2422
    %2923 = vmatpush1.bf16.msra.mxu0 %v2421
    %2924 = vmatprep.subr.bf16.mxu0 %v2430
    %2925 = vmatpush1.bf16.msra.mxu0 %v2429
    %2926 = vmatprep.mubr.bf16.mxu0 %v1152
    %2927 = vmatmul.mubr.bf16.gmra.mrb[0].mxu0 %v1151
    %v2928 = vpop.f32.mrb[0].mxu0
    %v2929 = vadd.f32 %v2888, %v2928
    %v2930 = vpop.f32.mrb[0].mxu0
    %v2931 = vadd.f32 %v2890, %v2930
    %v2932 = vpop.f32.mrb[0].mxu0
    %v2933 = vpop.f32.mrb[0].mxu0
    %2934 = vdwg.mxu0
    %2935 = vmatprep.subr.bf16.mxu0 %v2184
    %2936 = vmatpush1.bf16.msra.mxu0 %v2183
    %2937 = vmatprep.subr.bf16.mxu0 %v2192
    %2938 = vmatpush1.bf16.msra.mxu0 %v2191
    %2939 = vmatprep.subr.bf16.mxu0 %v2200
    %2940 = vmatpush1.bf16.msra.mxu0 %v2199
    %2941 = vmatprep.subr.bf16.mxu0 %v2208
    %2942 = vmatpush1.bf16.msra.mxu0 %v2207
    %2943 = vmatprep.subr.bf16.mxu0 %v2216
    %2944 = vmatpush1.bf16.msra.mxu0 %v2215
    %2945 = vmatprep.subr.bf16.mxu0 %v2224
    %2946 = vmatpush1.bf16.msra.mxu0 %v2223
    %2947 = vmatprep.subr.bf16.mxu0 %v2232
    %2948 = vmatpush1.bf16.msra.mxu0 %v2231
    %2949 = vmatprep.subr.bf16.mxu0 %v2240
    %2950 = vmatpush1.bf16.msra.mxu0 %v2239
    %2951 = vmatprep.subr.bf16.mxu0 %v2248
    %2952 = vmatpush1.bf16.msra.mxu0 %v2247
    %2953 = vmatprep.subr.bf16.mxu0 %v2256
    %2954 = vmatpush1.bf16.msra.mxu0 %v2255
    %2955 = vmatprep.subr.bf16.mxu0 %v2264
    %2956 = vmatpush1.bf16.msra.mxu0 %v2263
    %2957 = vmatprep.subr.bf16.mxu0 %v2272
    %2958 = vmatpush1.bf16.msra.mxu0 %v2271
    %2959 = vmatprep.subr.bf16.mxu0 %v2280
    %2960 = vmatpush1.bf16.msra.mxu0 %v2279
    %2961 = vmatprep.subr.bf16.mxu0 %v2288
    %2962 = vmatpush1.bf16.msra.mxu0 %v2287
    %2963 = vmatprep.subr.bf16.mxu0 %v2296
    %2964 = vmatpush1.bf16.msra.mxu0 %v2295
    %2965 = vmatprep.subr.bf16.mxu0 %v2304
    %2966 = vmatpush1.bf16.msra.mxu0 %v2303
    %2967 = vmatprep.mubr.bf16.mxu0 %v1150
    %2968 = vmatmul.mubr.bf16.gmra.mrb[0].mxu0 %v1149
    %v2969 = vpop.f32.mrb[0].mxu0
    %v2970 = vadd.f32 0.0, %v2969
    %v2971 = vpop.f32.mrb[0].mxu0
    %v2972 = vadd.f32 0.0, %v2971
    %v2973 = vpop.f32.mrb[0].mxu0
    %v2974 = vpop.f32.mrb[0].mxu0
    %2975 = vdwg.mxu0
    %2976 = vmatprep.subr.bf16.mxu0 %v2312
    %2977 = vmatpush1.bf16.msra.mxu0 %v2311
    %2978 = vmatprep.subr.bf16.mxu0 %v2320
    %2979 = vmatpush1.bf16.msra.mxu0 %v2319
    %2980 = vmatprep.subr.bf16.mxu0 %v2328
    %2981 = vmatpush1.bf16.msra.mxu0 %v2327
    %2982 = vmatprep.subr.bf16.mxu0 %v2336
    %2983 = vmatpush1.bf16.msra.mxu0 %v2335
    %2984 = vmatprep.subr.bf16.mxu0 %v2344
    %2985 = vmatpush1.bf16.msra.mxu0 %v2343
    %2986 = vmatprep.subr.bf16.mxu0 %v2352
    %2987 = vmatpush1.bf16.msra.mxu0 %v2351
    %2988 = vmatprep.subr.bf16.mxu0 %v2360
    %2989 = vmatpush1.bf16.msra.mxu0 %v2359
    %2990 = vmatprep.subr.bf16.mxu0 %v2368
    %2991 = vmatpush1.bf16.msra.mxu0 %v2367
    %2992 = vmatprep.subr.bf16.mxu0 %v2376
    %2993 = vmatpush1.bf16.msra.mxu0 %v2375
    %2994 = vmatprep.subr.bf16.mxu0 %v2384
    %2995 = vmatpush1.bf16.msra.mxu0 %v2383
    %2996 = vmatprep.subr.bf16.mxu0 %v2392
    %2997 = vmatpush1.bf16.msra.mxu0 %v2391
    %2998 = vmatprep.subr.bf16.mxu0 %v2400
    %2999 = vmatpush1.bf16.msra.mxu0 %v2399
    %3000 = vmatprep.subr.bf16.mxu0 %v2408
    %3001 = vmatpush1.bf16.msra.mxu0 %v2407
    %3002 = vmatprep.subr.bf16.mxu0 %v2416
    %3003 = vmatpush1.bf16.msra.mxu0 %v2415
    %3004 = vmatprep.subr.bf16.mxu0 %v2424
    %3005 = vmatpush1.bf16.msra.mxu0 %v2423
    %3006 = vmatprep.subr.bf16.mxu0 %v2432
    %3007 = vmatpush1.bf16.msra.mxu0 %v2431
    %3008 = vmatprep.mubr.bf16.mxu0 %v1152
    %3009 = vmatmul.mubr.bf16.gmra.mrb[0].mxu0 %v1151
    %v3010 = vpop.f32.mrb[0].mxu0
    %v3011 = vadd.f32 %v2970, %v3010
    %v3012 = vpop.f32.mrb[0].mxu0
    %v3013 = vadd.f32 %v2972, %v3012
    %v3014 = vpop.f32.mrb[0].mxu0
    %v3015 = vpop.f32.mrb[0].mxu0
    %3016 = vdwg.mxu0
    %v3017 = vrot.slane %v2765, 4
    %v3018 = vadd.f32 %v2765, %v3017
    %v3019 = vrot.slane %v3018, 2
    %v3020 = vadd.f32 %v3018, %v3019
    %v3021 = vrot.slane %v3020, 1
    %v3022 = vadd.f32 %v3020, %v3021
    %v3023 = vrot.slane %v2767, 4
    %v3024 = vadd.f32 %v2767, %v3023
    %v3025 = vrot.slane %v3024, 2
    %v3026 = vadd.f32 %v3024, %v3025
    %v3027 = vrot.slane %v3026, 1
    %v3028 = vadd.f32 %v3026, %v3027
    %v3029 = vrot.slane %v2847, 4
    %v3030 = vadd.f32 %v2847, %v3029
    %v3031 = vrot.slane %v3030, 2
    %v3032 = vadd.f32 %v3030, %v3031
    %v3033 = vrot.slane %v3032, 1
    %v3034 = vadd.f32 %v3032, %v3033
    %v3035 = vrot.slane %v2849, 4
    %v3036 = vadd.f32 %v2849, %v3035
    %v3037 = vrot.slane %v3036, 2
    %v3038 = vadd.f32 %v3036, %v3037
    %v3039 = vrot.slane %v3038, 1
    %v3040 = vadd.f32 %v3038, %v3039
    %v3041 = vrot.slane %v2929, 4
    %v3042 = vadd.f32 %v2929, %v3041
    %v3043 = vrot.slane %v3042, 2
    %v3044 = vadd.f32 %v3042, %v3043
    %v3045 = vrot.slane %v3044, 1
    %v3046 = vadd.f32 %v3044, %v3045
    %v3047 = vrot.slane %v2931, 4
    %v3048 = vadd.f32 %v2931, %v3047
    %v3049 = vrot.slane %v3048, 2
    %v3050 = vadd.f32 %v3048, %v3049
    %v3051 = vrot.slane %v3050, 1
    %v3052 = vadd.f32 %v3050, %v3051
    %v3053 = vrot.slane %v3011, 4
    %v3054 = vadd.f32 %v3011, %v3053
    %v3055 = vrot.slane %v3054, 2
    %v3056 = vadd.f32 %v3054, %v3055
    %v3057 = vrot.slane %v3056, 1
    %v3058 = vadd.f32 %v3056, %v3057
    %v3059 = vrot.slane %v3013, 4
    %v3060 = vadd.f32 %v3013, %v3059
    %v3061 = vrot.slane %v3060, 2
    %v3062 = vadd.f32 %v3060, %v3061
    %v3063 = vrot.slane %v3062, 1
    %v3064 = vadd.f32 %v3062, %v3063
    %v3065 = vmul.f32 %v3022, %v486
    %v3066 = vmul.f32 %v3028, %v486
    %v3067 = vmul.f32 %v3034, %v486
    %v3068 = vmul.f32 %v3040, %v486
    %v3069 = vmul.f32 %v3046, %v486
    %v3070 = vmul.f32 %v3052, %v486
    %v3071 = vmul.f32 %v3058, %v486
    %v3072 = vmul.f32 %v3064, %v486
    %v3073 = vsub.f32 %v2765, %v3065
    %v3074 = vsub.f32 %v2767, %v3066
    %v3075 = vsub.f32 %v2847, %v3067
    %v3076 = vsub.f32 %v2849, %v3068
    %v3077 = vsub.f32 %v2929, %v3069
    %v3078 = vsub.f32 %v2931, %v3070
    %v3079 = vsub.f32 %v3011, %v3071
    %v3080 = vsub.f32 %v3013, %v3072
    %v3081 = vmul.f32 %v3073, %v3073
    %v3082 = vmul.f32 %v3074, %v3074
    %v3083 = vmul.f32 %v3075, %v3075
    %v3084 = vmul.f32 %v3076, %v3076
    %v3085 = vmul.f32 %v3077, %v3077
    %v3086 = vmul.f32 %v3078, %v3078
    %v3087 = vmul.f32 %v3079, %v3079
    %v3088 = vmul.f32 %v3080, %v3080
    %v3089 = vrot.slane %v3081, 4
    %v3090 = vadd.f32 %v3081, %v3089
    %v3091 = vrot.slane %v3090, 2
    %v3092 = vadd.f32 %v3090, %v3091
    %v3093 = vrot.slane %v3092, 1
    %v3094 = vadd.f32 %v3092, %v3093
    %v3095 = vrot.slane %v3082, 4
    %v3096 = vadd.f32 %v3082, %v3095
    %v3097 = vrot.slane %v3096, 2
    %v3098 = vadd.f32 %v3096, %v3097
    %v3099 = vrot.slane %v3098, 1
    %v3100 = vadd.f32 %v3098, %v3099
    %v3101 = vrot.slane %v3083, 4
    %v3102 = vadd.f32 %v3083, %v3101
    %v3103 = vrot.slane %v3102, 2
    %v3104 = vadd.f32 %v3102, %v3103
    %v3105 = vrot.slane %v3104, 1
    %v3106 = vadd.f32 %v3104, %v3105
    %v3107 = vrot.slane %v3084, 4
    %v3108 = vadd.f32 %v3084, %v3107
    %v3109 = vrot.slane %v3108, 2
    %v3110 = vadd.f32 %v3108, %v3109
    %v3111 = vrot.slane %v3110, 1
    %v3112 = vadd.f32 %v3110, %v3111
    %v3113 = vrot.slane %v3085, 4
    %v3114 = vadd.f32 %v3085, %v3113
    %v3115 = vrot.slane %v3114, 2
    %v3116 = vadd.f32 %v3114, %v3115
    %v3117 = vrot.slane %v3116, 1
    %v3118 = vadd.f32 %v3116, %v3117
    %v3119 = vrot.slane %v3086, 4
    %v3120 = vadd.f32 %v3086, %v3119
    %v3121 = vrot.slane %v3120, 2
    %v3122 = vadd.f32 %v3120, %v3121
    %v3123 = vrot.slane %v3122, 1
    %v3124 = vadd.f32 %v3122, %v3123
    %v3125 = vrot.slane %v3087, 4
    %v3126 = vadd.f32 %v3087, %v3125
    %v3127 = vrot.slane %v3126, 2
    %v3128 = vadd.f32 %v3126, %v3127
    %v3129 = vrot.slane %v3128, 1
    %v3130 = vadd.f32 %v3128, %v3129
    %v3131 = vrot.slane %v3088, 4
    %v3132 = vadd.f32 %v3088, %v3131
    %v3133 = vrot.slane %v3132, 2
    %v3134 = vadd.f32 %v3132, %v3133
    %v3135 = vrot.slane %v3134, 1
    %v3136 = vadd.f32 %v3134, %v3135
    %v3137 = vmul.f32 %v3094, %v486
    %v3138 = vmul.f32 %v3100, %v486
    %v3139 = vmul.f32 %v3106, %v486
    %v3140 = vmul.f32 %v3112, %v486
    %v3141 = vmul.f32 %v3118, %v486
    %v3142 = vmul.f32 %v3124, %v486
    %v3143 = vmul.f32 %v3130, %v486
    %v3144 = vmul.f32 %v3136, %v486
    %v3145 = vadd.f32 %v3137, 0.8
    %v3146 = vadd.f32 %v3138, 0.8
    %v3147 = vadd.f32 %v3139, 0.8
    %v3148 = vadd.f32 %v3140, 0.8
    %v3149 = vadd.f32 %v3141, 0.8
    %v3150 = vadd.f32 %v3142, 0.8
    %v3151 = vadd.f32 %v3143, 0.8
    %v3152 = vadd.f32 %v3144, 0.8
    %v3153 = vrsqrt.pop %v3145
    %v3154 = vrsqrt.pop %v3146
    %v3155 = vrsqrt.pop %v3147
    %v3156 = vrsqrt.pop %v3148
    %v3157 = vrsqrt.pop %v3149
    %v3158 = vrsqrt.pop %v3150
    %v3159 = vrsqrt.pop %v3151
    %v3160 = vrsqrt.pop %v3152
    %v3161 = vmul.f32 %v3073, %v3153
    %v3162 = vmul.f32 %v3074, %v3154
    %v3163 = vmul.f32 %v3075, %v3155
    %v3164 = vmul.f32 %v3076, %v3156
    %v3165 = vmul.f32 %v3077, %v3157
    %v3166 = vmul.f32 %v3078, %v3158
    %v3167 = vmul.f32 %v3079, %v3159
    %v3168 = vmul.f32 %v3080, %v3160
    %v3169 = vld [vmem:[#allocation19] sm:$0xff]
    %v3171 = vlaneseq
    %v3172 = vshrl.u32 %v3171, 7
    %v3173 = vsub.s32 0, %v3172
    %v3174 = vrot.slane %v3169, %v3173
    %v3175 = vlaneseq
    %v3176 = vshrl.u32 %v3175, 7
    %v3177 = vsub.s32 1, %v3176
    %v3178 = vrot.slane %v3169, %v3177
    %v3179 = vlaneseq
    %v3180 = vshrl.u32 %v3179, 7
    %v3181 = vsub.s32 2, %v3180
    %v3182 = vrot.slane %v3169, %v3181
    %v3183 = vlaneseq
    %v3184 = vshrl.u32 %v3183, 7
    %v3185 = vsub.s32 3, %v3184
    %v3186 = vrot.slane %v3169, %v3185
    %v3187 = vlaneseq
    %v3188 = vshrl.u32 %v3187, 7
    %v3189 = vsub.s32 4, %v3188
    %v3190 = vrot.slane %v3169, %v3189
    %v3191 = vlaneseq
    %v3192 = vshrl.u32 %v3191, 7
    %v3193 = vsub.s32 5, %v3192
    %v3194 = vrot.slane %v3169, %v3193
    %v3195 = vlaneseq
    %v3196 = vshrl.u32 %v3195, 7
    %v3197 = vsub.s32 6, %v3196
    %v3198 = vrot.slane %v3169, %v3197
    %v3199 = vlaneseq
    %v3200 = vshrl.u32 %v3199, 7
    %v3201 = vsub.s32 7, %v3200
    %v3202 = vrot.slane %v3169, %v3201
    %v3211 = vmul.f32 %v3161, %v3174
    %v3212 = vmul.f32 %v3162, %v3178
    %v3213 = vmul.f32 %v3163, %v3182
    %v3214 = vmul.f32 %v3164, %v3186
    %v3215 = vmul.f32 %v3165, %v3190
    %v3216 = vmul.f32 %v3166, %v3194
    %v3217 = vmul.f32 %v3167, %v3198
    %v3218 = vmul.f32 %v3168, %v3202
    %v3219 = vld [vmem:[#allocation20] sm:$0xff]
    %v3221 = vlaneseq
    %v3222 = vshrl.u32 %v3221, 7
    %v3223 = vsub.s32 0, %v3222
    %v3224 = vrot.slane %v3219, %v3223
    %v3225 = vlaneseq
    %v3226 = vshrl.u32 %v3225, 7
    %v3227 = vsub.s32 1, %v3226
    %v3228 = vrot.slane %v3219, %v3227
    %v3229 = vlaneseq
    %v3230 = vshrl.u32 %v3229, 7
    %v3231 = vsub.s32 2, %v3230
    %v3232 = vrot.slane %v3219, %v3231
    %v3233 = vlaneseq
    %v3234 = vshrl.u32 %v3233, 7
    %v3235 = vsub.s32 3, %v3234
    %v3236 = vrot.slane %v3219, %v3235
    %v3237 = vlaneseq
    %v3238 = vshrl.u32 %v3237, 7
    %v3239 = vsub.s32 4, %v3238
    %v3240 = vrot.slane %v3219, %v3239
    %v3241 = vlaneseq
    %v3242 = vshrl.u32 %v3241, 7
    %v3243 = vsub.s32 5, %v3242
    %v3244 = vrot.slane %v3219, %v3243
    %v3245 = vlaneseq
    %v3246 = vshrl.u32 %v3245, 7
    %v3247 = vsub.s32 6, %v3246
    %v3248 = vrot.slane %v3219, %v3247
    %v3249 = vlaneseq
    %v3250 = vshrl.u32 %v3249, 7
    %v3251 = vsub.s32 7, %v3250
    %v3252 = vrot.slane %v3219, %v3251
    %v3261 = vadd.f32 %v3211, %v3224
    %v3262 = vadd.f32 %v3212, %v3228
    %v3263 = vadd.f32 %v3213, %v3232
    %v3264 = vadd.f32 %v3214, %v3236
    %v3265 = vadd.f32 %v3215, %v3240
    %v3266 = vadd.f32 %v3216, %v3244
    %v3267 = vadd.f32 %v3217, %v3248
    %v3268 = vadd.f32 %v3218, %v3252
    %v3269 = vmul.f32 %v3261, 0.2
    %v3270 = vmul.f32 %v3262, 0.2
    %v3271 = vmul.f32 %v3263, 0.2
    %v3272 = vmul.f32 %v3264, 0.2
    %v3273 = vmul.f32 %v3265, 0.2
    %v3274 = vmul.f32 %v3266, 0.2
    %v3275 = vmul.f32 %v3267, 0.2
    %v3276 = vmul.f32 %v3268, 0.2
    %v3277 = vmax.f32 %v3261, %v3269
    %v3278 = vmax.f32 %v3262, %v3270
    %v3279 = vmax.f32 %v3263, %v3271
    %v3280 = vmax.f32 %v3264, %v3272
    %v3281 = vmax.f32 %v3265, %v3273
    %v3282 = vmax.f32 %v3266, %v3274
    %v3283 = vmax.f32 %v3267, %v3275
    %v3284 = vmax.f32 %v3268, %v3276
    %v3285 = vpack.c.bf16 %v3277, %v3277
    %v3286 = vpack.c.bf16 %v3278, %v3278
    %v3287 = vpack.c.bf16 %v3279, %v3279
    %v3288 = vpack.c.bf16 %v3280, %v3280
    %v3289 = vpack.c.bf16 %v3281, %v3281
    %v3290 = vpack.c.bf16 %v3282, %v3282
    %v3291 = vpack.c.bf16 %v3283, %v3283
    %v3292 = vpack.c.bf16 %v3284, %v3284
    %v3293 = vld [vmem:[#allocation22] sm:$0xff]
    %v3294 = vld [vmem:[#allocation22 + $0x8] sm:$0xff]
    %v3295 = vld [vmem:[#allocation22 + $0x10] sm:$0xff]
    %v3296 = vld [vmem:[#allocation22 + $0x18] sm:$0xff]
    %v3297 = vld [vmem:[#allocation22 + $0x20] sm:$0xff]
    %v3298 = vld [vmem:[#allocation22 + $0x28] sm:$0xff]
    %v3299 = vld [vmem:[#allocation22 + $0x30] sm:$0xff]
    %v3300 = vld [vmem:[#allocation22 + $0x38] sm:$0xff]
    %v3301 = vld [vmem:[#allocation22 + $0x40] sm:$0xff]
    %v3302 = vld [vmem:[#allocation22 + $0x48] sm:$0xff]
    %v3303 = vld [vmem:[#allocation22 + $0x50] sm:$0xff]
    %v3304 = vld [vmem:[#allocation22 + $0x58] sm:$0xff]
    %v3305 = vld [vmem:[#allocation22 + $0x60] sm:$0xff]
    %v3306 = vld [vmem:[#allocation22 + $0x68] sm:$0xff]
    %v3307 = vld [vmem:[#allocation22 + $0x70] sm:$0xff]
    %v3308 = vld [vmem:[#allocation22 + $0x78] sm:$0xff]
    %v3309 = vld [vmem:[#allocation22 + $0x80] sm:$0xff]
    %v3310 = vld [vmem:[#allocation22 + $0x88] sm:$0xff]
    %v3311 = vld [vmem:[#allocation22 + $0x90] sm:$0xff]
    %v3312 = vld [vmem:[#allocation22 + $0x98] sm:$0xff]
    %v3313 = vld [vmem:[#allocation22 + $0xa0] sm:$0xff]
    %v3314 = vld [vmem:[#allocation22 + $0xa8] sm:$0xff]
    %v3315 = vld [vmem:[#allocation22 + $0xb0] sm:$0xff]
    %v3316 = vld [vmem:[#allocation22 + $0xb8] sm:$0xff]
    %v3317 = vld [vmem:[#allocation22 + $0xc0] sm:$0xff]
    %v3318 = vld [vmem:[#allocation22 + $0xc8] sm:$0xff]
    %v3319 = vld [vmem:[#allocation22 + $0xd0] sm:$0xff]
    %v3320 = vld [vmem:[#allocation22 + $0xd8] sm:$0xff]
    %v3321 = vld [vmem:[#allocation22 + $0xe0] sm:$0xff]
    %v3322 = vld [vmem:[#allocation22 + $0xe8] sm:$0xff]
    %v3323 = vld [vmem:[#allocation22 + $0xf0] sm:$0xff]
    %v3324 = vld [vmem:[#allocation22 + $0xf8] sm:$0xff]
    %v3325 = vld [vmem:[#allocation22 + $0x100] sm:$0xff]
    %v3326 = vld [vmem:[#allocation22 + $0x108] sm:$0xff]
    %v3327 = vld [vmem:[#allocation22 + $0x110] sm:$0xff]
    %v3328 = vld [vmem:[#allocation22 + $0x118] sm:$0xff]
    %v3329 = vld [vmem:[#allocation22 + $0x120] sm:$0xff]
    %v3330 = vld [vmem:[#allocation22 + $0x128] sm:$0xff]
    %v3331 = vld [vmem:[#allocation22 + $0x130] sm:$0xff]
    %v3332 = vld [vmem:[#allocation22 + $0x138] sm:$0xff]
    %v3333 = vld [vmem:[#allocation22 + $0x140] sm:$0xff]
    %v3334 = vld [vmem:[#allocation22 + $0x148] sm:$0xff]
    %v3335 = vld [vmem:[#allocation22 + $0x150] sm:$0xff]
    %v3336 = vld [vmem:[#allocation22 + $0x158] sm:$0xff]
    %v3337 = vld [vmem:[#allocation22 + $0x160] sm:$0xff]
    %v3338 = vld [vmem:[#allocation22 + $0x168] sm:$0xff]
    %v3339 = vld [vmem:[#allocation22 + $0x170] sm:$0xff]
    %v3340 = vld [vmem:[#allocation22 + $0x178] sm:$0xff]
    %v3341 = vld [vmem:[#allocation22 + $0x180] sm:$0xff]
    %v3342 = vld [vmem:[#allocation22 + $0x188] sm:$0xff]
    %v3343 = vld [vmem:[#allocation22 + $0x190] sm:$0xff]
    %v3344 = vld [vmem:[#allocation22 + $0x198] sm:$0xff]
    %v3345 = vld [vmem:[#allocation22 + $0x1a0] sm:$0xff]
    %v3346 = vld [vmem:[#allocation22 + $0x1a8] sm:$0xff]
    %v3347 = vld [vmem:[#allocation22 + $0x1b0] sm:$0xff]
    %v3348 = vld [vmem:[#allocation22 + $0x1b8] sm:$0xff]
    %v3349 = vld [vmem:[#allocation22 + $0x1c0] sm:$0xff]
    %v3350 = vld [vmem:[#allocation22 + $0x1c8] sm:$0xff]
    %v3351 = vld [vmem:[#allocation22 + $0x1d0] sm:$0xff]
    %v3352 = vld [vmem:[#allocation22 + $0x1d8] sm:$0xff]
    %v3353 = vld [vmem:[#allocation22 + $0x1e0] sm:$0xff]
    %v3354 = vld [vmem:[#allocation22 + $0x1e8] sm:$0xff]
    %v3355 = vld [vmem:[#allocation22 + $0x1f0] sm:$0xff]
    %v3356 = vld [vmem:[#allocation22 + $0x1f8] sm:$0xff]
    %v3357 = vld [vmem:[#allocation22 + $0x200] sm:$0xff]
    %v3358 = vld [vmem:[#allocation22 + $0x208] sm:$0xff]
    %v3359 = vld [vmem:[#allocation22 + $0x210] sm:$0xff]
    %v3360 = vld [vmem:[#allocation22 + $0x218] sm:$0xff]
    %v3361 = vld [vmem:[#allocation22 + $0x220] sm:$0xff]
    %v3362 = vld [vmem:[#allocation22 + $0x228] sm:$0xff]
    %v3363 = vld [vmem:[#allocation22 + $0x230] sm:$0xff]
    %v3364 = vld [vmem:[#allocation22 + $0x238] sm:$0xff]
    %v3365 = vld [vmem:[#allocation22 + $0x240] sm:$0xff]
    %v3366 = vld [vmem:[#allocation22 + $0x248] sm:$0xff]
    %v3367 = vld [vmem:[#allocation22 + $0x250] sm:$0xff]
    %v3368 = vld [vmem:[#allocation22 + $0x258] sm:$0xff]
    %v3369 = vld [vmem:[#allocation22 + $0x260] sm:$0xff]
    %v3370 = vld [vmem:[#allocation22 + $0x268] sm:$0xff]
    %v3371 = vld [vmem:[#allocation22 + $0x270] sm:$0xff]
    %v3372 = vld [vmem:[#allocation22 + $0x278] sm:$0xff]
    %v3373 = vld [vmem:[#allocation22 + $0x280] sm:$0xff]
    %v3374 = vld [vmem:[#allocation22 + $0x288] sm:$0xff]
    %v3375 = vld [vmem:[#allocation22 + $0x290] sm:$0xff]
    %v3376 = vld [vmem:[#allocation22 + $0x298] sm:$0xff]
    %v3377 = vld [vmem:[#allocation22 + $0x2a0] sm:$0xff]
    %v3378 = vld [vmem:[#allocation22 + $0x2a8] sm:$0xff]
    %v3379 = vld [vmem:[#allocation22 + $0x2b0] sm:$0xff]
    %v3380 = vld [vmem:[#allocation22 + $0x2b8] sm:$0xff]
    %v3381 = vld [vmem:[#allocation22 + $0x2c0] sm:$0xff]
    %v3382 = vld [vmem:[#allocation22 + $0x2c8] sm:$0xff]
    %v3383 = vld [vmem:[#allocation22 + $0x2d0] sm:$0xff]
    %v3384 = vld [vmem:[#allocation22 + $0x2d8] sm:$0xff]
    %v3385 = vld [vmem:[#allocation22 + $0x2e0] sm:$0xff]
    %v3386 = vld [vmem:[#allocation22 + $0x2e8] sm:$0xff]
    %v3387 = vld [vmem:[#allocation22 + $0x2f0] sm:$0xff]
    %v3388 = vld [vmem:[#allocation22 + $0x2f8] sm:$0xff]
    %v3389 = vld [vmem:[#allocation22 + $0x300] sm:$0xff]
    %v3390 = vld [vmem:[#allocation22 + $0x308] sm:$0xff]
    %v3391 = vld [vmem:[#allocation22 + $0x310] sm:$0xff]
    %v3392 = vld [vmem:[#allocation22 + $0x318] sm:$0xff]
    %v3393 = vld [vmem:[#allocation22 + $0x320] sm:$0xff]
    %v3394 = vld [vmem:[#allocation22 + $0x328] sm:$0xff]
    %v3395 = vld [vmem:[#allocation22 + $0x330] sm:$0xff]
    %v3396 = vld [vmem:[#allocation22 + $0x338] sm:$0xff]
    %v3397 = vld [vmem:[#allocation22 + $0x340] sm:$0xff]
    %v3398 = vld [vmem:[#allocation22 + $0x348] sm:$0xff]
    %v3399 = vld [vmem:[#allocation22 + $0x350] sm:$0xff]
    %v3400 = vld [vmem:[#allocation22 + $0x358] sm:$0xff]
    %v3401 = vld [vmem:[#allocation22 + $0x360] sm:$0xff]
    %v3402 = vld [vmem:[#allocation22 + $0x368] sm:$0xff]
    %v3403 = vld [vmem:[#allocation22 + $0x370] sm:$0xff]
    %v3404 = vld [vmem:[#allocation22 + $0x378] sm:$0xff]
    %v3405 = vld [vmem:[#allocation22 + $0x380] sm:$0xff]
    %v3406 = vld [vmem:[#allocation22 + $0x388] sm:$0xff]
    %v3407 = vld [vmem:[#allocation22 + $0x390] sm:$0xff]
    %v3408 = vld [vmem:[#allocation22 + $0x398] sm:$0xff]
    %v3409 = vld [vmem:[#allocation22 + $0x3a0] sm:$0xff]
    %v3410 = vld [vmem:[#allocation22 + $0x3a8] sm:$0xff]
    %v3411 = vld [vmem:[#allocation22 + $0x3b0] sm:$0xff]
    %v3412 = vld [vmem:[#allocation22 + $0x3b8] sm:$0xff]
    %v3413 = vld [vmem:[#allocation22 + $0x3c0] sm:$0xff]
    %v3414 = vld [vmem:[#allocation22 + $0x3c8] sm:$0xff]
    %v3415 = vld [vmem:[#allocation22 + $0x3d0] sm:$0xff]
    %v3416 = vld [vmem:[#allocation22 + $0x3d8] sm:$0xff]
    %v3417 = vld [vmem:[#allocation22 + $0x3e0] sm:$0xff]
    %v3418 = vld [vmem:[#allocation22 + $0x3e8] sm:$0xff]
    %v3419 = vld [vmem:[#allocation22 + $0x3f0] sm:$0xff]
    %v3420 = vld [vmem:[#allocation22 + $0x3f8] sm:$0xff]
    %v3421 = vld [vmem:[#allocation22 + $0x400] sm:$0xff]
    %v3422 = vld [vmem:[#allocation22 + $0x408] sm:$0xff]
    %v3423 = vld [vmem:[#allocation22 + $0x410] sm:$0xff]
    %v3424 = vld [vmem:[#allocation22 + $0x418] sm:$0xff]
    %v3425 = vld [vmem:[#allocation22 + $0x420] sm:$0xff]
    %v3426 = vld [vmem:[#allocation22 + $0x428] sm:$0xff]
    %v3427 = vld [vmem:[#allocation22 + $0x430] sm:$0xff]
    %v3428 = vld [vmem:[#allocation22 + $0x438] sm:$0xff]
    %v3429 = vld [vmem:[#allocation22 + $0x440] sm:$0xff]
    %v3430 = vld [vmem:[#allocation22 + $0x448] sm:$0xff]
    %v3431 = vld [vmem:[#allocation22 + $0x450] sm:$0xff]
    %v3432 = vld [vmem:[#allocation22 + $0x458] sm:$0xff]
    %v3433 = vld [vmem:[#allocation22 + $0x460] sm:$0xff]
    %v3434 = vld [vmem:[#allocation22 + $0x468] sm:$0xff]
    %v3435 = vld [vmem:[#allocation22 + $0x470] sm:$0xff]
    %v3436 = vld [vmem:[#allocation22 + $0x478] sm:$0xff]
    %v3437 = vld [vmem:[#allocation22 + $0x480] sm:$0xff]
    %v3438 = vld [vmem:[#allocation22 + $0x488] sm:$0xff]
    %v3439 = vld [vmem:[#allocation22 + $0x490] sm:$0xff]
    %v3440 = vld [vmem:[#allocation22 + $0x498] sm:$0xff]
    %v3441 = vld [vmem:[#allocation22 + $0x4a0] sm:$0xff]
    %v3442 = vld [vmem:[#allocation22 + $0x4a8] sm:$0xff]
    %v3443 = vld [vmem:[#allocation22 + $0x4b0] sm:$0xff]
    %v3444 = vld [vmem:[#allocation22 + $0x4b8] sm:$0xff]
    %v3445 = vld [vmem:[#allocation22 + $0x4c0] sm:$0xff]
    %v3446 = vld [vmem:[#allocation22 + $0x4c8] sm:$0xff]
    %v3447 = vld [vmem:[#allocation22 + $0x4d0] sm:$0xff]
    %v3448 = vld [vmem:[#allocation22 + $0x4d8] sm:$0xff]
    %v3449 = vld [vmem:[#allocation22 + $0x4e0] sm:$0xff]
    %v3450 = vld [vmem:[#allocation22 + $0x4e8] sm:$0xff]
    %v3451 = vld [vmem:[#allocation22 + $0x4f0] sm:$0xff]
    %v3452 = vld [vmem:[#allocation22 + $0x4f8] sm:$0xff]
    %v3453 = vld [vmem:[#allocation22 + $0x500] sm:$0xff]
    %v3454 = vld [vmem:[#allocation22 + $0x508] sm:$0xff]
    %v3455 = vld [vmem:[#allocation22 + $0x510] sm:$0xff]
    %v3456 = vld [vmem:[#allocation22 + $0x518] sm:$0xff]
    %v3457 = vld [vmem:[#allocation22 + $0x520] sm:$0xff]
    %v3458 = vld [vmem:[#allocation22 + $0x528] sm:$0xff]
    %v3459 = vld [vmem:[#allocation22 + $0x530] sm:$0xff]
    %v3460 = vld [vmem:[#allocation22 + $0x538] sm:$0xff]
    %v3461 = vld [vmem:[#allocation22 + $0x540] sm:$0xff]
    %v3462 = vld [vmem:[#allocation22 + $0x548] sm:$0xff]
    %v3463 = vld [vmem:[#allocation22 + $0x550] sm:$0xff]
    %v3464 = vld [vmem:[#allocation22 + $0x558] sm:$0xff]
    %v3465 = vld [vmem:[#allocation22 + $0x560] sm:$0xff]
    %v3466 = vld [vmem:[#allocation22 + $0x568] sm:$0xff]
    %v3467 = vld [vmem:[#allocation22 + $0x570] sm:$0xff]
    %v3468 = vld [vmem:[#allocation22 + $0x578] sm:$0xff]
    %v3469 = vld [vmem:[#allocation22 + $0x580] sm:$0xff]
    %v3470 = vld [vmem:[#allocation22 + $0x588] sm:$0xff]
    %v3471 = vld [vmem:[#allocation22 + $0x590] sm:$0xff]
    %v3472 = vld [vmem:[#allocation22 + $0x598] sm:$0xff]
    %v3473 = vld [vmem:[#allocation22 + $0x5a0] sm:$0xff]
    %v3474 = vld [vmem:[#allocation22 + $0x5a8] sm:$0xff]
    %v3475 = vld [vmem:[#allocation22 + $0x5b0] sm:$0xff]
    %v3476 = vld [vmem:[#allocation22 + $0x5b8] sm:$0xff]
    %v3477 = vld [vmem:[#allocation22 + $0x5c0] sm:$0xff]
    %v3478 = vld [vmem:[#allocation22 + $0x5c8] sm:$0xff]
    %v3479 = vld [vmem:[#allocation22 + $0x5d0] sm:$0xff]
    %v3480 = vld [vmem:[#allocation22 + $0x5d8] sm:$0xff]
    %v3481 = vld [vmem:[#allocation22 + $0x5e0] sm:$0xff]
    %v3482 = vld [vmem:[#allocation22 + $0x5e8] sm:$0xff]
    %v3483 = vld [vmem:[#allocation22 + $0x5f0] sm:$0xff]
    %v3484 = vld [vmem:[#allocation22 + $0x5f8] sm:$0xff]
    %v3485 = vld [vmem:[#allocation22 + $0x600] sm:$0xff]
    %v3486 = vld [vmem:[#allocation22 + $0x608] sm:$0xff]
    %v3487 = vld [vmem:[#allocation22 + $0x610] sm:$0xff]
    %v3488 = vld [vmem:[#allocation22 + $0x618] sm:$0xff]
    %v3489 = vld [vmem:[#allocation22 + $0x620] sm:$0xff]
    %v3490 = vld [vmem:[#allocation22 + $0x628] sm:$0xff]
    %v3491 = vld [vmem:[#allocation22 + $0x630] sm:$0xff]
    %v3492 = vld [vmem:[#allocation22 + $0x638] sm:$0xff]
    %v3493 = vld [vmem:[#allocation22 + $0x640] sm:$0xff]
    %v3494 = vld [vmem:[#allocation22 + $0x648] sm:$0xff]
    %v3495 = vld [vmem:[#allocation22 + $0x650] sm:$0xff]
    %v3496 = vld [vmem:[#allocation22 + $0x658] sm:$0xff]
    %v3497 = vld [vmem:[#allocation22 + $0x660] sm:$0xff]
    %v3498 = vld [vmem:[#allocation22 + $0x668] sm:$0xff]
    %v3499 = vld [vmem:[#allocation22 + $0x670] sm:$0xff]
    %v3500 = vld [vmem:[#allocation22 + $0x678] sm:$0xff]
    %v3501 = vld [vmem:[#allocation22 + $0x680] sm:$0xff]
    %v3502 = vld [vmem:[#allocation22 + $0x688] sm:$0xff]
    %v3503 = vld [vmem:[#allocation22 + $0x690] sm:$0xff]
    %v3504 = vld [vmem:[#allocation22 + $0x698] sm:$0xff]
    %v3505 = vld [vmem:[#allocation22 + $0x6a0] sm:$0xff]
    %v3506 = vld [vmem:[#allocation22 + $0x6a8] sm:$0xff]
    %v3507 = vld [vmem:[#allocation22 + $0x6b0] sm:$0xff]
    %v3508 = vld [vmem:[#allocation22 + $0x6b8] sm:$0xff]
    %v3509 = vld [vmem:[#allocation22 + $0x6c0] sm:$0xff]
    %v3510 = vld [vmem:[#allocation22 + $0x6c8] sm:$0xff]
    %v3511 = vld [vmem:[#allocation22 + $0x6d0] sm:$0xff]
    %v3512 = vld [vmem:[#allocation22 + $0x6d8] sm:$0xff]
    %v3513 = vld [vmem:[#allocation22 + $0x6e0] sm:$0xff]
    %v3514 = vld [vmem:[#allocation22 + $0x6e8] sm:$0xff]
    %v3515 = vld [vmem:[#allocation22 + $0x6f0] sm:$0xff]
    %v3516 = vld [vmem:[#allocation22 + $0x6f8] sm:$0xff]
    %v3517 = vld [vmem:[#allocation22 + $0x700] sm:$0xff]
    %v3518 = vld [vmem:[#allocation22 + $0x708] sm:$0xff]
    %v3519 = vld [vmem:[#allocation22 + $0x710] sm:$0xff]
    %v3520 = vld [vmem:[#allocation22 + $0x718] sm:$0xff]
    %v3521 = vld [vmem:[#allocation22 + $0x720] sm:$0xff]
    %v3522 = vld [vmem:[#allocation22 + $0x728] sm:$0xff]
    %v3523 = vld [vmem:[#allocation22 + $0x730] sm:$0xff]
    %v3524 = vld [vmem:[#allocation22 + $0x738] sm:$0xff]
    %v3525 = vld [vmem:[#allocation22 + $0x740] sm:$0xff]
    %v3526 = vld [vmem:[#allocation22 + $0x748] sm:$0xff]
    %v3527 = vld [vmem:[#allocation22 + $0x750] sm:$0xff]
    %v3528 = vld [vmem:[#allocation22 + $0x758] sm:$0xff]
    %v3529 = vld [vmem:[#allocation22 + $0x760] sm:$0xff]
    %v3530 = vld [vmem:[#allocation22 + $0x768] sm:$0xff]
    %v3531 = vld [vmem:[#allocation22 + $0x770] sm:$0xff]
    %v3532 = vld [vmem:[#allocation22 + $0x778] sm:$0xff]
    %v3533 = vld [vmem:[#allocation22 + $0x780] sm:$0xff]
    %v3534 = vld [vmem:[#allocation22 + $0x788] sm:$0xff]
    %v3535 = vld [vmem:[#allocation22 + $0x790] sm:$0xff]
    %v3536 = vld [vmem:[#allocation22 + $0x798] sm:$0xff]
    %v3537 = vld [vmem:[#allocation22 + $0x7a0] sm:$0xff]
    %v3538 = vld [vmem:[#allocation22 + $0x7a8] sm:$0xff]
    %v3539 = vld [vmem:[#allocation22 + $0x7b0] sm:$0xff]
    %v3540 = vld [vmem:[#allocation22 + $0x7b8] sm:$0xff]
    %v3541 = vld [vmem:[#allocation22 + $0x7c0] sm:$0xff]
    %v3542 = vld [vmem:[#allocation22 + $0x7c8] sm:$0xff]
    %v3543 = vld [vmem:[#allocation22 + $0x7d0] sm:$0xff]
    %v3544 = vld [vmem:[#allocation22 + $0x7d8] sm:$0xff]
    %v3545 = vld [vmem:[#allocation22 + $0x7e0] sm:$0xff]
    %v3546 = vld [vmem:[#allocation22 + $0x7e8] sm:$0xff]
    %v3547 = vld [vmem:[#allocation22 + $0x7f0] sm:$0xff]
    %v3548 = vld [vmem:[#allocation22 + $0x7f8] sm:$0xff]
    %v3549 = vld [vmem:[#allocation22 + $0x800] sm:$0xff]
    %v3550 = vld [vmem:[#allocation22 + $0x808] sm:$0xff]
    %v3551 = vld [vmem:[#allocation22 + $0x810] sm:$0xff]
    %v3552 = vld [vmem:[#allocation22 + $0x818] sm:$0xff]
    %v3553 = vld [vmem:[#allocation22 + $0x820] sm:$0xff]
    %v3554 = vld [vmem:[#allocation22 + $0x828] sm:$0xff]
    %v3555 = vld [vmem:[#allocation22 + $0x830] sm:$0xff]
    %v3556 = vld [vmem:[#allocation22 + $0x838] sm:$0xff]
    %v3557 = vld [vmem:[#allocation22 + $0x840] sm:$0xff]
    %v3558 = vld [vmem:[#allocation22 + $0x848] sm:$0xff]
    %v3559 = vld [vmem:[#allocation22 + $0x850] sm:$0xff]
    %v3560 = vld [vmem:[#allocation22 + $0x858] sm:$0xff]
    %v3561 = vld [vmem:[#allocation22 + $0x860] sm:$0xff]
    %v3562 = vld [vmem:[#allocation22 + $0x868] sm:$0xff]
    %v3563 = vld [vmem:[#allocation22 + $0x870] sm:$0xff]
    %v3564 = vld [vmem:[#allocation22 + $0x878] sm:$0xff]
    %v3565 = vld [vmem:[#allocation22 + $0x880] sm:$0xff]
    %v3566 = vld [vmem:[#allocation22 + $0x888] sm:$0xff]
    %v3567 = vld [vmem:[#allocation22 + $0x890] sm:$0xff]
    %v3568 = vld [vmem:[#allocation22 + $0x898] sm:$0xff]
    %v3569 = vld [vmem:[#allocation22 + $0x8a0] sm:$0xff]
    %v3570 = vld [vmem:[#allocation22 + $0x8a8] sm:$0xff]
    %v3571 = vld [vmem:[#allocation22 + $0x8b0] sm:$0xff]
    %v3572 = vld [vmem:[#allocation22 + $0x8b8] sm:$0xff]
    %v3573 = vld [vmem:[#allocation22 + $0x8c0] sm:$0xff]
    %v3574 = vld [vmem:[#allocation22 + $0x8c8] sm:$0xff]
    %v3575 = vld [vmem:[#allocation22 + $0x8d0] sm:$0xff]
    %v3576 = vld [vmem:[#allocation22 + $0x8d8] sm:$0xff]
    %v3577 = vld [vmem:[#allocation22 + $0x8e0] sm:$0xff]
    %v3578 = vld [vmem:[#allocation22 + $0x8e8] sm:$0xff]
    %v3579 = vld [vmem:[#allocation22 + $0x8f0] sm:$0xff]
    %v3580 = vld [vmem:[#allocation22 + $0x8f8] sm:$0xff]
    %v3581 = vld [vmem:[#allocation22 + $0x900] sm:$0xff]
    %v3582 = vld [vmem:[#allocation22 + $0x908] sm:$0xff]
    %v3583 = vld [vmem:[#allocation22 + $0x910] sm:$0xff]
    %v3584 = vld [vmem:[#allocation22 + $0x918] sm:$0xff]
    %v3585 = vld [vmem:[#allocation22 + $0x920] sm:$0xff]
    %v3586 = vld [vmem:[#allocation22 + $0x928] sm:$0xff]
    %v3587 = vld [vmem:[#allocation22 + $0x930] sm:$0xff]
    %v3588 = vld [vmem:[#allocation22 + $0x938] sm:$0xff]
    %v3589 = vld [vmem:[#allocation22 + $0x940] sm:$0xff]
    %v3590 = vld [vmem:[#allocation22 + $0x948] sm:$0xff]
    %v3591 = vld [vmem:[#allocation22 + $0x950] sm:$0xff]
    %v3592 = vld [vmem:[#allocation22 + $0x958] sm:$0xff]
    %v3593 = vld [vmem:[#allocation22 + $0x960] sm:$0xff]
    %v3594 = vld [vmem:[#allocation22 + $0x968] sm:$0xff]
    %v3595 = vld [vmem:[#allocation22 + $0x970] sm:$0xff]
    %v3596 = vld [vmem:[#allocation22 + $0x978] sm:$0xff]
    %v3597 = vld [vmem:[#allocation22 + $0x980] sm:$0xff]
    %v3598 = vld [vmem:[#allocation22 + $0x988] sm:$0xff]
    %v3599 = vld [vmem:[#allocation22 + $0x990] sm:$0xff]
    %v3600 = vld [vmem:[#allocation22 + $0x998] sm:$0xff]
    %v3601 = vld [vmem:[#allocation22 + $0x9a0] sm:$0xff]
    %v3602 = vld [vmem:[#allocation22 + $0x9a8] sm:$0xff]
    %v3603 = vld [vmem:[#allocation22 + $0x9b0] sm:$0xff]
    %v3604 = vld [vmem:[#allocation22 + $0x9b8] sm:$0xff]
    %v3605 = vld [vmem:[#allocation22 + $0x9c0] sm:$0xff]
    %v3606 = vld [vmem:[#allocation22 + $0x9c8] sm:$0xff]
    %v3607 = vld [vmem:[#allocation22 + $0x9d0] sm:$0xff]
    %v3608 = vld [vmem:[#allocation22 + $0x9d8] sm:$0xff]
    %v3609 = vld [vmem:[#allocation22 + $0x9e0] sm:$0xff]
    %v3610 = vld [vmem:[#allocation22 + $0x9e8] sm:$0xff]
    %v3611 = vld [vmem:[#allocation22 + $0x9f0] sm:$0xff]
    %v3612 = vld [vmem:[#allocation22 + $0x9f8] sm:$0xff]
    %v3613 = vld [vmem:[#allocation22 + $0xa00] sm:$0xff]
    %v3614 = vld [vmem:[#allocation22 + $0xa08] sm:$0xff]
    %v3615 = vld [vmem:[#allocation22 + $0xa10] sm:$0xff]
    %v3616 = vld [vmem:[#allocation22 + $0xa18] sm:$0xff]
    %v3617 = vld [vmem:[#allocation22 + $0xa20] sm:$0xff]
    %v3618 = vld [vmem:[#allocation22 + $0xa28] sm:$0xff]
    %v3619 = vld [vmem:[#allocation22 + $0xa30] sm:$0xff]
    %v3620 = vld [vmem:[#allocation22 + $0xa38] sm:$0xff]
    %v3621 = vld [vmem:[#allocation22 + $0xa40] sm:$0xff]
    %v3622 = vld [vmem:[#allocation22 + $0xa48] sm:$0xff]
    %v3623 = vld [vmem:[#allocation22 + $0xa50] sm:$0xff]
    %v3624 = vld [vmem:[#allocation22 + $0xa58] sm:$0xff]
    %v3625 = vld [vmem:[#allocation22 + $0xa60] sm:$0xff]
    %v3626 = vld [vmem:[#allocation22 + $0xa68] sm:$0xff]
    %v3627 = vld [vmem:[#allocation22 + $0xa70] sm:$0xff]
    %v3628 = vld [vmem:[#allocation22 + $0xa78] sm:$0xff]
    %v3629 = vld [vmem:[#allocation22 + $0xa80] sm:$0xff]
    %v3630 = vld [vmem:[#allocation22 + $0xa88] sm:$0xff]
    %v3631 = vld [vmem:[#allocation22 + $0xa90] sm:$0xff]
    %v3632 = vld [vmem:[#allocation22 + $0xa98] sm:$0xff]
    %v3633 = vld [vmem:[#allocation22 + $0xaa0] sm:$0xff]
    %v3634 = vld [vmem:[#allocation22 + $0xaa8] sm:$0xff]
    %v3635 = vld [vmem:[#allocation22 + $0xab0] sm:$0xff]
    %v3636 = vld [vmem:[#allocation22 + $0xab8] sm:$0xff]
    %v3637 = vld [vmem:[#allocation22 + $0xac0] sm:$0xff]
    %v3638 = vld [vmem:[#allocation22 + $0xac8] sm:$0xff]
    %v3639 = vld [vmem:[#allocation22 + $0xad0] sm:$0xff]
    %v3640 = vld [vmem:[#allocation22 + $0xad8] sm:$0xff]
    %v3641 = vld [vmem:[#allocation22 + $0xae0] sm:$0xff]
    %v3642 = vld [vmem:[#allocation22 + $0xae8] sm:$0xff]
    %v3643 = vld [vmem:[#allocation22 + $0xaf0] sm:$0xff]
    %v3644 = vld [vmem:[#allocation22 + $0xaf8] sm:$0xff]
    %v3645 = vld [vmem:[#allocation22 + $0xb00] sm:$0xff]
    %v3646 = vld [vmem:[#allocation22 + $0xb08] sm:$0xff]
    %v3647 = vld [vmem:[#allocation22 + $0xb10] sm:$0xff]
    %v3648 = vld [vmem:[#allocation22 + $0xb18] sm:$0xff]
    %v3649 = vld [vmem:[#allocation22 + $0xb20] sm:$0xff]
    %v3650 = vld [vmem:[#allocation22 + $0xb28] sm:$0xff]
    %v3651 = vld [vmem:[#allocation22 + $0xb30] sm:$0xff]
    %v3652 = vld [vmem:[#allocation22 + $0xb38] sm:$0xff]
    %v3653 = vld [vmem:[#allocation22 + $0xb40] sm:$0xff]
    %v3654 = vld [vmem:[#allocation22 + $0xb48] sm:$0xff]
    %v3655 = vld [vmem:[#allocation22 + $0xb50] sm:$0xff]
    %v3656 = vld [vmem:[#allocation22 + $0xb58] sm:$0xff]
    %v3657 = vld [vmem:[#allocation22 + $0xb60] sm:$0xff]
    %v3658 = vld [vmem:[#allocation22 + $0xb68] sm:$0xff]
    %v3659 = vld [vmem:[#allocation22 + $0xb70] sm:$0xff]
    %v3660 = vld [vmem:[#allocation22 + $0xb78] sm:$0xff]
    %v3661 = vld [vmem:[#allocation22 + $0xb80] sm:$0xff]
    %v3662 = vld [vmem:[#allocation22 + $0xb88] sm:$0xff]
    %v3663 = vld [vmem:[#allocation22 + $0xb90] sm:$0xff]
    %v3664 = vld [vmem:[#allocation22 + $0xb98] sm:$0xff]
    %v3665 = vld [vmem:[#allocation22 + $0xba0] sm:$0xff]
    %v3666 = vld [vmem:[#allocation22 + $0xba8] sm:$0xff]
    %v3667 = vld [vmem:[#allocation22 + $0xbb0] sm:$0xff]
    %v3668 = vld [vmem:[#allocation22 + $0xbb8] sm:$0xff]
    %v3669 = vld [vmem:[#allocation22 + $0xbc0] sm:$0xff]
    %v3670 = vld [vmem:[#allocation22 + $0xbc8] sm:$0xff]
    %v3671 = vld [vmem:[#allocation22 + $0xbd0] sm:$0xff]
    %v3672 = vld [vmem:[#allocation22 + $0xbd8] sm:$0xff]
    %v3673 = vld [vmem:[#allocation22 + $0xbe0] sm:$0xff]
    %v3674 = vld [vmem:[#allocation22 + $0xbe8] sm:$0xff]
    %v3675 = vld [vmem:[#allocation22 + $0xbf0] sm:$0xff]
    %v3676 = vld [vmem:[#allocation22 + $0xbf8] sm:$0xff]
    %v3677 = vld [vmem:[#allocation22 + $0xc00] sm:$0xff]
    %v3678 = vld [vmem:[#allocation22 + $0xc08] sm:$0xff]
    %v3679 = vld [vmem:[#allocation22 + $0xc10] sm:$0xff]
    %v3680 = vld [vmem:[#allocation22 + $0xc18] sm:$0xff]
    %v3681 = vld [vmem:[#allocation22 + $0xc20] sm:$0xff]
    %v3682 = vld [vmem:[#allocation22 + $0xc28] sm:$0xff]
    %v3683 = vld [vmem:[#allocation22 + $0xc30] sm:$0xff]
    %v3684 = vld [vmem:[#allocation22 + $0xc38] sm:$0xff]
    %v3685 = vld [vmem:[#allocation22 + $0xc40] sm:$0xff]
    %v3686 = vld [vmem:[#allocation22 + $0xc48] sm:$0xff]
    %v3687 = vld [vmem:[#allocation22 + $0xc50] sm:$0xff]
    %v3688 = vld [vmem:[#allocation22 + $0xc58] sm:$0xff]
    %v3689 = vld [vmem:[#allocation22 + $0xc60] sm:$0xff]
    %v3690 = vld [vmem:[#allocation22 + $0xc68] sm:$0xff]
    %v3691 = vld [vmem:[#allocation22 + $0xc70] sm:$0xff]
    %v3692 = vld [vmem:[#allocation22 + $0xc78] sm:$0xff]
    %v3693 = vld [vmem:[#allocation22 + $0xc80] sm:$0xff]
    %v3694 = vld [vmem:[#allocation22 + $0xc88] sm:$0xff]
    %v3695 = vld [vmem:[#allocation22 + $0xc90] sm:$0xff]
    %v3696 = vld [vmem:[#allocation22 + $0xc98] sm:$0xff]
    %v3697 = vld [vmem:[#allocation22 + $0xca0] sm:$0xff]
    %v3698 = vld [vmem:[#allocation22 + $0xca8] sm:$0xff]
    %v3699 = vld [vmem:[#allocation22 + $0xcb0] sm:$0xff]
    %v3700 = vld [vmem:[#allocation22 + $0xcb8] sm:$0xff]
    %v3701 = vld [vmem:[#allocation22 + $0xcc0] sm:$0xff]
    %v3702 = vld [vmem:[#allocation22 + $0xcc8] sm:$0xff]
    %v3703 = vld [vmem:[#allocation22 + $0xcd0] sm:$0xff]
    %v3704 = vld [vmem:[#allocation22 + $0xcd8] sm:$0xff]
    %v3705 = vld [vmem:[#allocation22 + $0xce0] sm:$0xff]
    %v3706 = vld [vmem:[#allocation22 + $0xce8] sm:$0xff]
    %v3707 = vld [vmem:[#allocation22 + $0xcf0] sm:$0xff]
    %v3708 = vld [vmem:[#allocation22 + $0xcf8] sm:$0xff]
    %v3709 = vld [vmem:[#allocation22 + $0xd00] sm:$0xff]
    %v3710 = vld [vmem:[#allocation22 + $0xd08] sm:$0xff]
    %v3711 = vld [vmem:[#allocation22 + $0xd10] sm:$0xff]
    %v3712 = vld [vmem:[#allocation22 + $0xd18] sm:$0xff]
    %v3713 = vld [vmem:[#allocation22 + $0xd20] sm:$0xff]
    %v3714 = vld [vmem:[#allocation22 + $0xd28] sm:$0xff]
    %v3715 = vld [vmem:[#allocation22 + $0xd30] sm:$0xff]
    %v3716 = vld [vmem:[#allocation22 + $0xd38] sm:$0xff]
    %v3717 = vld [vmem:[#allocation22 + $0xd40] sm:$0xff]
    %v3718 = vld [vmem:[#allocation22 + $0xd48] sm:$0xff]
    %v3719 = vld [vmem:[#allocation22 + $0xd50] sm:$0xff]
    %v3720 = vld [vmem:[#allocation22 + $0xd58] sm:$0xff]
    %v3721 = vld [vmem:[#allocation22 + $0xd60] sm:$0xff]
    %v3722 = vld [vmem:[#allocation22 + $0xd68] sm:$0xff]
    %v3723 = vld [vmem:[#allocation22 + $0xd70] sm:$0xff]
    %v3724 = vld [vmem:[#allocation22 + $0xd78] sm:$0xff]
    %v3725 = vld [vmem:[#allocation22 + $0xd80] sm:$0xff]
    %v3726 = vld [vmem:[#allocation22 + $0xd88] sm:$0xff]
    %v3727 = vld [vmem:[#allocation22 + $0xd90] sm:$0xff]
    %v3728 = vld [vmem:[#allocation22 + $0xd98] sm:$0xff]
    %v3729 = vld [vmem:[#allocation22 + $0xda0] sm:$0xff]
    %v3730 = vld [vmem:[#allocation22 + $0xda8] sm:$0xff]
    %v3731 = vld [vmem:[#allocation22 + $0xdb0] sm:$0xff]
    %v3732 = vld [vmem:[#allocation22 + $0xdb8] sm:$0xff]
    %v3733 = vld [vmem:[#allocation22 + $0xdc0] sm:$0xff]
    %v3734 = vld [vmem:[#allocation22 + $0xdc8] sm:$0xff]
    %v3735 = vld [vmem:[#allocation22 + $0xdd0] sm:$0xff]
    %v3736 = vld [vmem:[#allocation22 + $0xdd8] sm:$0xff]
    %v3737 = vld [vmem:[#allocation22 + $0xde0] sm:$0xff]
    %v3738 = vld [vmem:[#allocation22 + $0xde8] sm:$0xff]
    %v3739 = vld [vmem:[#allocation22 + $0xdf0] sm:$0xff]
    %v3740 = vld [vmem:[#allocation22 + $0xdf8] sm:$0xff]
    %v3741 = vld [vmem:[#allocation22 + $0xe00] sm:$0xff]
    %v3742 = vld [vmem:[#allocation22 + $0xe08] sm:$0xff]
    %v3743 = vld [vmem:[#allocation22 + $0xe10] sm:$0xff]
    %v3744 = vld [vmem:[#allocation22 + $0xe18] sm:$0xff]
    %v3745 = vld [vmem:[#allocation22 + $0xe20] sm:$0xff]
    %v3746 = vld [vmem:[#allocation22 + $0xe28] sm:$0xff]
    %v3747 = vld [vmem:[#allocation22 + $0xe30] sm:$0xff]
    %v3748 = vld [vmem:[#allocation22 + $0xe38] sm:$0xff]
    %v3749 = vld [vmem:[#allocation22 + $0xe40] sm:$0xff]
    %v3750 = vld [vmem:[#allocation22 + $0xe48] sm:$0xff]
    %v3751 = vld [vmem:[#allocation22 + $0xe50] sm:$0xff]
    %v3752 = vld [vmem:[#allocation22 + $0xe58] sm:$0xff]
    %v3753 = vld [vmem:[#allocation22 + $0xe60] sm:$0xff]
    %v3754 = vld [vmem:[#allocation22 + $0xe68] sm:$0xff]
    %v3755 = vld [vmem:[#allocation22 + $0xe70] sm:$0xff]
    %v3756 = vld [vmem:[#allocation22 + $0xe78] sm:$0xff]
    %v3757 = vld [vmem:[#allocation22 + $0xe80] sm:$0xff]
    %v3758 = vld [vmem:[#allocation22 + $0xe88] sm:$0xff]
    %v3759 = vld [vmem:[#allocation22 + $0xe90] sm:$0xff]
    %v3760 = vld [vmem:[#allocation22 + $0xe98] sm:$0xff]
    %v3761 = vld [vmem:[#allocation22 + $0xea0] sm:$0xff]
    %v3762 = vld [vmem:[#allocation22 + $0xea8] sm:$0xff]
    %v3763 = vld [vmem:[#allocation22 + $0xeb0] sm:$0xff]
    %v3764 = vld [vmem:[#allocation22 + $0xeb8] sm:$0xff]
    %v3765 = vld [vmem:[#allocation22 + $0xec0] sm:$0xff]
    %v3766 = vld [vmem:[#allocation22 + $0xec8] sm:$0xff]
    %v3767 = vld [vmem:[#allocation22 + $0xed0] sm:$0xff]
    %v3768 = vld [vmem:[#allocation22 + $0xed8] sm:$0xff]
    %v3769 = vld [vmem:[#allocation22 + $0xee0] sm:$0xff]
    %v3770 = vld [vmem:[#allocation22 + $0xee8] sm:$0xff]
    %v3771 = vld [vmem:[#allocation22 + $0xef0] sm:$0xff]
    %v3772 = vld [vmem:[#allocation22 + $0xef8] sm:$0xff]
    %v3773 = vld [vmem:[#allocation22 + $0xf00] sm:$0xff]
    %v3774 = vld [vmem:[#allocation22 + $0xf08] sm:$0xff]
    %v3775 = vld [vmem:[#allocation22 + $0xf10] sm:$0xff]
    %v3776 = vld [vmem:[#allocation22 + $0xf18] sm:$0xff]
    %v3777 = vld [vmem:[#allocation22 + $0xf20] sm:$0xff]
    %v3778 = vld [vmem:[#allocation22 + $0xf28] sm:$0xff]
    %v3779 = vld [vmem:[#allocation22 + $0xf30] sm:$0xff]
    %v3780 = vld [vmem:[#allocation22 + $0xf38] sm:$0xff]
    %v3781 = vld [vmem:[#allocation22 + $0xf40] sm:$0xff]
    %v3782 = vld [vmem:[#allocation22 + $0xf48] sm:$0xff]
    %v3783 = vld [vmem:[#allocation22 + $0xf50] sm:$0xff]
    %v3784 = vld [vmem:[#allocation22 + $0xf58] sm:$0xff]
    %v3785 = vld [vmem:[#allocation22 + $0xf60] sm:$0xff]
    %v3786 = vld [vmem:[#allocation22 + $0xf68] sm:$0xff]
    %v3787 = vld [vmem:[#allocation22 + $0xf70] sm:$0xff]
    %v3788 = vld [vmem:[#allocation22 + $0xf78] sm:$0xff]
    %v3789 = vld [vmem:[#allocation22 + $0xf80] sm:$0xff]
    %v3790 = vld [vmem:[#allocation22 + $0xf88] sm:$0xff]
    %v3791 = vld [vmem:[#allocation22 + $0xf90] sm:$0xff]
    %v3792 = vld [vmem:[#allocation22 + $0xf98] sm:$0xff]
    %v3793 = vld [vmem:[#allocation22 + $0xfa0] sm:$0xff]
    %v3794 = vld [vmem:[#allocation22 + $0xfa8] sm:$0xff]
    %v3795 = vld [vmem:[#allocation22 + $0xfb0] sm:$0xff]
    %v3796 = vld [vmem:[#allocation22 + $0xfb8] sm:$0xff]
    %v3797 = vld [vmem:[#allocation22 + $0xfc0] sm:$0xff]
    %v3798 = vld [vmem:[#allocation22 + $0xfc8] sm:$0xff]
    %v3799 = vld [vmem:[#allocation22 + $0xfd0] sm:$0xff]
    %v3800 = vld [vmem:[#allocation22 + $0xfd8] sm:$0xff]
    %v3801 = vld [vmem:[#allocation22 + $0xfe0] sm:$0xff]
    %v3802 = vld [vmem:[#allocation22 + $0xfe8] sm:$0xff]
    %v3803 = vld [vmem:[#allocation22 + $0xff0] sm:$0xff]
    %v3804 = vld [vmem:[#allocation22 + $0xff8] sm:$0xff]
    %v3805 = vld [vmem:[#allocation23] sm:$0xff]
    %v3807 = vlaneseq
    %v3808 = vshrl.u32 %v3807, 7
    %v3809 = vsub.s32 0, %v3808
    %v3810 = vrot.slane %v3805, %v3809
    %v3811 = vlaneseq
    %v3812 = vshrl.u32 %v3811, 7
    %v3813 = vsub.s32 1, %v3812
    %v3814 = vrot.slane %v3805, %v3813
    %v3815 = vlaneseq
    %v3816 = vshrl.u32 %v3815, 7
    %v3817 = vsub.s32 2, %v3816
    %v3818 = vrot.slane %v3805, %v3817
    %v3819 = vlaneseq
    %v3820 = vshrl.u32 %v3819, 7
    %v3821 = vsub.s32 3, %v3820
    %v3822 = vrot.slane %v3805, %v3821
    %v3823 = vlaneseq
    %v3824 = vshrl.u32 %v3823, 7
    %v3825 = vsub.s32 4, %v3824
    %v3826 = vrot.slane %v3805, %v3825
    %v3827 = vlaneseq
    %v3828 = vshrl.u32 %v3827, 7
    %v3829 = vsub.s32 5, %v3828
    %v3830 = vrot.slane %v3805, %v3829
    %v3831 = vlaneseq
    %v3832 = vshrl.u32 %v3831, 7
    %v3833 = vsub.s32 6, %v3832
    %v3834 = vrot.slane %v3805, %v3833
    %v3835 = vlaneseq
    %v3836 = vshrl.u32 %v3835, 7
    %v3837 = vsub.s32 7, %v3836
    %v3838 = vrot.slane %v3805, %v3837
    %v4359 = vunpack.c.l.b16 %v3293
    %v4360 = vunpack.c.h.b16 %v3293
    %v4361 = vunpack.c.l.b16 %v3294
    %v4362 = vunpack.c.h.b16 %v3294
    %v4363 = vunpack.c.l.b16 %v3295
    %v4364 = vunpack.c.h.b16 %v3295
    %v4365 = vunpack.c.l.b16 %v3296
    %v4366 = vunpack.c.h.b16 %v3296
    %v4367 = vunpack.c.l.b16 %v3297
    %v4368 = vunpack.c.h.b16 %v3297
    %v4369 = vunpack.c.l.b16 %v3298
    %v4370 = vunpack.c.h.b16 %v3298
    %v4371 = vunpack.c.l.b16 %v3299
    %v4372 = vunpack.c.h.b16 %v3299
    %v4373 = vunpack.c.l.b16 %v3300
    %v4374 = vunpack.c.h.b16 %v3300
    %v4375 = vunpack.c.l.b16 %v3301
    %v4376 = vunpack.c.h.b16 %v3301
    %v4377 = vunpack.c.l.b16 %v3302
    %v4378 = vunpack.c.h.b16 %v3302
    %v4379 = vunpack.c.l.b16 %v3303
    %v4380 = vunpack.c.h.b16 %v3303
    %v4381 = vunpack.c.l.b16 %v3304
    %v4382 = vunpack.c.h.b16 %v3304
    %v4383 = vunpack.c.l.b16 %v3305
    %v4384 = vunpack.c.h.b16 %v3305
    %v4385 = vunpack.c.l.b16 %v3306
    %v4386 = vunpack.c.h.b16 %v3306
    %v4387 = vunpack.c.l.b16 %v3307
    %v4388 = vunpack.c.h.b16 %v3307
    %v4389 = vunpack.c.l.b16 %v3308
    %v4390 = vunpack.c.h.b16 %v3308
    %v4391 = vunpack.c.l.b16 %v3309
    %v4392 = vunpack.c.h.b16 %v3309
    %v4393 = vunpack.c.l.b16 %v3310
    %v4394 = vunpack.c.h.b16 %v3310
    %v4395 = vunpack.c.l.b16 %v3311
    %v4396 = vunpack.c.h.b16 %v3311
    %v4397 = vunpack.c.l.b16 %v3312
    %v4398 = vunpack.c.h.b16 %v3312
    %v4399 = vunpack.c.l.b16 %v3313
    %v4400 = vunpack.c.h.b16 %v3313
    %v4401 = vunpack.c.l.b16 %v3314
    %v4402 = vunpack.c.h.b16 %v3314
    %v4403 = vunpack.c.l.b16 %v3315
    %v4404 = vunpack.c.h.b16 %v3315
    %v4405 = vunpack.c.l.b16 %v3316
    %v4406 = vunpack.c.h.b16 %v3316
    %v4407 = vunpack.c.l.b16 %v3317
    %v4408 = vunpack.c.h.b16 %v3317
    %v4409 = vunpack.c.l.b16 %v3318
    %v4410 = vunpack.c.h.b16 %v3318
    %v4411 = vunpack.c.l.b16 %v3319
    %v4412 = vunpack.c.h.b16 %v3319
    %v4413 = vunpack.c.l.b16 %v3320
    %v4414 = vunpack.c.h.b16 %v3320
    %v4415 = vunpack.c.l.b16 %v3321
    %v4416 = vunpack.c.h.b16 %v3321
    %v4417 = vunpack.c.l.b16 %v3322
    %v4418 = vunpack.c.h.b16 %v3322
    %v4419 = vunpack.c.l.b16 %v3323
    %v4420 = vunpack.c.h.b16 %v3323
    %v4421 = vunpack.c.l.b16 %v3324
    %v4422 = vunpack.c.h.b16 %v3324
    %v4423 = vunpack.c.l.b16 %v3325
    %v4424 = vunpack.c.h.b16 %v3325
    %v4425 = vunpack.c.l.b16 %v3326
    %v4426 = vunpack.c.h.b16 %v3326
    %v4427 = vunpack.c.l.b16 %v3327
    %v4428 = vunpack.c.h.b16 %v3327
    %v4429 = vunpack.c.l.b16 %v3328
    %v4430 = vunpack.c.h.b16 %v3328
    %v4431 = vunpack.c.l.b16 %v3329
    %v4432 = vunpack.c.h.b16 %v3329
    %v4433 = vunpack.c.l.b16 %v3330
    %v4434 = vunpack.c.h.b16 %v3330
    %v4435 = vunpack.c.l.b16 %v3331
    %v4436 = vunpack.c.h.b16 %v3331
    %v4437 = vunpack.c.l.b16 %v3332
    %v4438 = vunpack.c.h.b16 %v3332
    %v4439 = vunpack.c.l.b16 %v3333
    %v4440 = vunpack.c.h.b16 %v3333
    %v4441 = vunpack.c.l.b16 %v3334
    %v4442 = vunpack.c.h.b16 %v3334
    %v4443 = vunpack.c.l.b16 %v3335
    %v4444 = vunpack.c.h.b16 %v3335
    %v4445 = vunpack.c.l.b16 %v3336
    %v4446 = vunpack.c.h.b16 %v3336
    %v4447 = vunpack.c.l.b16 %v3337
    %v4448 = vunpack.c.h.b16 %v3337
    %v4449 = vunpack.c.l.b16 %v3338
    %v4450 = vunpack.c.h.b16 %v3338
    %v4451 = vunpack.c.l.b16 %v3339
    %v4452 = vunpack.c.h.b16 %v3339
    %v4453 = vunpack.c.l.b16 %v3340
    %v4454 = vunpack.c.h.b16 %v3340
    %v4455 = vunpack.c.l.b16 %v3341
    %v4456 = vunpack.c.h.b16 %v3341
    %v4457 = vunpack.c.l.b16 %v3342
    %v4458 = vunpack.c.h.b16 %v3342
    %v4459 = vunpack.c.l.b16 %v3343
    %v4460 = vunpack.c.h.b16 %v3343
    %v4461 = vunpack.c.l.b16 %v3344
    %v4462 = vunpack.c.h.b16 %v3344
    %v4463 = vunpack.c.l.b16 %v3345
    %v4464 = vunpack.c.h.b16 %v3345
    %v4465 = vunpack.c.l.b16 %v3346
    %v4466 = vunpack.c.h.b16 %v3346
    %v4467 = vunpack.c.l.b16 %v3347
    %v4468 = vunpack.c.h.b16 %v3347
    %v4469 = vunpack.c.l.b16 %v3348
    %v4470 = vunpack.c.h.b16 %v3348
    %v4471 = vunpack.c.l.b16 %v3349
    %v4472 = vunpack.c.h.b16 %v3349
    %v4473 = vunpack.c.l.b16 %v3350
    %v4474 = vunpack.c.h.b16 %v3350
    %v4475 = vunpack.c.l.b16 %v3351
    %v4476 = vunpack.c.h.b16 %v3351
    %v4477 = vunpack.c.l.b16 %v3352
    %v4478 = vunpack.c.h.b16 %v3352
    %v4479 = vunpack.c.l.b16 %v3353
    %v4480 = vunpack.c.h.b16 %v3353
    %v4481 = vunpack.c.l.b16 %v3354
    %v4482 = vunpack.c.h.b16 %v3354
    %v4483 = vunpack.c.l.b16 %v3355
    %v4484 = vunpack.c.h.b16 %v3355
    %v4485 = vunpack.c.l.b16 %v3356
    %v4486 = vunpack.c.h.b16 %v3356
    %v4487 = vunpack.c.l.b16 %v3357
    %v4488 = vunpack.c.h.b16 %v3357
    %v4489 = vunpack.c.l.b16 %v3358
    %v4490 = vunpack.c.h.b16 %v3358
    %v4491 = vunpack.c.l.b16 %v3359
    %v4492 = vunpack.c.h.b16 %v3359
    %v4493 = vunpack.c.l.b16 %v3360
    %v4494 = vunpack.c.h.b16 %v3360
    %v4495 = vunpack.c.l.b16 %v3361
    %v4496 = vunpack.c.h.b16 %v3361
    %v4497 = vunpack.c.l.b16 %v3362
    %v4498 = vunpack.c.h.b16 %v3362
    %v4499 = vunpack.c.l.b16 %v3363
    %v4500 = vunpack.c.h.b16 %v3363
    %v4501 = vunpack.c.l.b16 %v3364
    %v4502 = vunpack.c.h.b16 %v3364
    %v4503 = vunpack.c.l.b16 %v3365
    %v4504 = vunpack.c.h.b16 %v3365
    %v4505 = vunpack.c.l.b16 %v3366
    %v4506 = vunpack.c.h.b16 %v3366
    %v4507 = vunpack.c.l.b16 %v3367
    %v4508 = vunpack.c.h.b16 %v3367
    %v4509 = vunpack.c.l.b16 %v3368
    %v4510 = vunpack.c.h.b16 %v3368
    %v4511 = vunpack.c.l.b16 %v3369
    %v4512 = vunpack.c.h.b16 %v3369
    %v4513 = vunpack.c.l.b16 %v3370
    %v4514 = vunpack.c.h.b16 %v3370
    %v4515 = vunpack.c.l.b16 %v3371
    %v4516 = vunpack.c.h.b16 %v3371
    %v4517 = vunpack.c.l.b16 %v3372
    %v4518 = vunpack.c.h.b16 %v3372
    %v4519 = vunpack.c.l.b16 %v3373
    %v4520 = vunpack.c.h.b16 %v3373
    %v4521 = vunpack.c.l.b16 %v3374
    %v4522 = vunpack.c.h.b16 %v3374
    %v4523 = vunpack.c.l.b16 %v3375
    %v4524 = vunpack.c.h.b16 %v3375
    %v4525 = vunpack.c.l.b16 %v3376
    %v4526 = vunpack.c.h.b16 %v3376
    %v4527 = vunpack.c.l.b16 %v3377
    %v4528 = vunpack.c.h.b16 %v3377
    %v4529 = vunpack.c.l.b16 %v3378
    %v4530 = vunpack.c.h.b16 %v3378
    %v4531 = vunpack.c.l.b16 %v3379
    %v4532 = vunpack.c.h.b16 %v3379
    %v4533 = vunpack.c.l.b16 %v3380
    %v4534 = vunpack.c.h.b16 %v3380
    %v4535 = vunpack.c.l.b16 %v3381
    %v4536 = vunpack.c.h.b16 %v3381
    %v4537 = vunpack.c.l.b16 %v3382
    %v4538 = vunpack.c.h.b16 %v3382
    %v4539 = vunpack.c.l.b16 %v3383
    %v4540 = vunpack.c.h.b16 %v3383
    %v4541 = vunpack.c.l.b16 %v3384
    %v4542 = vunpack.c.h.b16 %v3384
    %v4543 = vunpack.c.l.b16 %v3385
    %v4544 = vunpack.c.h.b16 %v3385
    %v4545 = vunpack.c.l.b16 %v3386
    %v4546 = vunpack.c.h.b16 %v3386
    %v4547 = vunpack.c.l.b16 %v3387
    %v4548 = vunpack.c.h.b16 %v3387
    %v4549 = vunpack.c.l.b16 %v3388
    %v4550 = vunpack.c.h.b16 %v3388
    %v4551 = vunpack.c.l.b16 %v3389
    %v4552 = vunpack.c.h.b16 %v3389
    %v4553 = vunpack.c.l.b16 %v3390
    %v4554 = vunpack.c.h.b16 %v3390
    %v4555 = vunpack.c.l.b16 %v3391
    %v4556 = vunpack.c.h.b16 %v3391
    %v4557 = vunpack.c.l.b16 %v3392
    %v4558 = vunpack.c.h.b16 %v3392
    %v4559 = vunpack.c.l.b16 %v3393
    %v4560 = vunpack.c.h.b16 %v3393
    %v4561 = vunpack.c.l.b16 %v3394
    %v4562 = vunpack.c.h.b16 %v3394
    %v4563 = vunpack.c.l.b16 %v3395
    %v4564 = vunpack.c.h.b16 %v3395
    %v4565 = vunpack.c.l.b16 %v3396
    %v4566 = vunpack.c.h.b16 %v3396
    %v4567 = vunpack.c.l.b16 %v3397
    %v4568 = vunpack.c.h.b16 %v3397
    %v4569 = vunpack.c.l.b16 %v3398
    %v4570 = vunpack.c.h.b16 %v3398
    %v4571 = vunpack.c.l.b16 %v3399
    %v4572 = vunpack.c.h.b16 %v3399
    %v4573 = vunpack.c.l.b16 %v3400
    %v4574 = vunpack.c.h.b16 %v3400
    %v4575 = vunpack.c.l.b16 %v3401
    %v4576 = vunpack.c.h.b16 %v3401
    %v4577 = vunpack.c.l.b16 %v3402
    %v4578 = vunpack.c.h.b16 %v3402
    %v4579 = vunpack.c.l.b16 %v3403
    %v4580 = vunpack.c.h.b16 %v3403
    %v4581 = vunpack.c.l.b16 %v3404
    %v4582 = vunpack.c.h.b16 %v3404
    %v4583 = vunpack.c.l.b16 %v3405
    %v4584 = vunpack.c.h.b16 %v3405
    %v4585 = vunpack.c.l.b16 %v3406
    %v4586 = vunpack.c.h.b16 %v3406
    %v4587 = vunpack.c.l.b16 %v3407
    %v4588 = vunpack.c.h.b16 %v3407
    %v4589 = vunpack.c.l.b16 %v3408
    %v4590 = vunpack.c.h.b16 %v3408
    %v4591 = vunpack.c.l.b16 %v3409
    %v4592 = vunpack.c.h.b16 %v3409
    %v4593 = vunpack.c.l.b16 %v3410
    %v4594 = vunpack.c.h.b16 %v3410
    %v4595 = vunpack.c.l.b16 %v3411
    %v4596 = vunpack.c.h.b16 %v3411
    %v4597 = vunpack.c.l.b16 %v3412
    %v4598 = vunpack.c.h.b16 %v3412
    %v4599 = vunpack.c.l.b16 %v3413
    %v4600 = vunpack.c.h.b16 %v3413
    %v4601 = vunpack.c.l.b16 %v3414
    %v4602 = vunpack.c.h.b16 %v3414
    %v4603 = vunpack.c.l.b16 %v3415
    %v4604 = vunpack.c.h.b16 %v3415
    %v4605 = vunpack.c.l.b16 %v3416
    %v4606 = vunpack.c.h.b16 %v3416
    %v4607 = vunpack.c.l.b16 %v3417
    %v4608 = vunpack.c.h.b16 %v3417
    %v4609 = vunpack.c.l.b16 %v3418
    %v4610 = vunpack.c.h.b16 %v3418
    %v4611 = vunpack.c.l.b16 %v3419
    %v4612 = vunpack.c.h.b16 %v3419
    %v4613 = vunpack.c.l.b16 %v3420
    %v4614 = vunpack.c.h.b16 %v3420
    %v4615 = vunpack.c.l.b16 %v3421
    %v4616 = vunpack.c.h.b16 %v3421
    %v4617 = vunpack.c.l.b16 %v3422
    %v4618 = vunpack.c.h.b16 %v3422
    %v4619 = vunpack.c.l.b16 %v3423
    %v4620 = vunpack.c.h.b16 %v3423
    %v4621 = vunpack.c.l.b16 %v3424
    %v4622 = vunpack.c.h.b16 %v3424
    %v4623 = vunpack.c.l.b16 %v3425
    %v4624 = vunpack.c.h.b16 %v3425
    %v4625 = vunpack.c.l.b16 %v3426
    %v4626 = vunpack.c.h.b16 %v3426
    %v4627 = vunpack.c.l.b16 %v3427
    %v4628 = vunpack.c.h.b16 %v3427
    %v4629 = vunpack.c.l.b16 %v3428
    %v4630 = vunpack.c.h.b16 %v3428
    %v4631 = vunpack.c.l.b16 %v3429
    %v4632 = vunpack.c.h.b16 %v3429
    %v4633 = vunpack.c.l.b16 %v3430
    %v4634 = vunpack.c.h.b16 %v3430
    %v4635 = vunpack.c.l.b16 %v3431
    %v4636 = vunpack.c.h.b16 %v3431
    %v4637 = vunpack.c.l.b16 %v3432
    %v4638 = vunpack.c.h.b16 %v3432
    %v4639 = vunpack.c.l.b16 %v3433
    %v4640 = vunpack.c.h.b16 %v3433
    %v4641 = vunpack.c.l.b16 %v3434
    %v4642 = vunpack.c.h.b16 %v3434
    %v4643 = vunpack.c.l.b16 %v3435
    %v4644 = vunpack.c.h.b16 %v3435
    %v4645 = vunpack.c.l.b16 %v3436
    %v4646 = vunpack.c.h.b16 %v3436
    %v4647 = vunpack.c.l.b16 %v3437
    %v4648 = vunpack.c.h.b16 %v3437
    %v4649 = vunpack.c.l.b16 %v3438
    %v4650 = vunpack.c.h.b16 %v3438
    %v4651 = vunpack.c.l.b16 %v3439
    %v4652 = vunpack.c.h.b16 %v3439
    %v4653 = vunpack.c.l.b16 %v3440
    %v4654 = vunpack.c.h.b16 %v3440
    %v4655 = vunpack.c.l.b16 %v3441
    %v4656 = vunpack.c.h.b16 %v3441
    %v4657 = vunpack.c.l.b16 %v3442
    %v4658 = vunpack.c.h.b16 %v3442
    %v4659 = vunpack.c.l.b16 %v3443
    %v4660 = vunpack.c.h.b16 %v3443
    %v4661 = vunpack.c.l.b16 %v3444
    %v4662 = vunpack.c.h.b16 %v3444
    %v4663 = vunpack.c.l.b16 %v3445
    %v4664 = vunpack.c.h.b16 %v3445
    %v4665 = vunpack.c.l.b16 %v3446
    %v4666 = vunpack.c.h.b16 %v3446
    %v4667 = vunpack.c.l.b16 %v3447
    %v4668 = vunpack.c.h.b16 %v3447
    %v4669 = vunpack.c.l.b16 %v3448
    %v4670 = vunpack.c.h.b16 %v3448
    %v4671 = vunpack.c.l.b16 %v3449
    %v4672 = vunpack.c.h.b16 %v3449
    %v4673 = vunpack.c.l.b16 %v3450
    %v4674 = vunpack.c.h.b16 %v3450
    %v4675 = vunpack.c.l.b16 %v3451
    %v4676 = vunpack.c.h.b16 %v3451
    %v4677 = vunpack.c.l.b16 %v3452
    %v4678 = vunpack.c.h.b16 %v3452
    %v4679 = vunpack.c.l.b16 %v3453
    %v4680 = vunpack.c.h.b16 %v3453
    %v4681 = vunpack.c.l.b16 %v3454
    %v4682 = vunpack.c.h.b16 %v3454
    %v4683 = vunpack.c.l.b16 %v3455
    %v4684 = vunpack.c.h.b16 %v3455
    %v4685 = vunpack.c.l.b16 %v3456
    %v4686 = vunpack.c.h.b16 %v3456
    %v4687 = vunpack.c.l.b16 %v3457
    %v4688 = vunpack.c.h.b16 %v3457
    %v4689 = vunpack.c.l.b16 %v3458
    %v4690 = vunpack.c.h.b16 %v3458
    %v4691 = vunpack.c.l.b16 %v3459
    %v4692 = vunpack.c.h.b16 %v3459
    %v4693 = vunpack.c.l.b16 %v3460
    %v4694 = vunpack.c.h.b16 %v3460
    %v4695 = vunpack.c.l.b16 %v3461
    %v4696 = vunpack.c.h.b16 %v3461
    %v4697 = vunpack.c.l.b16 %v3462
    %v4698 = vunpack.c.h.b16 %v3462
    %v4699 = vunpack.c.l.b16 %v3463
    %v4700 = vunpack.c.h.b16 %v3463
    %v4701 = vunpack.c.l.b16 %v3464
    %v4702 = vunpack.c.h.b16 %v3464
    %v4703 = vunpack.c.l.b16 %v3465
    %v4704 = vunpack.c.h.b16 %v3465
    %v4705 = vunpack.c.l.b16 %v3466
    %v4706 = vunpack.c.h.b16 %v3466
    %v4707 = vunpack.c.l.b16 %v3467
    %v4708 = vunpack.c.h.b16 %v3467
    %v4709 = vunpack.c.l.b16 %v3468
    %v4710 = vunpack.c.h.b16 %v3468
    %v4711 = vunpack.c.l.b16 %v3469
    %v4712 = vunpack.c.h.b16 %v3469
    %v4713 = vunpack.c.l.b16 %v3470
    %v4714 = vunpack.c.h.b16 %v3470
    %v4715 = vunpack.c.l.b16 %v3471
    %v4716 = vunpack.c.h.b16 %v3471
    %v4717 = vunpack.c.l.b16 %v3472
    %v4718 = vunpack.c.h.b16 %v3472
    %v4719 = vunpack.c.l.b16 %v3473
    %v4720 = vunpack.c.h.b16 %v3473
    %v4721 = vunpack.c.l.b16 %v3474
    %v4722 = vunpack.c.h.b16 %v3474
    %v4723 = vunpack.c.l.b16 %v3475
    %v4724 = vunpack.c.h.b16 %v3475
    %v4725 = vunpack.c.l.b16 %v3476
    %v4726 = vunpack.c.h.b16 %v3476
    %v4727 = vunpack.c.l.b16 %v3477
    %v4728 = vunpack.c.h.b16 %v3477
    %v4729 = vunpack.c.l.b16 %v3478
    %v4730 = vunpack.c.h.b16 %v3478
    %v4731 = vunpack.c.l.b16 %v3479
    %v4732 = vunpack.c.h.b16 %v3479
    %v4733 = vunpack.c.l.b16 %v3480
    %v4734 = vunpack.c.h.b16 %v3480
    %v4735 = vunpack.c.l.b16 %v3481
    %v4736 = vunpack.c.h.b16 %v3481
    %v4737 = vunpack.c.l.b16 %v3482
    %v4738 = vunpack.c.h.b16 %v3482
    %v4739 = vunpack.c.l.b16 %v3483
    %v4740 = vunpack.c.h.b16 %v3483
    %v4741 = vunpack.c.l.b16 %v3484
    %v4742 = vunpack.c.h.b16 %v3484
    %v4743 = vunpack.c.l.b16 %v3485
    %v4744 = vunpack.c.h.b16 %v3485
    %v4745 = vunpack.c.l.b16 %v3486
    %v4746 = vunpack.c.h.b16 %v3486
    %v4747 = vunpack.c.l.b16 %v3487
    %v4748 = vunpack.c.h.b16 %v3487
    %v4749 = vunpack.c.l.b16 %v3488
    %v4750 = vunpack.c.h.b16 %v3488
    %v4751 = vunpack.c.l.b16 %v3489
    %v4752 = vunpack.c.h.b16 %v3489
    %v4753 = vunpack.c.l.b16 %v3490
    %v4754 = vunpack.c.h.b16 %v3490
    %v4755 = vunpack.c.l.b16 %v3491
    %v4756 = vunpack.c.h.b16 %v3491
    %v4757 = vunpack.c.l.b16 %v3492
    %v4758 = vunpack.c.h.b16 %v3492
    %v4759 = vunpack.c.l.b16 %v3493
    %v4760 = vunpack.c.h.b16 %v3493
    %v4761 = vunpack.c.l.b16 %v3494
    %v4762 = vunpack.c.h.b16 %v3494
    %v4763 = vunpack.c.l.b16 %v3495
    %v4764 = vunpack.c.h.b16 %v3495
    %v4765 = vunpack.c.l.b16 %v3496
    %v4766 = vunpack.c.h.b16 %v3496
    %v4767 = vunpack.c.l.b16 %v3497
    %v4768 = vunpack.c.h.b16 %v3497
    %v4769 = vunpack.c.l.b16 %v3498
    %v4770 = vunpack.c.h.b16 %v3498
    %v4771 = vunpack.c.l.b16 %v3499
    %v4772 = vunpack.c.h.b16 %v3499
    %v4773 = vunpack.c.l.b16 %v3500
    %v4774 = vunpack.c.h.b16 %v3500
    %v4775 = vunpack.c.l.b16 %v3501
    %v4776 = vunpack.c.h.b16 %v3501
    %v4777 = vunpack.c.l.b16 %v3502
    %v4778 = vunpack.c.h.b16 %v3502
    %v4779 = vunpack.c.l.b16 %v3503
    %v4780 = vunpack.c.h.b16 %v3503
    %v4781 = vunpack.c.l.b16 %v3504
    %v4782 = vunpack.c.h.b16 %v3504
    %v4783 = vunpack.c.l.b16 %v3505
    %v4784 = vunpack.c.h.b16 %v3505
    %v4785 = vunpack.c.l.b16 %v3506
    %v4786 = vunpack.c.h.b16 %v3506
    %v4787 = vunpack.c.l.b16 %v3507
    %v4788 = vunpack.c.h.b16 %v3507
    %v4789 = vunpack.c.l.b16 %v3508
    %v4790 = vunpack.c.h.b16 %v3508
    %v4791 = vunpack.c.l.b16 %v3509
    %v4792 = vunpack.c.h.b16 %v3509
    %v4793 = vunpack.c.l.b16 %v3510
    %v4794 = vunpack.c.h.b16 %v3510
    %v4795 = vunpack.c.l.b16 %v3511
    %v4796 = vunpack.c.h.b16 %v3511
    %v4797 = vunpack.c.l.b16 %v3512
    %v4798 = vunpack.c.h.b16 %v3512
    %v4799 = vunpack.c.l.b16 %v3513
    %v4800 = vunpack.c.h.b16 %v3513
    %v4801 = vunpack.c.l.b16 %v3514
    %v4802 = vunpack.c.h.b16 %v3514
    %v4803 = vunpack.c.l.b16 %v3515
    %v4804 = vunpack.c.h.b16 %v3515
    %v4805 = vunpack.c.l.b16 %v3516
    %v4806 = vunpack.c.h.b16 %v3516
    %v4807 = vunpack.c.l.b16 %v3517
    %v4808 = vunpack.c.h.b16 %v3517
    %v4809 = vunpack.c.l.b16 %v3518
    %v4810 = vunpack.c.h.b16 %v3518
    %v4811 = vunpack.c.l.b16 %v3519
    %v4812 = vunpack.c.h.b16 %v3519
    %v4813 = vunpack.c.l.b16 %v3520
    %v4814 = vunpack.c.h.b16 %v3520
    %v4815 = vunpack.c.l.b16 %v3521
    %v4816 = vunpack.c.h.b16 %v3521
    %v4817 = vunpack.c.l.b16 %v3522
    %v4818 = vunpack.c.h.b16 %v3522
    %v4819 = vunpack.c.l.b16 %v3523
    %v4820 = vunpack.c.h.b16 %v3523
    %v4821 = vunpack.c.l.b16 %v3524
    %v4822 = vunpack.c.h.b16 %v3524
    %v4823 = vunpack.c.l.b16 %v3525
    %v4824 = vunpack.c.h.b16 %v3525
    %v4825 = vunpack.c.l.b16 %v3526
    %v4826 = vunpack.c.h.b16 %v3526
    %v4827 = vunpack.c.l.b16 %v3527
    %v4828 = vunpack.c.h.b16 %v3527
    %v4829 = vunpack.c.l.b16 %v3528
    %v4830 = vunpack.c.h.b16 %v3528
    %v4831 = vunpack.c.l.b16 %v3529
    %v4832 = vunpack.c.h.b16 %v3529
    %v4833 = vunpack.c.l.b16 %v3530
    %v4834 = vunpack.c.h.b16 %v3530
    %v4835 = vunpack.c.l.b16 %v3531
    %v4836 = vunpack.c.h.b16 %v3531
    %v4837 = vunpack.c.l.b16 %v3532
    %v4838 = vunpack.c.h.b16 %v3532
    %v4839 = vunpack.c.l.b16 %v3533
    %v4840 = vunpack.c.h.b16 %v3533
    %v4841 = vunpack.c.l.b16 %v3534
    %v4842 = vunpack.c.h.b16 %v3534
    %v4843 = vunpack.c.l.b16 %v3535
    %v4844 = vunpack.c.h.b16 %v3535
    %v4845 = vunpack.c.l.b16 %v3536
    %v4846 = vunpack.c.h.b16 %v3536
    %v4847 = vunpack.c.l.b16 %v3537
    %v4848 = vunpack.c.h.b16 %v3537
    %v4849 = vunpack.c.l.b16 %v3538
    %v4850 = vunpack.c.h.b16 %v3538
    %v4851 = vunpack.c.l.b16 %v3539
    %v4852 = vunpack.c.h.b16 %v3539
    %v4853 = vunpack.c.l.b16 %v3540
    %v4854 = vunpack.c.h.b16 %v3540
    %v4855 = vunpack.c.l.b16 %v3541
    %v4856 = vunpack.c.h.b16 %v3541
    %v4857 = vunpack.c.l.b16 %v3542
    %v4858 = vunpack.c.h.b16 %v3542
    %v4859 = vunpack.c.l.b16 %v3543
    %v4860 = vunpack.c.h.b16 %v3543
    %v4861 = vunpack.c.l.b16 %v3544
    %v4862 = vunpack.c.h.b16 %v3544
    %v4863 = vunpack.c.l.b16 %v3545
    %v4864 = vunpack.c.h.b16 %v3545
    %v4865 = vunpack.c.l.b16 %v3546
    %v4866 = vunpack.c.h.b16 %v3546
    %v4867 = vunpack.c.l.b16 %v3547
    %v4868 = vunpack.c.h.b16 %v3547
    %v4869 = vunpack.c.l.b16 %v3548
    %v4870 = vunpack.c.h.b16 %v3548
    %v4871 = vunpack.c.l.b16 %v3549
    %v4872 = vunpack.c.h.b16 %v3549
    %v4873 = vunpack.c.l.b16 %v3550
    %v4874 = vunpack.c.h.b16 %v3550
    %v4875 = vunpack.c.l.b16 %v3551
    %v4876 = vunpack.c.h.b16 %v3551
    %v4877 = vunpack.c.l.b16 %v3552
    %v4878 = vunpack.c.h.b16 %v3552
    %v4879 = vunpack.c.l.b16 %v3553
    %v4880 = vunpack.c.h.b16 %v3553
    %v4881 = vunpack.c.l.b16 %v3554
    %v4882 = vunpack.c.h.b16 %v3554
    %v4883 = vunpack.c.l.b16 %v3555
    %v4884 = vunpack.c.h.b16 %v3555
    %v4885 = vunpack.c.l.b16 %v3556
    %v4886 = vunpack.c.h.b16 %v3556
    %v4887 = vunpack.c.l.b16 %v3557
    %v4888 = vunpack.c.h.b16 %v3557
    %v4889 = vunpack.c.l.b16 %v3558
    %v4890 = vunpack.c.h.b16 %v3558
    %v4891 = vunpack.c.l.b16 %v3559
    %v4892 = vunpack.c.h.b16 %v3559
    %v4893 = vunpack.c.l.b16 %v3560
    %v4894 = vunpack.c.h.b16 %v3560
    %v4895 = vunpack.c.l.b16 %v3561
    %v4896 = vunpack.c.h.b16 %v3561
    %v4897 = vunpack.c.l.b16 %v3562
    %v4898 = vunpack.c.h.b16 %v3562
    %v4899 = vunpack.c.l.b16 %v3563
    %v4900 = vunpack.c.h.b16 %v3563
    %v4901 = vunpack.c.l.b16 %v3564
    %v4902 = vunpack.c.h.b16 %v3564
    %v4903 = vunpack.c.l.b16 %v3565
    %v4904 = vunpack.c.h.b16 %v3565
    %v4905 = vunpack.c.l.b16 %v3566
    %v4906 = vunpack.c.h.b16 %v3566
    %v4907 = vunpack.c.l.b16 %v3567
    %v4908 = vunpack.c.h.b16 %v3567
    %v4909 = vunpack.c.l.b16 %v3568
    %v4910 = vunpack.c.h.b16 %v3568
    %v4911 = vunpack.c.l.b16 %v3569
    %v4912 = vunpack.c.h.b16 %v3569
    %v4913 = vunpack.c.l.b16 %v3570
    %v4914 = vunpack.c.h.b16 %v3570
    %v4915 = vunpack.c.l.b16 %v3571
    %v4916 = vunpack.c.h.b16 %v3571
    %v4917 = vunpack.c.l.b16 %v3572
    %v4918 = vunpack.c.h.b16 %v3572
    %v4919 = vunpack.c.l.b16 %v3573
    %v4920 = vunpack.c.h.b16 %v3573
    %v4921 = vunpack.c.l.b16 %v3574
    %v4922 = vunpack.c.h.b16 %v3574
    %v4923 = vunpack.c.l.b16 %v3575
    %v4924 = vunpack.c.h.b16 %v3575
    %v4925 = vunpack.c.l.b16 %v3576
    %v4926 = vunpack.c.h.b16 %v3576
    %v4927 = vunpack.c.l.b16 %v3577
    %v4928 = vunpack.c.h.b16 %v3577
    %v4929 = vunpack.c.l.b16 %v3578
    %v4930 = vunpack.c.h.b16 %v3578
    %v4931 = vunpack.c.l.b16 %v3579
    %v4932 = vunpack.c.h.b16 %v3579
    %v4933 = vunpack.c.l.b16 %v3580
    %v4934 = vunpack.c.h.b16 %v3580
    %v4935 = vunpack.c.l.b16 %v3581
    %v4936 = vunpack.c.h.b16 %v3581
    %v4937 = vunpack.c.l.b16 %v3582
    %v4938 = vunpack.c.h.b16 %v3582
    %v4939 = vunpack.c.l.b16 %v3583
    %v4940 = vunpack.c.h.b16 %v3583
    %v4941 = vunpack.c.l.b16 %v3584
    %v4942 = vunpack.c.h.b16 %v3584
    %v4943 = vunpack.c.l.b16 %v3585
    %v4944 = vunpack.c.h.b16 %v3585
    %v4945 = vunpack.c.l.b16 %v3586
    %v4946 = vunpack.c.h.b16 %v3586
    %v4947 = vunpack.c.l.b16 %v3587
    %v4948 = vunpack.c.h.b16 %v3587
    %v4949 = vunpack.c.l.b16 %v3588
    %v4950 = vunpack.c.h.b16 %v3588
    %v4951 = vunpack.c.l.b16 %v3589
    %v4952 = vunpack.c.h.b16 %v3589
    %v4953 = vunpack.c.l.b16 %v3590
    %v4954 = vunpack.c.h.b16 %v3590
    %v4955 = vunpack.c.l.b16 %v3591
    %v4956 = vunpack.c.h.b16 %v3591
    %v4957 = vunpack.c.l.b16 %v3592
    %v4958 = vunpack.c.h.b16 %v3592
    %v4959 = vunpack.c.l.b16 %v3593
    %v4960 = vunpack.c.h.b16 %v3593
    %v4961 = vunpack.c.l.b16 %v3594
    %v4962 = vunpack.c.h.b16 %v3594
    %v4963 = vunpack.c.l.b16 %v3595
    %v4964 = vunpack.c.h.b16 %v3595
    %v4965 = vunpack.c.l.b16 %v3596
    %v4966 = vunpack.c.h.b16 %v3596
    %v4967 = vunpack.c.l.b16 %v3597
    %v4968 = vunpack.c.h.b16 %v3597
    %v4969 = vunpack.c.l.b16 %v3598
    %v4970 = vunpack.c.h.b16 %v3598
    %v4971 = vunpack.c.l.b16 %v3599
    %v4972 = vunpack.c.h.b16 %v3599
    %v4973 = vunpack.c.l.b16 %v3600
    %v4974 = vunpack.c.h.b16 %v3600
    %v4975 = vunpack.c.l.b16 %v3601
    %v4976 = vunpack.c.h.b16 %v3601
    %v4977 = vunpack.c.l.b16 %v3602
    %v4978 = vunpack.c.h.b16 %v3602
    %v4979 = vunpack.c.l.b16 %v3603
    %v4980 = vunpack.c.h.b16 %v3603
    %v4981 = vunpack.c.l.b16 %v3604
    %v4982 = vunpack.c.h.b16 %v3604
    %v4983 = vunpack.c.l.b16 %v3605
    %v4984 = vunpack.c.h.b16 %v3605
    %v4985 = vunpack.c.l.b16 %v3606
    %v4986 = vunpack.c.h.b16 %v3606
    %v4987 = vunpack.c.l.b16 %v3607
    %v4988 = vunpack.c.h.b16 %v3607
    %v4989 = vunpack.c.l.b16 %v3608
    %v4990 = vunpack.c.h.b16 %v3608
    %v4991 = vunpack.c.l.b16 %v3609
    %v4992 = vunpack.c.h.b16 %v3609
    %v4993 = vunpack.c.l.b16 %v3610
    %v4994 = vunpack.c.h.b16 %v3610
    %v4995 = vunpack.c.l.b16 %v3611
    %v4996 = vunpack.c.h.b16 %v3611
    %v4997 = vunpack.c.l.b16 %v3612
    %v4998 = vunpack.c.h.b16 %v3612
    %v4999 = vunpack.c.l.b16 %v3613
    %v5000 = vunpack.c.h.b16 %v3613
    %v5001 = vunpack.c.l.b16 %v3614
    %v5002 = vunpack.c.h.b16 %v3614
    %v5003 = vunpack.c.l.b16 %v3615
    %v5004 = vunpack.c.h.b16 %v3615
    %v5005 = vunpack.c.l.b16 %v3616
    %v5006 = vunpack.c.h.b16 %v3616
    %v5007 = vunpack.c.l.b16 %v3617
    %v5008 = vunpack.c.h.b16 %v3617
    %v5009 = vunpack.c.l.b16 %v3618
    %v5010 = vunpack.c.h.b16 %v3618
    %v5011 = vunpack.c.l.b16 %v3619
    %v5012 = vunpack.c.h.b16 %v3619
    %v5013 = vunpack.c.l.b16 %v3620
    %v5014 = vunpack.c.h.b16 %v3620
    %v5015 = vunpack.c.l.b16 %v3621
    %v5016 = vunpack.c.h.b16 %v3621
    %v5017 = vunpack.c.l.b16 %v3622
    %v5018 = vunpack.c.h.b16 %v3622
    %v5019 = vunpack.c.l.b16 %v3623
    %v5020 = vunpack.c.h.b16 %v3623
    %v5021 = vunpack.c.l.b16 %v3624
    %v5022 = vunpack.c.h.b16 %v3624
    %v5023 = vunpack.c.l.b16 %v3625
    %v5024 = vunpack.c.h.b16 %v3625
    %v5025 = vunpack.c.l.b16 %v3626
    %v5026 = vunpack.c.h.b16 %v3626
    %v5027 = vunpack.c.l.b16 %v3627
    %v5028 = vunpack.c.h.b16 %v3627
    %v5029 = vunpack.c.l.b16 %v3628
    %v5030 = vunpack.c.h.b16 %v3628
    %v5031 = vunpack.c.l.b16 %v3629
    %v5032 = vunpack.c.h.b16 %v3629
    %v5033 = vunpack.c.l.b16 %v3630
    %v5034 = vunpack.c.h.b16 %v3630
    %v5035 = vunpack.c.l.b16 %v3631
    %v5036 = vunpack.c.h.b16 %v3631
    %v5037 = vunpack.c.l.b16 %v3632
    %v5038 = vunpack.c.h.b16 %v3632
    %v5039 = vunpack.c.l.b16 %v3633
    %v5040 = vunpack.c.h.b16 %v3633
    %v5041 = vunpack.c.l.b16 %v3634
    %v5042 = vunpack.c.h.b16 %v3634
    %v5043 = vunpack.c.l.b16 %v3635
    %v5044 = vunpack.c.h.b16 %v3635
    %v5045 = vunpack.c.l.b16 %v3636
    %v5046 = vunpack.c.h.b16 %v3636
    %v5047 = vunpack.c.l.b16 %v3637
    %v5048 = vunpack.c.h.b16 %v3637
    %v5049 = vunpack.c.l.b16 %v3638
    %v5050 = vunpack.c.h.b16 %v3638
    %v5051 = vunpack.c.l.b16 %v3639
    %v5052 = vunpack.c.h.b16 %v3639
    %v5053 = vunpack.c.l.b16 %v3640
    %v5054 = vunpack.c.h.b16 %v3640
    %v5055 = vunpack.c.l.b16 %v3641
    %v5056 = vunpack.c.h.b16 %v3641
    %v5057 = vunpack.c.l.b16 %v3642
    %v5058 = vunpack.c.h.b16 %v3642
    %v5059 = vunpack.c.l.b16 %v3643
    %v5060 = vunpack.c.h.b16 %v3643
    %v5061 = vunpack.c.l.b16 %v3644
    %v5062 = vunpack.c.h.b16 %v3644
    %v5063 = vunpack.c.l.b16 %v3645
    %v5064 = vunpack.c.h.b16 %v3645
    %v5065 = vunpack.c.l.b16 %v3646
    %v5066 = vunpack.c.h.b16 %v3646
    %v5067 = vunpack.c.l.b16 %v3647
    %v5068 = vunpack.c.h.b16 %v3647
    %v5069 = vunpack.c.l.b16 %v3648
    %v5070 = vunpack.c.h.b16 %v3648
    %v5071 = vunpack.c.l.b16 %v3649
    %v5072 = vunpack.c.h.b16 %v3649
    %v5073 = vunpack.c.l.b16 %v3650
    %v5074 = vunpack.c.h.b16 %v3650
    %v5075 = vunpack.c.l.b16 %v3651
    %v5076 = vunpack.c.h.b16 %v3651
    %v5077 = vunpack.c.l.b16 %v3652
    %v5078 = vunpack.c.h.b16 %v3652
    %v5079 = vunpack.c.l.b16 %v3653
    %v5080 = vunpack.c.h.b16 %v3653
    %v5081 = vunpack.c.l.b16 %v3654
    %v5082 = vunpack.c.h.b16 %v3654
    %v5083 = vunpack.c.l.b16 %v3655
    %v5084 = vunpack.c.h.b16 %v3655
    %v5085 = vunpack.c.l.b16 %v3656
    %v5086 = vunpack.c.h.b16 %v3656
    %v5087 = vunpack.c.l.b16 %v3657
    %v5088 = vunpack.c.h.b16 %v3657
    %v5089 = vunpack.c.l.b16 %v3658
    %v5090 = vunpack.c.h.b16 %v3658
    %v5091 = vunpack.c.l.b16 %v3659
    %v5092 = vunpack.c.h.b16 %v3659
    %v5093 = vunpack.c.l.b16 %v3660
    %v5094 = vunpack.c.h.b16 %v3660
    %v5095 = vunpack.c.l.b16 %v3661
    %v5096 = vunpack.c.h.b16 %v3661
    %v5097 = vunpack.c.l.b16 %v3662
    %v5098 = vunpack.c.h.b16 %v3662
    %v5099 = vunpack.c.l.b16 %v3663
    %v5100 = vunpack.c.h.b16 %v3663
    %v5101 = vunpack.c.l.b16 %v3664
    %v5102 = vunpack.c.h.b16 %v3664
    %v5103 = vunpack.c.l.b16 %v3665
    %v5104 = vunpack.c.h.b16 %v3665
    %v5105 = vunpack.c.l.b16 %v3666
    %v5106 = vunpack.c.h.b16 %v3666
    %v5107 = vunpack.c.l.b16 %v3667
    %v5108 = vunpack.c.h.b16 %v3667
    %v5109 = vunpack.c.l.b16 %v3668
    %v5110 = vunpack.c.h.b16 %v3668
    %v5111 = vunpack.c.l.b16 %v3669
    %v5112 = vunpack.c.h.b16 %v3669
    %v5113 = vunpack.c.l.b16 %v3670
    %v5114 = vunpack.c.h.b16 %v3670
    %v5115 = vunpack.c.l.b16 %v3671
    %v5116 = vunpack.c.h.b16 %v3671
    %v5117 = vunpack.c.l.b16 %v3672
    %v5118 = vunpack.c.h.b16 %v3672
    %v5119 = vunpack.c.l.b16 %v3673
    %v5120 = vunpack.c.h.b16 %v3673
    %v5121 = vunpack.c.l.b16 %v3674
    %v5122 = vunpack.c.h.b16 %v3674
    %v5123 = vunpack.c.l.b16 %v3675
    %v5124 = vunpack.c.h.b16 %v3675
    %v5125 = vunpack.c.l.b16 %v3676
    %v5126 = vunpack.c.h.b16 %v3676
    %v5127 = vunpack.c.l.b16 %v3677
    %v5128 = vunpack.c.h.b16 %v3677
    %v5129 = vunpack.c.l.b16 %v3678
    %v5130 = vunpack.c.h.b16 %v3678
    %v5131 = vunpack.c.l.b16 %v3679
    %v5132 = vunpack.c.h.b16 %v3679
    %v5133 = vunpack.c.l.b16 %v3680
    %v5134 = vunpack.c.h.b16 %v3680
    %v5135 = vunpack.c.l.b16 %v3681
    %v5136 = vunpack.c.h.b16 %v3681
    %v5137 = vunpack.c.l.b16 %v3682
    %v5138 = vunpack.c.h.b16 %v3682
    %v5139 = vunpack.c.l.b16 %v3683
    %v5140 = vunpack.c.h.b16 %v3683
    %v5141 = vunpack.c.l.b16 %v3684
    %v5142 = vunpack.c.h.b16 %v3684
    %v5143 = vunpack.c.l.b16 %v3685
    %v5144 = vunpack.c.h.b16 %v3685
    %v5145 = vunpack.c.l.b16 %v3686
    %v5146 = vunpack.c.h.b16 %v3686
    %v5147 = vunpack.c.l.b16 %v3687
    %v5148 = vunpack.c.h.b16 %v3687
    %v5149 = vunpack.c.l.b16 %v3688
    %v5150 = vunpack.c.h.b16 %v3688
    %v5151 = vunpack.c.l.b16 %v3689
    %v5152 = vunpack.c.h.b16 %v3689
    %v5153 = vunpack.c.l.b16 %v3690
    %v5154 = vunpack.c.h.b16 %v3690
    %v5155 = vunpack.c.l.b16 %v3691
    %v5156 = vunpack.c.h.b16 %v3691
    %v5157 = vunpack.c.l.b16 %v3692
    %v5158 = vunpack.c.h.b16 %v3692
    %v5159 = vunpack.c.l.b16 %v3693
    %v5160 = vunpack.c.h.b16 %v3693
    %v5161 = vunpack.c.l.b16 %v3694
    %v5162 = vunpack.c.h.b16 %v3694
    %v5163 = vunpack.c.l.b16 %v3695
    %v5164 = vunpack.c.h.b16 %v3695
    %v5165 = vunpack.c.l.b16 %v3696
    %v5166 = vunpack.c.h.b16 %v3696
    %v5167 = vunpack.c.l.b16 %v3697
    %v5168 = vunpack.c.h.b16 %v3697
    %v5169 = vunpack.c.l.b16 %v3698
    %v5170 = vunpack.c.h.b16 %v3698
    %v5171 = vunpack.c.l.b16 %v3699
    %v5172 = vunpack.c.h.b16 %v3699
    %v5173 = vunpack.c.l.b16 %v3700
    %v5174 = vunpack.c.h.b16 %v3700
    %v5175 = vunpack.c.l.b16 %v3701
    %v5176 = vunpack.c.h.b16 %v3701
    %v5177 = vunpack.c.l.b16 %v3702
    %v5178 = vunpack.c.h.b16 %v3702
    %v5179 = vunpack.c.l.b16 %v3703
    %v5180 = vunpack.c.h.b16 %v3703
    %v5181 = vunpack.c.l.b16 %v3704
    %v5182 = vunpack.c.h.b16 %v3704
    %v5183 = vunpack.c.l.b16 %v3705
    %v5184 = vunpack.c.h.b16 %v3705
    %v5185 = vunpack.c.l.b16 %v3706
    %v5186 = vunpack.c.h.b16 %v3706
    %v5187 = vunpack.c.l.b16 %v3707
    %v5188 = vunpack.c.h.b16 %v3707
    %v5189 = vunpack.c.l.b16 %v3708
    %v5190 = vunpack.c.h.b16 %v3708
    %v5191 = vunpack.c.l.b16 %v3709
    %v5192 = vunpack.c.h.b16 %v3709
    %v5193 = vunpack.c.l.b16 %v3710
    %v5194 = vunpack.c.h.b16 %v3710
    %v5195 = vunpack.c.l.b16 %v3711
    %v5196 = vunpack.c.h.b16 %v3711
    %v5197 = vunpack.c.l.b16 %v3712
    %v5198 = vunpack.c.h.b16 %v3712
    %v5199 = vunpack.c.l.b16 %v3713
    %v5200 = vunpack.c.h.b16 %v3713
    %v5201 = vunpack.c.l.b16 %v3714
    %v5202 = vunpack.c.h.b16 %v3714
    %v5203 = vunpack.c.l.b16 %v3715
    %v5204 = vunpack.c.h.b16 %v3715
    %v5205 = vunpack.c.l.b16 %v3716
    %v5206 = vunpack.c.h.b16 %v3716
    %v5207 = vunpack.c.l.b16 %v3717
    %v5208 = vunpack.c.h.b16 %v3717
    %v5209 = vunpack.c.l.b16 %v3718
    %v5210 = vunpack.c.h.b16 %v3718
    %v5211 = vunpack.c.l.b16 %v3719
    %v5212 = vunpack.c.h.b16 %v3719
    %v5213 = vunpack.c.l.b16 %v3720
    %v5214 = vunpack.c.h.b16 %v3720
    %v5215 = vunpack.c.l.b16 %v3721
    %v5216 = vunpack.c.h.b16 %v3721
    %v5217 = vunpack.c.l.b16 %v3722
    %v5218 = vunpack.c.h.b16 %v3722
    %v5219 = vunpack.c.l.b16 %v3723
    %v5220 = vunpack.c.h.b16 %v3723
    %v5221 = vunpack.c.l.b16 %v3724
    %v5222 = vunpack.c.h.b16 %v3724
    %v5223 = vunpack.c.l.b16 %v3725
    %v5224 = vunpack.c.h.b16 %v3725
    %v5225 = vunpack.c.l.b16 %v3726
    %v5226 = vunpack.c.h.b16 %v3726
    %v5227 = vunpack.c.l.b16 %v3727
    %v5228 = vunpack.c.h.b16 %v3727
    %v5229 = vunpack.c.l.b16 %v3728
    %v5230 = vunpack.c.h.b16 %v3728
    %v5231 = vunpack.c.l.b16 %v3729
    %v5232 = vunpack.c.h.b16 %v3729
    %v5233 = vunpack.c.l.b16 %v3730
    %v5234 = vunpack.c.h.b16 %v3730
    %v5235 = vunpack.c.l.b16 %v3731
    %v5236 = vunpack.c.h.b16 %v3731
    %v5237 = vunpack.c.l.b16 %v3732
    %v5238 = vunpack.c.h.b16 %v3732
    %v5239 = vunpack.c.l.b16 %v3733
    %v5240 = vunpack.c.h.b16 %v3733
    %v5241 = vunpack.c.l.b16 %v3734
    %v5242 = vunpack.c.h.b16 %v3734
    %v5243 = vunpack.c.l.b16 %v3735
    %v5244 = vunpack.c.h.b16 %v3735
    %v5245 = vunpack.c.l.b16 %v3736
    %v5246 = vunpack.c.h.b16 %v3736
    %v5247 = vunpack.c.l.b16 %v3737
    %v5248 = vunpack.c.h.b16 %v3737
    %v5249 = vunpack.c.l.b16 %v3738
    %v5250 = vunpack.c.h.b16 %v3738
    %v5251 = vunpack.c.l.b16 %v3739
    %v5252 = vunpack.c.h.b16 %v3739
    %v5253 = vunpack.c.l.b16 %v3740
    %v5254 = vunpack.c.h.b16 %v3740
    %v5255 = vunpack.c.l.b16 %v3741
    %v5256 = vunpack.c.h.b16 %v3741
    %v5257 = vunpack.c.l.b16 %v3742
    %v5258 = vunpack.c.h.b16 %v3742
    %v5259 = vunpack.c.l.b16 %v3743
    %v5260 = vunpack.c.h.b16 %v3743
    %v5261 = vunpack.c.l.b16 %v3744
    %v5262 = vunpack.c.h.b16 %v3744
    %v5263 = vunpack.c.l.b16 %v3745
    %v5264 = vunpack.c.h.b16 %v3745
    %v5265 = vunpack.c.l.b16 %v3746
    %v5266 = vunpack.c.h.b16 %v3746
    %v5267 = vunpack.c.l.b16 %v3747
    %v5268 = vunpack.c.h.b16 %v3747
    %v5269 = vunpack.c.l.b16 %v3748
    %v5270 = vunpack.c.h.b16 %v3748
    %v5271 = vunpack.c.l.b16 %v3749
    %v5272 = vunpack.c.h.b16 %v3749
    %v5273 = vunpack.c.l.b16 %v3750
    %v5274 = vunpack.c.h.b16 %v3750
    %v5275 = vunpack.c.l.b16 %v3751
    %v5276 = vunpack.c.h.b16 %v3751
    %v5277 = vunpack.c.l.b16 %v3752
    %v5278 = vunpack.c.h.b16 %v3752
    %v5279 = vunpack.c.l.b16 %v3753
    %v5280 = vunpack.c.h.b16 %v3753
    %v5281 = vunpack.c.l.b16 %v3754
    %v5282 = vunpack.c.h.b16 %v3754
    %v5283 = vunpack.c.l.b16 %v3755
    %v5284 = vunpack.c.h.b16 %v3755
    %v5285 = vunpack.c.l.b16 %v3756
    %v5286 = vunpack.c.h.b16 %v3756
    %v5287 = vunpack.c.l.b16 %v3757
    %v5288 = vunpack.c.h.b16 %v3757
    %v5289 = vunpack.c.l.b16 %v3758
    %v5290 = vunpack.c.h.b16 %v3758
    %v5291 = vunpack.c.l.b16 %v3759
    %v5292 = vunpack.c.h.b16 %v3759
    %v5293 = vunpack.c.l.b16 %v3760
    %v5294 = vunpack.c.h.b16 %v3760
    %v5295 = vunpack.c.l.b16 %v3761
    %v5296 = vunpack.c.h.b16 %v3761
    %v5297 = vunpack.c.l.b16 %v3762
    %v5298 = vunpack.c.h.b16 %v3762
    %v5299 = vunpack.c.l.b16 %v3763
    %v5300 = vunpack.c.h.b16 %v3763
    %v5301 = vunpack.c.l.b16 %v3764
    %v5302 = vunpack.c.h.b16 %v3764
    %v5303 = vunpack.c.l.b16 %v3765
    %v5304 = vunpack.c.h.b16 %v3765
    %v5305 = vunpack.c.l.b16 %v3766
    %v5306 = vunpack.c.h.b16 %v3766
    %v5307 = vunpack.c.l.b16 %v3767
    %v5308 = vunpack.c.h.b16 %v3767
    %v5309 = vunpack.c.l.b16 %v3768
    %v5310 = vunpack.c.h.b16 %v3768
    %v5311 = vunpack.c.l.b16 %v3769
    %v5312 = vunpack.c.h.b16 %v3769
    %v5313 = vunpack.c.l.b16 %v3770
    %v5314 = vunpack.c.h.b16 %v3770
    %v5315 = vunpack.c.l.b16 %v3771
    %v5316 = vunpack.c.h.b16 %v3771
    %v5317 = vunpack.c.l.b16 %v3772
    %v5318 = vunpack.c.h.b16 %v3772
    %v5319 = vunpack.c.l.b16 %v3773
    %v5320 = vunpack.c.h.b16 %v3773
    %v5321 = vunpack.c.l.b16 %v3774
    %v5322 = vunpack.c.h.b16 %v3774
    %v5323 = vunpack.c.l.b16 %v3775
    %v5324 = vunpack.c.h.b16 %v3775
    %v5325 = vunpack.c.l.b16 %v3776
    %v5326 = vunpack.c.h.b16 %v3776
    %v5327 = vunpack.c.l.b16 %v3777
    %v5328 = vunpack.c.h.b16 %v3777
    %v5329 = vunpack.c.l.b16 %v3778
    %v5330 = vunpack.c.h.b16 %v3778
    %v5331 = vunpack.c.l.b16 %v3779
    %v5332 = vunpack.c.h.b16 %v3779
    %v5333 = vunpack.c.l.b16 %v3780
    %v5334 = vunpack.c.h.b16 %v3780
    %v5335 = vunpack.c.l.b16 %v3781
    %v5336 = vunpack.c.h.b16 %v3781
    %v5337 = vunpack.c.l.b16 %v3782
    %v5338 = vunpack.c.h.b16 %v3782
    %v5339 = vunpack.c.l.b16 %v3783
    %v5340 = vunpack.c.h.b16 %v3783
    %v5341 = vunpack.c.l.b16 %v3784
    %v5342 = vunpack.c.h.b16 %v3784
    %v5343 = vunpack.c.l.b16 %v3785
    %v5344 = vunpack.c.h.b16 %v3785
    %v5345 = vunpack.c.l.b16 %v3786
    %v5346 = vunpack.c.h.b16 %v3786
    %v5347 = vunpack.c.l.b16 %v3787
    %v5348 = vunpack.c.h.b16 %v3787
    %v5349 = vunpack.c.l.b16 %v3788
    %v5350 = vunpack.c.h.b16 %v3788
    %v5351 = vunpack.c.l.b16 %v3789
    %v5352 = vunpack.c.h.b16 %v3789
    %v5353 = vunpack.c.l.b16 %v3790
    %v5354 = vunpack.c.h.b16 %v3790
    %v5355 = vunpack.c.l.b16 %v3791
    %v5356 = vunpack.c.h.b16 %v3791
    %v5357 = vunpack.c.l.b16 %v3792
    %v5358 = vunpack.c.h.b16 %v3792
    %v5359 = vunpack.c.l.b16 %v3793
    %v5360 = vunpack.c.h.b16 %v3793
    %v5361 = vunpack.c.l.b16 %v3794
    %v5362 = vunpack.c.h.b16 %v3794
    %v5363 = vunpack.c.l.b16 %v3795
    %v5364 = vunpack.c.h.b16 %v3795
    %v5365 = vunpack.c.l.b16 %v3796
    %v5366 = vunpack.c.h.b16 %v3796
    %v5367 = vunpack.c.l.b16 %v3797
    %v5368 = vunpack.c.h.b16 %v3797
    %v5369 = vunpack.c.l.b16 %v3798
    %v5370 = vunpack.c.h.b16 %v3798
    %v5371 = vunpack.c.l.b16 %v3799
    %v5372 = vunpack.c.h.b16 %v3799
    %v5373 = vunpack.c.l.b16 %v3800
    %v5374 = vunpack.c.h.b16 %v3800
    %v5375 = vunpack.c.l.b16 %v3801
    %v5376 = vunpack.c.h.b16 %v3801
    %v5377 = vunpack.c.l.b16 %v3802
    %v5378 = vunpack.c.h.b16 %v3802
    %v5379 = vunpack.c.l.b16 %v3803
    %v5380 = vunpack.c.h.b16 %v3803
    %v5381 = vunpack.c.l.b16 %v3804
    %v5382 = vunpack.c.h.b16 %v3804
    %v5383 = vpack.c.b16 %v4367, %v4359
    %v5384 = vpack.c.b16 %v4368, %v4360
    %v5385 = vpack.c.b16 %v4369, %v4361
    %v5386 = vpack.c.b16 %v4370, %v4362
    %v5387 = vpack.c.b16 %v4371, %v4363
    %v5388 = vpack.c.b16 %v4372, %v4364
    %v5389 = vpack.c.b16 %v4373, %v4365
    %v5390 = vpack.c.b16 %v4374, %v4366
    %v5391 = vpack.c.b16 %v4383, %v4375
    %v5392 = vpack.c.b16 %v4384, %v4376
    %v5393 = vpack.c.b16 %v4385, %v4377
    %v5394 = vpack.c.b16 %v4386, %v4378
    %v5395 = vpack.c.b16 %v4387, %v4379
    %v5396 = vpack.c.b16 %v4388, %v4380
    %v5397 = vpack.c.b16 %v4389, %v4381
    %v5398 = vpack.c.b16 %v4390, %v4382
    %v5399 = vpack.c.b16 %v4399, %v4391
    %v5400 = vpack.c.b16 %v4400, %v4392
    %v5401 = vpack.c.b16 %v4401, %v4393
    %v5402 = vpack.c.b16 %v4402, %v4394
    %v5403 = vpack.c.b16 %v4403, %v4395
    %v5404 = vpack.c.b16 %v4404, %v4396
    %v5405 = vpack.c.b16 %v4405, %v4397
    %v5406 = vpack.c.b16 %v4406, %v4398
    %v5407 = vpack.c.b16 %v4415, %v4407
    %v5408 = vpack.c.b16 %v4416, %v4408
    %v5409 = vpack.c.b16 %v4417, %v4409
    %v5410 = vpack.c.b16 %v4418, %v4410
    %v5411 = vpack.c.b16 %v4419, %v4411
    %v5412 = vpack.c.b16 %v4420, %v4412
    %v5413 = vpack.c.b16 %v4421, %v4413
    %v5414 = vpack.c.b16 %v4422, %v4414
    %v5415 = vpack.c.b16 %v4431, %v4423
    %v5416 = vpack.c.b16 %v4432, %v4424
    %v5417 = vpack.c.b16 %v4433, %v4425
    %v5418 = vpack.c.b16 %v4434, %v4426
    %v5419 = vpack.c.b16 %v4435, %v4427
    %v5420 = vpack.c.b16 %v4436, %v4428
    %v5421 = vpack.c.b16 %v4437, %v4429
    %v5422 = vpack.c.b16 %v4438, %v4430
    %v5423 = vpack.c.b16 %v4447, %v4439
    %v5424 = vpack.c.b16 %v4448, %v4440
    %v5425 = vpack.c.b16 %v4449, %v4441
    %v5426 = vpack.c.b16 %v4450, %v4442
    %v5427 = vpack.c.b16 %v4451, %v4443
    %v5428 = vpack.c.b16 %v4452, %v4444
    %v5429 = vpack.c.b16 %v4453, %v4445
    %v5430 = vpack.c.b16 %v4454, %v4446
    %v5431 = vpack.c.b16 %v4463, %v4455
    %v5432 = vpack.c.b16 %v4464, %v4456
    %v5433 = vpack.c.b16 %v4465, %v4457
    %v5434 = vpack.c.b16 %v4466, %v4458
    %v5435 = vpack.c.b16 %v4467, %v4459
    %v5436 = vpack.c.b16 %v4468, %v4460
    %v5437 = vpack.c.b16 %v4469, %v4461
    %v5438 = vpack.c.b16 %v4470, %v4462
    %v5439 = vpack.c.b16 %v4479, %v4471
    %v5440 = vpack.c.b16 %v4480, %v4472
    %v5441 = vpack.c.b16 %v4481, %v4473
    %v5442 = vpack.c.b16 %v4482, %v4474
    %v5443 = vpack.c.b16 %v4483, %v4475
    %v5444 = vpack.c.b16 %v4484, %v4476
    %v5445 = vpack.c.b16 %v4485, %v4477
    %v5446 = vpack.c.b16 %v4486, %v4478
    %v5447 = vpack.c.b16 %v4495, %v4487
    %v5448 = vpack.c.b16 %v4496, %v4488
    %v5449 = vpack.c.b16 %v4497, %v4489
    %v5450 = vpack.c.b16 %v4498, %v4490
    %v5451 = vpack.c.b16 %v4499, %v4491
    %v5452 = vpack.c.b16 %v4500, %v4492
    %v5453 = vpack.c.b16 %v4501, %v4493
    %v5454 = vpack.c.b16 %v4502, %v4494
    %v5455 = vpack.c.b16 %v4511, %v4503
    %v5456 = vpack.c.b16 %v4512, %v4504
    %v5457 = vpack.c.b16 %v4513, %v4505
    %v5458 = vpack.c.b16 %v4514, %v4506
    %v5459 = vpack.c.b16 %v4515, %v4507
    %v5460 = vpack.c.b16 %v4516, %v4508
    %v5461 = vpack.c.b16 %v4517, %v4509
    %v5462 = vpack.c.b16 %v4518, %v4510
    %v5463 = vpack.c.b16 %v4527, %v4519
    %v5464 = vpack.c.b16 %v4528, %v4520
    %v5465 = vpack.c.b16 %v4529, %v4521
    %v5466 = vpack.c.b16 %v4530, %v4522
    %v5467 = vpack.c.b16 %v4531, %v4523
    %v5468 = vpack.c.b16 %v4532, %v4524
    %v5469 = vpack.c.b16 %v4533, %v4525
    %v5470 = vpack.c.b16 %v4534, %v4526
    %v5471 = vpack.c.b16 %v4543, %v4535
    %v5472 = vpack.c.b16 %v4544, %v4536
    %v5473 = vpack.c.b16 %v4545, %v4537
    %v5474 = vpack.c.b16 %v4546, %v4538
    %v5475 = vpack.c.b16 %v4547, %v4539
    %v5476 = vpack.c.b16 %v4548, %v4540
    %v5477 = vpack.c.b16 %v4549, %v4541
    %v5478 = vpack.c.b16 %v4550, %v4542
    %v5479 = vpack.c.b16 %v4559, %v4551
    %v5480 = vpack.c.b16 %v4560, %v4552
    %v5481 = vpack.c.b16 %v4561, %v4553
    %v5482 = vpack.c.b16 %v4562, %v4554
    %v5483 = vpack.c.b16 %v4563, %v4555
    %v5484 = vpack.c.b16 %v4564, %v4556
    %v5485 = vpack.c.b16 %v4565, %v4557
    %v5486 = vpack.c.b16 %v4566, %v4558
    %v5487 = vpack.c.b16 %v4575, %v4567
    %v5488 = vpack.c.b16 %v4576, %v4568
    %v5489 = vpack.c.b16 %v4577, %v4569
    %v5490 = vpack.c.b16 %v4578, %v4570
    %v5491 = vpack.c.b16 %v4579, %v4571
    %v5492 = vpack.c.b16 %v4580, %v4572
    %v5493 = vpack.c.b16 %v4581, %v4573
    %v5494 = vpack.c.b16 %v4582, %v4574
    %v5495 = vpack.c.b16 %v4591, %v4583
    %v5496 = vpack.c.b16 %v4592, %v4584
    %v5497 = vpack.c.b16 %v4593, %v4585
    %v5498 = vpack.c.b16 %v4594, %v4586
    %v5499 = vpack.c.b16 %v4595, %v4587
    %v5500 = vpack.c.b16 %v4596, %v4588
    %v5501 = vpack.c.b16 %v4597, %v4589
    %v5502 = vpack.c.b16 %v4598, %v4590
    %v5503 = vpack.c.b16 %v4607, %v4599
    %v5504 = vpack.c.b16 %v4608, %v4600
    %v5505 = vpack.c.b16 %v4609, %v4601
    %v5506 = vpack.c.b16 %v4610, %v4602
    %v5507 = vpack.c.b16 %v4611, %v4603
    %v5508 = vpack.c.b16 %v4612, %v4604
    %v5509 = vpack.c.b16 %v4613, %v4605
    %v5510 = vpack.c.b16 %v4614, %v4606
    %v5511 = vpack.c.b16 %v4623, %v4615
    %v5512 = vpack.c.b16 %v4624, %v4616
    %v5513 = vpack.c.b16 %v4625, %v4617
    %v5514 = vpack.c.b16 %v4626, %v4618
    %v5515 = vpack.c.b16 %v4627, %v4619
    %v5516 = vpack.c.b16 %v4628, %v4620
    %v5517 = vpack.c.b16 %v4629, %v4621
    %v5518 = vpack.c.b16 %v4630, %v4622
    %v5519 = vpack.c.b16 %v4639, %v4631
    %v5520 = vpack.c.b16 %v4640, %v4632
    %v5521 = vpack.c.b16 %v4641, %v4633
    %v5522 = vpack.c.b16 %v4642, %v4634
    %v5523 = vpack.c.b16 %v4643, %v4635
    %v5524 = vpack.c.b16 %v4644, %v4636
    %v5525 = vpack.c.b16 %v4645, %v4637
    %v5526 = vpack.c.b16 %v4646, %v4638
    %v5527 = vpack.c.b16 %v4655, %v4647
    %v5528 = vpack.c.b16 %v4656, %v4648
    %v5529 = vpack.c.b16 %v4657, %v4649
    %v5530 = vpack.c.b16 %v4658, %v4650
    %v5531 = vpack.c.b16 %v4659, %v4651
    %v5532 = vpack.c.b16 %v4660, %v4652
    %v5533 = vpack.c.b16 %v4661, %v4653
    %v5534 = vpack.c.b16 %v4662, %v4654
    %v5535 = vpack.c.b16 %v4671, %v4663
    %v5536 = vpack.c.b16 %v4672, %v4664
    %v5537 = vpack.c.b16 %v4673, %v4665
    %v5538 = vpack.c.b16 %v4674, %v4666
    %v5539 = vpack.c.b16 %v4675, %v4667
    %v5540 = vpack.c.b16 %v4676, %v4668
    %v5541 = vpack.c.b16 %v4677, %v4669
    %v5542 = vpack.c.b16 %v4678, %v4670
    %v5543 = vpack.c.b16 %v4687, %v4679
    %v5544 = vpack.c.b16 %v4688, %v4680
    %v5545 = vpack.c.b16 %v4689, %v4681
    %v5546 = vpack.c.b16 %v4690, %v4682
    %v5547 = vpack.c.b16 %v4691, %v4683
    %v5548 = vpack.c.b16 %v4692, %v4684
    %v5549 = vpack.c.b16 %v4693, %v4685
    %v5550 = vpack.c.b16 %v4694, %v4686
    %v5551 = vpack.c.b16 %v4703, %v4695
    %v5552 = vpack.c.b16 %v4704, %v4696
    %v5553 = vpack.c.b16 %v4705, %v4697
    %v5554 = vpack.c.b16 %v4706, %v4698
    %v5555 = vpack.c.b16 %v4707, %v4699
    %v5556 = vpack.c.b16 %v4708, %v4700
    %v5557 = vpack.c.b16 %v4709, %v4701
    %v5558 = vpack.c.b16 %v4710, %v4702
    %v5559 = vpack.c.b16 %v4719, %v4711
    %v5560 = vpack.c.b16 %v4720, %v4712
    %v5561 = vpack.c.b16 %v4721, %v4713
    %v5562 = vpack.c.b16 %v4722, %v4714
    %v5563 = vpack.c.b16 %v4723, %v4715
    %v5564 = vpack.c.b16 %v4724, %v4716
    %v5565 = vpack.c.b16 %v4725, %v4717
    %v5566 = vpack.c.b16 %v4726, %v4718
    %v5567 = vpack.c.b16 %v4735, %v4727
    %v5568 = vpack.c.b16 %v4736, %v4728
    %v5569 = vpack.c.b16 %v4737, %v4729
    %v5570 = vpack.c.b16 %v4738, %v4730
    %v5571 = vpack.c.b16 %v4739, %v4731
    %v5572 = vpack.c.b16 %v4740, %v4732
    %v5573 = vpack.c.b16 %v4741, %v4733
    %v5574 = vpack.c.b16 %v4742, %v4734
    %v5575 = vpack.c.b16 %v4751, %v4743
    %v5576 = vpack.c.b16 %v4752, %v4744
    %v5577 = vpack.c.b16 %v4753, %v4745
    %v5578 = vpack.c.b16 %v4754, %v4746
    %v5579 = vpack.c.b16 %v4755, %v4747
    %v5580 = vpack.c.b16 %v4756, %v4748
    %v5581 = vpack.c.b16 %v4757, %v4749
    %v5582 = vpack.c.b16 %v4758, %v4750
    %v5583 = vpack.c.b16 %v4767, %v4759
    %v5584 = vpack.c.b16 %v4768, %v4760
    %v5585 = vpack.c.b16 %v4769, %v4761
    %v5586 = vpack.c.b16 %v4770, %v4762
    %v5587 = vpack.c.b16 %v4771, %v4763
    %v5588 = vpack.c.b16 %v4772, %v4764
    %v5589 = vpack.c.b16 %v4773, %v4765
    %v5590 = vpack.c.b16 %v4774, %v4766
    %v5591 = vpack.c.b16 %v4783, %v4775
    %v5592 = vpack.c.b16 %v4784, %v4776
    %v5593 = vpack.c.b16 %v4785, %v4777
    %v5594 = vpack.c.b16 %v4786, %v4778
    %v5595 = vpack.c.b16 %v4787, %v4779
    %v5596 = vpack.c.b16 %v4788, %v4780
    %v5597 = vpack.c.b16 %v4789, %v4781
    %v5598 = vpack.c.b16 %v4790, %v4782
    %v5599 = vpack.c.b16 %v4799, %v4791
    %v5600 = vpack.c.b16 %v4800, %v4792
    %v5601 = vpack.c.b16 %v4801, %v4793
    %v5602 = vpack.c.b16 %v4802, %v4794
    %v5603 = vpack.c.b16 %v4803, %v4795
    %v5604 = vpack.c.b16 %v4804, %v4796
    %v5605 = vpack.c.b16 %v4805, %v4797
    %v5606 = vpack.c.b16 %v4806, %v4798
    %v5607 = vpack.c.b16 %v4815, %v4807
    %v5608 = vpack.c.b16 %v4816, %v4808
    %v5609 = vpack.c.b16 %v4817, %v4809
    %v5610 = vpack.c.b16 %v4818, %v4810
    %v5611 = vpack.c.b16 %v4819, %v4811
    %v5612 = vpack.c.b16 %v4820, %v4812
    %v5613 = vpack.c.b16 %v4821, %v4813
    %v5614 = vpack.c.b16 %v4822, %v4814
    %v5615 = vpack.c.b16 %v4831, %v4823
    %v5616 = vpack.c.b16 %v4832, %v4824
    %v5617 = vpack.c.b16 %v4833, %v4825
    %v5618 = vpack.c.b16 %v4834, %v4826
    %v5619 = vpack.c.b16 %v4835, %v4827
    %v5620 = vpack.c.b16 %v4836, %v4828
    %v5621 = vpack.c.b16 %v4837, %v4829
    %v5622 = vpack.c.b16 %v4838, %v4830
    %v5623 = vpack.c.b16 %v4847, %v4839
    %v5624 = vpack.c.b16 %v4848, %v4840
    %v5625 = vpack.c.b16 %v4849, %v4841
    %v5626 = vpack.c.b16 %v4850, %v4842
    %v5627 = vpack.c.b16 %v4851, %v4843
    %v5628 = vpack.c.b16 %v4852, %v4844
    %v5629 = vpack.c.b16 %v4853, %v4845
    %v5630 = vpack.c.b16 %v4854, %v4846
    %v5631 = vpack.c.b16 %v4863, %v4855
    %v5632 = vpack.c.b16 %v4864, %v4856
    %v5633 = vpack.c.b16 %v4865, %v4857
    %v5634 = vpack.c.b16 %v4866, %v4858
    %v5635 = vpack.c.b16 %v4867, %v4859
    %v5636 = vpack.c.b16 %v4868, %v4860
    %v5637 = vpack.c.b16 %v4869, %v4861
    %v5638 = vpack.c.b16 %v4870, %v4862
    %v5639 = vpack.c.b16 %v4879, %v4871
    %v5640 = vpack.c.b16 %v4880, %v4872
    %v5641 = vpack.c.b16 %v4881, %v4873
    %v5642 = vpack.c.b16 %v4882, %v4874
    %v5643 = vpack.c.b16 %v4883, %v4875
    %v5644 = vpack.c.b16 %v4884, %v4876
    %v5645 = vpack.c.b16 %v4885, %v4877
    %v5646 = vpack.c.b16 %v4886, %v4878
    %v5647 = vpack.c.b16 %v4895, %v4887
    %v5648 = vpack.c.b16 %v4896, %v4888
    %v5649 = vpack.c.b16 %v4897, %v4889
    %v5650 = vpack.c.b16 %v4898, %v4890
    %v5651 = vpack.c.b16 %v4899, %v4891
    %v5652 = vpack.c.b16 %v4900, %v4892
    %v5653 = vpack.c.b16 %v4901, %v4893
    %v5654 = vpack.c.b16 %v4902, %v4894
    %v5655 = vpack.c.b16 %v4911, %v4903
    %v5656 = vpack.c.b16 %v4912, %v4904
    %v5657 = vpack.c.b16 %v4913, %v4905
    %v5658 = vpack.c.b16 %v4914, %v4906
    %v5659 = vpack.c.b16 %v4915, %v4907
    %v5660 = vpack.c.b16 %v4916, %v4908
    %v5661 = vpack.c.b16 %v4917, %v4909
    %v5662 = vpack.c.b16 %v4918, %v4910
    %v5663 = vpack.c.b16 %v4927, %v4919
    %v5664 = vpack.c.b16 %v4928, %v4920
    %v5665 = vpack.c.b16 %v4929, %v4921
    %v5666 = vpack.c.b16 %v4930, %v4922
    %v5667 = vpack.c.b16 %v4931, %v4923
    %v5668 = vpack.c.b16 %v4932, %v4924
    %v5669 = vpack.c.b16 %v4933, %v4925
    %v5670 = vpack.c.b16 %v4934, %v4926
    %v5671 = vpack.c.b16 %v4943, %v4935
    %v5672 = vpack.c.b16 %v4944, %v4936
    %v5673 = vpack.c.b16 %v4945, %v4937
    %v5674 = vpack.c.b16 %v4946, %v4938
    %v5675 = vpack.c.b16 %v4947, %v4939
    %v5676 = vpack.c.b16 %v4948, %v4940
    %v5677 = vpack.c.b16 %v4949, %v4941
    %v5678 = vpack.c.b16 %v4950, %v4942
    %v5679 = vpack.c.b16 %v4959, %v4951
    %v5680 = vpack.c.b16 %v4960, %v4952
    %v5681 = vpack.c.b16 %v4961, %v4953
    %v5682 = vpack.c.b16 %v4962, %v4954
    %v5683 = vpack.c.b16 %v4963, %v4955
    %v5684 = vpack.c.b16 %v4964, %v4956
    %v5685 = vpack.c.b16 %v4965, %v4957
    %v5686 = vpack.c.b16 %v4966, %v4958
    %v5687 = vpack.c.b16 %v4975, %v4967
    %v5688 = vpack.c.b16 %v4976, %v4968
    %v5689 = vpack.c.b16 %v4977, %v4969
    %v5690 = vpack.c.b16 %v4978, %v4970
    %v5691 = vpack.c.b16 %v4979, %v4971
    %v5692 = vpack.c.b16 %v4980, %v4972
    %v5693 = vpack.c.b16 %v4981, %v4973
    %v5694 = vpack.c.b16 %v4982, %v4974
    %v5695 = vpack.c.b16 %v4991, %v4983
    %v5696 = vpack.c.b16 %v4992, %v4984
    %v5697 = vpack.c.b16 %v4993, %v4985
    %v5698 = vpack.c.b16 %v4994, %v4986
    %v5699 = vpack.c.b16 %v4995, %v4987
    %v5700 = vpack.c.b16 %v4996, %v4988
    %v5701 = vpack.c.b16 %v4997, %v4989
    %v5702 = vpack.c.b16 %v4998, %v4990
    %v5703 = vpack.c.b16 %v5007, %v4999
    %v5704 = vpack.c.b16 %v5008, %v5000
    %v5705 = vpack.c.b16 %v5009, %v5001
    %v5706 = vpack.c.b16 %v5010, %v5002
    %v5707 = vpack.c.b16 %v5011, %v5003
    %v5708 = vpack.c.b16 %v5012, %v5004
    %v5709 = vpack.c.b16 %v5013, %v5005
    %v5710 = vpack.c.b16 %v5014, %v5006
    %v5711 = vpack.c.b16 %v5023, %v5015
    %v5712 = vpack.c.b16 %v5024, %v5016
    %v5713 = vpack.c.b16 %v5025, %v5017
    %v5714 = vpack.c.b16 %v5026, %v5018
    %v5715 = vpack.c.b16 %v5027, %v5019
    %v5716 = vpack.c.b16 %v5028, %v5020
    %v5717 = vpack.c.b16 %v5029, %v5021
    %v5718 = vpack.c.b16 %v5030, %v5022
    %v5719 = vpack.c.b16 %v5039, %v5031
    %v5720 = vpack.c.b16 %v5040, %v5032
    %v5721 = vpack.c.b16 %v5041, %v5033
    %v5722 = vpack.c.b16 %v5042, %v5034
    %v5723 = vpack.c.b16 %v5043, %v5035
    %v5724 = vpack.c.b16 %v5044, %v5036
    %v5725 = vpack.c.b16 %v5045, %v5037
    %v5726 = vpack.c.b16 %v5046, %v5038
    %v5727 = vpack.c.b16 %v5055, %v5047
    %v5728 = vpack.c.b16 %v5056, %v5048
    %v5729 = vpack.c.b16 %v5057, %v5049
    %v5730 = vpack.c.b16 %v5058, %v5050
    %v5731 = vpack.c.b16 %v5059, %v5051
    %v5732 = vpack.c.b16 %v5060, %v5052
    %v5733 = vpack.c.b16 %v5061, %v5053
    %v5734 = vpack.c.b16 %v5062, %v5054
    %v5735 = vpack.c.b16 %v5071, %v5063
    %v5736 = vpack.c.b16 %v5072, %v5064
    %v5737 = vpack.c.b16 %v5073, %v5065
    %v5738 = vpack.c.b16 %v5074, %v5066
    %v5739 = vpack.c.b16 %v5075, %v5067
    %v5740 = vpack.c.b16 %v5076, %v5068
    %v5741 = vpack.c.b16 %v5077, %v5069
    %v5742 = vpack.c.b16 %v5078, %v5070
    %v5743 = vpack.c.b16 %v5087, %v5079
    %v5744 = vpack.c.b16 %v5088, %v5080
    %v5745 = vpack.c.b16 %v5089, %v5081
    %v5746 = vpack.c.b16 %v5090, %v5082
    %v5747 = vpack.c.b16 %v5091, %v5083
    %v5748 = vpack.c.b16 %v5092, %v5084
    %v5749 = vpack.c.b16 %v5093, %v5085
    %v5750 = vpack.c.b16 %v5094, %v5086
    %v5751 = vpack.c.b16 %v5103, %v5095
    %v5752 = vpack.c.b16 %v5104, %v5096
    %v5753 = vpack.c.b16 %v5105, %v5097
    %v5754 = vpack.c.b16 %v5106, %v5098
    %v5755 = vpack.c.b16 %v5107, %v5099
    %v5756 = vpack.c.b16 %v5108, %v5100
    %v5757 = vpack.c.b16 %v5109, %v5101
    %v5758 = vpack.c.b16 %v5110, %v5102
    %v5759 = vpack.c.b16 %v5119, %v5111
    %v5760 = vpack.c.b16 %v5120, %v5112
    %v5761 = vpack.c.b16 %v5121, %v5113
    %v5762 = vpack.c.b16 %v5122, %v5114
    %v5763 = vpack.c.b16 %v5123, %v5115
    %v5764 = vpack.c.b16 %v5124, %v5116
    %v5765 = vpack.c.b16 %v5125, %v5117
    %v5766 = vpack.c.b16 %v5126, %v5118
    %v5767 = vpack.c.b16 %v5135, %v5127
    %v5768 = vpack.c.b16 %v5136, %v5128
    %v5769 = vpack.c.b16 %v5137, %v5129
    %v5770 = vpack.c.b16 %v5138, %v5130
    %v5771 = vpack.c.b16 %v5139, %v5131
    %v5772 = vpack.c.b16 %v5140, %v5132
    %v5773 = vpack.c.b16 %v5141, %v5133
    %v5774 = vpack.c.b16 %v5142, %v5134
    %v5775 = vpack.c.b16 %v5151, %v5143
    %v5776 = vpack.c.b16 %v5152, %v5144
    %v5777 = vpack.c.b16 %v5153, %v5145
    %v5778 = vpack.c.b16 %v5154, %v5146
    %v5779 = vpack.c.b16 %v5155, %v5147
    %v5780 = vpack.c.b16 %v5156, %v5148
    %v5781 = vpack.c.b16 %v5157, %v5149
    %v5782 = vpack.c.b16 %v5158, %v5150
    %v5783 = vpack.c.b16 %v5167, %v5159
    %v5784 = vpack.c.b16 %v5168, %v5160
    %v5785 = vpack.c.b16 %v5169, %v5161
    %v5786 = vpack.c.b16 %v5170, %v5162
    %v5787 = vpack.c.b16 %v5171, %v5163
    %v5788 = vpack.c.b16 %v5172, %v5164
    %v5789 = vpack.c.b16 %v5173, %v5165
    %v5790 = vpack.c.b16 %v5174, %v5166
    %v5791 = vpack.c.b16 %v5183, %v5175
    %v5792 = vpack.c.b16 %v5184, %v5176
    %v5793 = vpack.c.b16 %v5185, %v5177
    %v5794 = vpack.c.b16 %v5186, %v5178
    %v5795 = vpack.c.b16 %v5187, %v5179
    %v5796 = vpack.c.b16 %v5188, %v5180
    %v5797 = vpack.c.b16 %v5189, %v5181
    %v5798 = vpack.c.b16 %v5190, %v5182
    %v5799 = vpack.c.b16 %v5199, %v5191
    %v5800 = vpack.c.b16 %v5200, %v5192
    %v5801 = vpack.c.b16 %v5201, %v5193
    %v5802 = vpack.c.b16 %v5202, %v5194
    %v5803 = vpack.c.b16 %v5203, %v5195
    %v5804 = vpack.c.b16 %v5204, %v5196
    %v5805 = vpack.c.b16 %v5205, %v5197
    %v5806 = vpack.c.b16 %v5206, %v5198
    %v5807 = vpack.c.b16 %v5215, %v5207
    %v5808 = vpack.c.b16 %v5216, %v5208
    %v5809 = vpack.c.b16 %v5217, %v5209
    %v5810 = vpack.c.b16 %v5218, %v5210
    %v5811 = vpack.c.b16 %v5219, %v5211
    %v5812 = vpack.c.b16 %v5220, %v5212
    %v5813 = vpack.c.b16 %v5221, %v5213
    %v5814 = vpack.c.b16 %v5222, %v5214
    %v5815 = vpack.c.b16 %v5231, %v5223
    %v5816 = vpack.c.b16 %v5232, %v5224
    %v5817 = vpack.c.b16 %v5233, %v5225
    %v5818 = vpack.c.b16 %v5234, %v5226
    %v5819 = vpack.c.b16 %v5235, %v5227
    %v5820 = vpack.c.b16 %v5236, %v5228
    %v5821 = vpack.c.b16 %v5237, %v5229
    %v5822 = vpack.c.b16 %v5238, %v5230
    %v5823 = vpack.c.b16 %v5247, %v5239
    %v5824 = vpack.c.b16 %v5248, %v5240
    %v5825 = vpack.c.b16 %v5249, %v5241
    %v5826 = vpack.c.b16 %v5250, %v5242
    %v5827 = vpack.c.b16 %v5251, %v5243
    %v5828 = vpack.c.b16 %v5252, %v5244
    %v5829 = vpack.c.b16 %v5253, %v5245
    %v5830 = vpack.c.b16 %v5254, %v5246
    %v5831 = vpack.c.b16 %v5263, %v5255
    %v5832 = vpack.c.b16 %v5264, %v5256
    %v5833 = vpack.c.b16 %v5265, %v5257
    %v5834 = vpack.c.b16 %v5266, %v5258
    %v5835 = vpack.c.b16 %v5267, %v5259
    %v5836 = vpack.c.b16 %v5268, %v5260
    %v5837 = vpack.c.b16 %v5269, %v5261
    %v5838 = vpack.c.b16 %v5270, %v5262
    %v5839 = vpack.c.b16 %v5279, %v5271
    %v5840 = vpack.c.b16 %v5280, %v5272
    %v5841 = vpack.c.b16 %v5281, %v5273
    %v5842 = vpack.c.b16 %v5282, %v5274
    %v5843 = vpack.c.b16 %v5283, %v5275
    %v5844 = vpack.c.b16 %v5284, %v5276
    %v5845 = vpack.c.b16 %v5285, %v5277
    %v5846 = vpack.c.b16 %v5286, %v5278
    %v5847 = vpack.c.b16 %v5295, %v5287
    %v5848 = vpack.c.b16 %v5296, %v5288
    %v5849 = vpack.c.b16 %v5297, %v5289
    %v5850 = vpack.c.b16 %v5298, %v5290
    %v5851 = vpack.c.b16 %v5299, %v5291
    %v5852 = vpack.c.b16 %v5300, %v5292
    %v5853 = vpack.c.b16 %v5301, %v5293
    %v5854 = vpack.c.b16 %v5302, %v5294
    %v5855 = vpack.c.b16 %v5311, %v5303
    %v5856 = vpack.c.b16 %v5312, %v5304
    %v5857 = vpack.c.b16 %v5313, %v5305
    %v5858 = vpack.c.b16 %v5314, %v5306
    %v5859 = vpack.c.b16 %v5315, %v5307
    %v5860 = vpack.c.b16 %v5316, %v5308
    %v5861 = vpack.c.b16 %v5317, %v5309
    %v5862 = vpack.c.b16 %v5318, %v5310
    %v5863 = vpack.c.b16 %v5327, %v5319
    %v5864 = vpack.c.b16 %v5328, %v5320
    %v5865 = vpack.c.b16 %v5329, %v5321
    %v5866 = vpack.c.b16 %v5330, %v5322
    %v5867 = vpack.c.b16 %v5331, %v5323
    %v5868 = vpack.c.b16 %v5332, %v5324
    %v5869 = vpack.c.b16 %v5333, %v5325
    %v5870 = vpack.c.b16 %v5334, %v5326
    %v5871 = vpack.c.b16 %v5343, %v5335
    %v5872 = vpack.c.b16 %v5344, %v5336
    %v5873 = vpack.c.b16 %v5345, %v5337
    %v5874 = vpack.c.b16 %v5346, %v5338
    %v5875 = vpack.c.b16 %v5347, %v5339
    %v5876 = vpack.c.b16 %v5348, %v5340
    %v5877 = vpack.c.b16 %v5349, %v5341
    %v5878 = vpack.c.b16 %v5350, %v5342
    %v5879 = vpack.c.b16 %v5359, %v5351
    %v5880 = vpack.c.b16 %v5360, %v5352
    %v5881 = vpack.c.b16 %v5361, %v5353
    %v5882 = vpack.c.b16 %v5362, %v5354
    %v5883 = vpack.c.b16 %v5363, %v5355
    %v5884 = vpack.c.b16 %v5364, %v5356
    %v5885 = vpack.c.b16 %v5365, %v5357
    %v5886 = vpack.c.b16 %v5366, %v5358
    %v5887 = vpack.c.b16 %v5375, %v5367
    %v5888 = vpack.c.b16 %v5376, %v5368
    %v5889 = vpack.c.b16 %v5377, %v5369
    %v5890 = vpack.c.b16 %v5378, %v5370
    %v5891 = vpack.c.b16 %v5379, %v5371
    %v5892 = vpack.c.b16 %v5380, %v5372
    %v5893 = vpack.c.b16 %v5381, %v5373
    %v5894 = vpack.c.b16 %v5382, %v5374
    %6407 = vmatprep.subr.bf16.mxu0 %v5384
    %6408 = vmatpush1.bf16.msra.mxu0 %v5383
    %6409 = vmatprep.subr.bf16.mxu0 %v5392
    %6410 = vmatpush1.bf16.msra.mxu0 %v5391
    %6411 = vmatprep.subr.bf16.mxu0 %v5400
    %6412 = vmatpush1.bf16.msra.mxu0 %v5399
    %6413 = vmatprep.subr.bf16.mxu0 %v5408
    %6414 = vmatpush1.bf16.msra.mxu0 %v5407
    %6415 = vmatprep.subr.bf16.mxu0 %v5416
    %6416 = vmatpush1.bf16.msra.mxu0 %v5415
    %6417 = vmatprep.subr.bf16.mxu0 %v5424
    %6418 = vmatpush1.bf16.msra.mxu0 %v5423
    %6419 = vmatprep.subr.bf16.mxu0 %v5432
    %6420 = vmatpush1.bf16.msra.mxu0 %v5431
    %6421 = vmatprep.subr.bf16.mxu0 %v5440
    %6422 = vmatpush1.bf16.msra.mxu0 %v5439
    %6423 = vmatprep.subr.bf16.mxu0 %v5448
    %6424 = vmatpush1.bf16.msra.mxu0 %v5447
    %6425 = vmatprep.subr.bf16.mxu0 %v5456
    %6426 = vmatpush1.bf16.msra.mxu0 %v5455
    %6427 = vmatprep.subr.bf16.mxu0 %v5464
    %6428 = vmatpush1.bf16.msra.mxu0 %v5463
    %6429 = vmatprep.subr.bf16.mxu0 %v5472
    %6430 = vmatpush1.bf16.msra.mxu0 %v5471
    %6431 = vmatprep.subr.bf16.mxu0 %v5480
    %6432 = vmatpush1.bf16.msra.mxu0 %v5479
    %6433 = vmatprep.subr.bf16.mxu0 %v5488
    %6434 = vmatpush1.bf16.msra.mxu0 %v5487
    %6435 = vmatprep.subr.bf16.mxu0 %v5496
    %6436 = vmatpush1.bf16.msra.mxu0 %v5495
    %6437 = vmatprep.subr.bf16.mxu0 %v5504
    %6438 = vmatpush1.bf16.msra.mxu0 %v5503
    %6439 = vmatprep.mubr.bf16.mxu0 %v3286
    %6440 = vmatmul.mubr.bf16.gmra.mrb[0].mxu0 %v3285
    %v6441 = vpop.f32.mrb[0].mxu0
    %v6442 = vadd.f32 %v3810, %v6441
    %v6443 = vpop.f32.mrb[0].mxu0
    %v6444 = vadd.f32 %v3814, %v6443
    %v6445 = vpop.f32.mrb[0].mxu0
    %v6446 = vpop.f32.mrb[0].mxu0
    %6447 = vdwg.mxu0
    %6448 = vmatprep.subr.bf16.mxu0 %v5512
    %6449 = vmatpush1.bf16.msra.mxu0 %v5511
    %6450 = vmatprep.subr.bf16.mxu0 %v5520
    %6451 = vmatpush1.bf16.msra.mxu0 %v5519
    %6452 = vmatprep.subr.bf16.mxu0 %v5528
    %6453 = vmatpush1.bf16.msra.mxu0 %v5527
    %6454 = vmatprep.subr.bf16.mxu0 %v5536
    %6455 = vmatpush1.bf16.msra.mxu0 %v5535
    %6456 = vmatprep.subr.bf16.mxu0 %v5544
    %6457 = vmatpush1.bf16.msra.mxu0 %v5543
    %6458 = vmatprep.subr.bf16.mxu0 %v5552
    %6459 = vmatpush1.bf16.msra.mxu0 %v5551
    %6460 = vmatprep.subr.bf16.mxu0 %v5560
    %6461 = vmatpush1.bf16.msra.mxu0 %v5559
    %6462 = vmatprep.subr.bf16.mxu0 %v5568
    %6463 = vmatpush1.bf16.msra.mxu0 %v5567
    %6464 = vmatprep.subr.bf16.mxu0 %v5576
    %6465 = vmatpush1.bf16.msra.mxu0 %v5575
    %6466 = vmatprep.subr.bf16.mxu0 %v5584
    %6467 = vmatpush1.bf16.msra.mxu0 %v5583
    %6468 = vmatprep.subr.bf16.mxu0 %v5592
    %6469 = vmatpush1.bf16.msra.mxu0 %v5591
    %6470 = vmatprep.subr.bf16.mxu0 %v5600
    %6471 = vmatpush1.bf16.msra.mxu0 %v5599
    %6472 = vmatprep.subr.bf16.mxu0 %v5608
    %6473 = vmatpush1.bf16.msra.mxu0 %v5607
    %6474 = vmatprep.subr.bf16.mxu0 %v5616
    %6475 = vmatpush1.bf16.msra.mxu0 %v5615
    %6476 = vmatprep.subr.bf16.mxu0 %v5624
    %6477 = vmatpush1.bf16.msra.mxu0 %v5623
    %6478 = vmatprep.subr.bf16.mxu0 %v5632
    %6479 = vmatpush1.bf16.msra.mxu0 %v5631
    %6480 = vmatprep.mubr.bf16.mxu0 %v3288
    %6481 = vmatmul.mubr.bf16.gmra.mrb[0].mxu0 %v3287
    %v6482 = vpop.f32.mrb[0].mxu0
    %v6483 = vadd.f32 %v6442, %v6482
    %v6484 = vpop.f32.mrb[0].mxu0
    %v6485 = vadd.f32 %v6444, %v6484
    %v6486 = vpop.f32.mrb[0].mxu0
    %v6487 = vpop.f32.mrb[0].mxu0
    %6488 = vdwg.mxu0
    %6489 = vmatprep.subr.bf16.mxu0 %v5640
    %6490 = vmatpush1.bf16.msra.mxu0 %v5639
    %6491 = vmatprep.subr.bf16.mxu0 %v5648
    %6492 = vmatpush1.bf16.msra.mxu0 %v5647
    %6493 = vmatprep.subr.bf16.mxu0 %v5656
    %6494 = vmatpush1.bf16.msra.mxu0 %v5655
    %6495 = vmatprep.subr.bf16.mxu0 %v5664
    %6496 = vmatpush1.bf16.msra.mxu0 %v5663
    %6497 = vmatprep.subr.bf16.mxu0 %v5672
    %6498 = vmatpush1.bf16.msra.mxu0 %v5671
    %6499 = vmatprep.subr.bf16.mxu0 %v5680
    %6500 = vmatpush1.bf16.msra.mxu0 %v5679
    %6501 = vmatprep.subr.bf16.mxu0 %v5688
    %6502 = vmatpush1.bf16.msra.mxu0 %v5687
    %6503 = vmatprep.subr.bf16.mxu0 %v5696
    %6504 = vmatpush1.bf16.msra.mxu0 %v5695
    %6505 = vmatprep.subr.bf16.mxu0 %v5704
    %6506 = vmatpush1.bf16.msra.mxu0 %v5703
    %6507 = vmatprep.subr.bf16.mxu0 %v5712
    %6508 = vmatpush1.bf16.msra.mxu0 %v5711
    %6509 = vmatprep.subr.bf16.mxu0 %v5720
    %6510 = vmatpush1.bf16.msra.mxu0 %v5719
    %6511 = vmatprep.subr.bf16.mxu0 %v5728
    %6512 = vmatpush1.bf16.msra.mxu0 %v5727
    %6513 = vmatprep.subr.bf16.mxu0 %v5736
    %6514 = vmatpush1.bf16.msra.mxu0 %v5735
    %6515 = vmatprep.subr.bf16.mxu0 %v5744
    %6516 = vmatpush1.bf16.msra.mxu0 %v5743
    %6517 = vmatprep.subr.bf16.mxu0 %v5752
    %6518 = vmatpush1.bf16.msra.mxu0 %v5751
    %6519 = vmatprep.subr.bf16.mxu0 %v5760
    %6520 = vmatpush1.bf16.msra.mxu0 %v5759
    %6521 = vmatprep.mubr.bf16.mxu0 %v3290
    %6522 = vmatmul.mubr.bf16.gmra.mrb[0].mxu0 %v3289
    %v6523 = vpop.f32.mrb[0].mxu0
    %v6524 = vadd.f32 %v6483, %v6523
    %v6525 = vpop.f32.mrb[0].mxu0
    %v6526 = vadd.f32 %v6485, %v6525
    %v6527 = vpop.f32.mrb[0].mxu0
    %v6528 = vpop.f32.mrb[0].mxu0
    %6529 = vdwg.mxu0
    %6530 = vmatprep.subr.bf16.mxu0 %v5768
    %6531 = vmatpush1.bf16.msra.mxu0 %v5767
    %6532 = vmatprep.subr.bf16.mxu0 %v5776
    %6533 = vmatpush1.bf16.msra.mxu0 %v5775
    %6534 = vmatprep.subr.bf16.mxu0 %v5784
    %6535 = vmatpush1.bf16.msra.mxu0 %v5783
    %6536 = vmatprep.subr.bf16.mxu0 %v5792
    %6537 = vmatpush1.bf16.msra.mxu0 %v5791
    %6538 = vmatprep.subr.bf16.mxu0 %v5800
    %6539 = vmatpush1.bf16.msra.mxu0 %v5799
    %6540 = vmatprep.subr.bf16.mxu0 %v5808
    %6541 = vmatpush1.bf16.msra.mxu0 %v5807
    %6542 = vmatprep.subr.bf16.mxu0 %v5816
    %6543 = vmatpush1.bf16.msra.mxu0 %v5815
    %6544 = vmatprep.subr.bf16.mxu0 %v5824
    %6545 = vmatpush1.bf16.msra.mxu0 %v5823
    %6546 = vmatprep.subr.bf16.mxu0 %v5832
    %6547 = vmatpush1.bf16.msra.mxu0 %v5831
    %6548 = vmatprep.subr.bf16.mxu0 %v5840
    %6549 = vmatpush1.bf16.msra.mxu0 %v5839
    %6550 = vmatprep.subr.bf16.mxu0 %v5848
    %6551 = vmatpush1.bf16.msra.mxu0 %v5847
    %6552 = vmatprep.subr.bf16.mxu0 %v5856
    %6553 = vmatpush1.bf16.msra.mxu0 %v5855
    %6554 = vmatprep.subr.bf16.mxu0 %v5864
    %6555 = vmatpush1.bf16.msra.mxu0 %v5863
    %6556 = vmatprep.subr.bf16.mxu0 %v5872
    %6557 = vmatpush1.bf16.msra.mxu0 %v5871
    %6558 = vmatprep.subr.bf16.mxu0 %v5880
    %6559 = vmatpush1.bf16.msra.mxu0 %v5879
    %6560 = vmatprep.subr.bf16.mxu0 %v5888
    %6561 = vmatpush1.bf16.msra.mxu0 %v5887
    %6562 = vmatprep.mubr.bf16.mxu0 %v3292
    %6563 = vmatmul.mubr.bf16.gmra.mrb[0].mxu0 %v3291
    %v6564 = vpop.f32.mrb[0].mxu0
    %v6565 = vadd.f32 %v6524, %v6564
    %v6566 = vpop.f32.mrb[0].mxu0
    %v6567 = vadd.f32 %v6526, %v6566
    %v6568 = vpop.f32.mrb[0].mxu0
    %v6569 = vpop.f32.mrb[0].mxu0
    %6570 = vdwg.mxu0
    %6571 = vmatprep.subr.bf16.mxu0 %v5386
    %6572 = vmatpush1.bf16.msra.mxu0 %v5385
    %6573 = vmatprep.subr.bf16.mxu0 %v5394
    %6574 = vmatpush1.bf16.msra.mxu0 %v5393
    %6575 = vmatprep.subr.bf16.mxu0 %v5402
    %6576 = vmatpush1.bf16.msra.mxu0 %v5401
    %6577 = vmatprep.subr.bf16.mxu0 %v5410
    %6578 = vmatpush1.bf16.msra.mxu0 %v5409
    %6579 = vmatprep.subr.bf16.mxu0 %v5418
    %6580 = vmatpush1.bf16.msra.mxu0 %v5417
    %6581 = vmatprep.subr.bf16.mxu0 %v5426
    %6582 = vmatpush1.bf16.msra.mxu0 %v5425
    %6583 = vmatprep.subr.bf16.mxu0 %v5434
    %6584 = vmatpush1.bf16.msra.mxu0 %v5433
    %6585 = vmatprep.subr.bf16.mxu0 %v5442
    %6586 = vmatpush1.bf16.msra.mxu0 %v5441
    %6587 = vmatprep.subr.bf16.mxu0 %v5450
    %6588 = vmatpush1.bf16.msra.mxu0 %v5449
    %6589 = vmatprep.subr.bf16.mxu0 %v5458
    %6590 = vmatpush1.bf16.msra.mxu0 %v5457
    %6591 = vmatprep.subr.bf16.mxu0 %v5466
    %6592 = vmatpush1.bf16.msra.mxu0 %v5465
    %6593 = vmatprep.subr.bf16.mxu0 %v5474
    %6594 = vmatpush1.bf16.msra.mxu0 %v5473
    %6595 = vmatprep.subr.bf16.mxu0 %v5482
    %6596 = vmatpush1.bf16.msra.mxu0 %v5481
    %6597 = vmatprep.subr.bf16.mxu0 %v5490
    %6598 = vmatpush1.bf16.msra.mxu0 %v5489
    %6599 = vmatprep.subr.bf16.mxu0 %v5498
    %6600 = vmatpush1.bf16.msra.mxu0 %v5497
    %6601 = vmatprep.subr.bf16.mxu0 %v5506
    %6602 = vmatpush1.bf16.msra.mxu0 %v5505
    %6603 = vmatprep.mubr.bf16.mxu0 %v3286
    %6604 = vmatmul.mubr.bf16.gmra.mrb[0].mxu0 %v3285
    %v6605 = vpop.f32.mrb[0].mxu0
    %v6606 = vadd.f32 %v3818, %v6605
    %v6607 = vpop.f32.mrb[0].mxu0
    %v6608 = vadd.f32 %v3822, %v6607
    %v6609 = vpop.f32.mrb[0].mxu0
    %v6610 = vpop.f32.mrb[0].mxu0
    %6611 = vdwg.mxu0
    %6612 = vmatprep.subr.bf16.mxu0 %v5514
    %6613 = vmatpush1.bf16.msra.mxu0 %v5513
    %6614 = vmatprep.subr.bf16.mxu0 %v5522
    %6615 = vmatpush1.bf16.msra.mxu0 %v5521
    %6616 = vmatprep.subr.bf16.mxu0 %v5530
    %6617 = vmatpush1.bf16.msra.mxu0 %v5529
    %6618 = vmatprep.subr.bf16.mxu0 %v5538
    %6619 = vmatpush1.bf16.msra.mxu0 %v5537
    %6620 = vmatprep.subr.bf16.mxu0 %v5546
    %6621 = vmatpush1.bf16.msra.mxu0 %v5545
    %6622 = vmatprep.subr.bf16.mxu0 %v5554
    %6623 = vmatpush1.bf16.msra.mxu0 %v5553
    %6624 = vmatprep.subr.bf16.mxu0 %v5562
    %6625 = vmatpush1.bf16.msra.mxu0 %v5561
    %6626 = vmatprep.subr.bf16.mxu0 %v5570
    %6627 = vmatpush1.bf16.msra.mxu0 %v5569
    %6628 = vmatprep.subr.bf16.mxu0 %v5578
    %6629 = vmatpush1.bf16.msra.mxu0 %v5577
    %6630 = vmatprep.subr.bf16.mxu0 %v5586
    %6631 = vmatpush1.bf16.msra.mxu0 %v5585
    %6632 = vmatprep.subr.bf16.mxu0 %v5594
    %6633 = vmatpush1.bf16.msra.mxu0 %v5593
    %6634 = vmatprep.subr.bf16.mxu0 %v5602
    %6635 = vmatpush1.bf16.msra.mxu0 %v5601
    %6636 = vmatprep.subr.bf16.mxu0 %v5610
    %6637 = vmatpush1.bf16.msra.mxu0 %v5609
    %6638 = vmatprep.subr.bf16.mxu0 %v5618
    %6639 = vmatpush1.bf16.msra.mxu0 %v5617
    %6640 = vmatprep.subr.bf16.mxu0 %v5626
    %6641 = vmatpush1.bf16.msra.mxu0 %v5625
    %6642 = vmatprep.subr.bf16.mxu0 %v5634
    %6643 = vmatpush1.bf16.msra.mxu0 %v5633
    %6644 = vmatprep.mubr.bf16.mxu0 %v3288
    %6645 = vmatmul.mubr.bf16.gmra.mrb[0].mxu0 %v3287
    %v6646 = vpop.f32.mrb[0].mxu0
    %v6647 = vadd.f32 %v6606, %v6646
    %v6648 = vpop.f32.mrb[0].mxu0
    %v6649 = vadd.f32 %v6608, %v6648
    %v6650 = vpop.f32.mrb[0].mxu0
    %v6651 = vpop.f32.mrb[0].mxu0
    %6652 = vdwg.mxu0
    %6653 = vmatprep.subr.bf16.mxu0 %v5642
    %6654 = vmatpush1.bf16.msra.mxu0 %v5641
    %6655 = vmatprep.subr.bf16.mxu0 %v5650
    %6656 = vmatpush1.bf16.msra.mxu0 %v5649
    %6657 = vmatprep.subr.bf16.mxu0 %v5658
    %6658 = vmatpush1.bf16.msra.mxu0 %v5657
    %6659 = vmatprep.subr.bf16.mxu0 %v5666
    %6660 = vmatpush1.bf16.msra.mxu0 %v5665
    %6661 = vmatprep.subr.bf16.mxu0 %v5674
    %6662 = vmatpush1.bf16.msra.mxu0 %v5673
    %6663 = vmatprep.subr.bf16.mxu0 %v5682
    %6664 = vmatpush1.bf16.msra.mxu0 %v5681
    %6665 = vmatprep.subr.bf16.mxu0 %v5690
    %6666 = vmatpush1.bf16.msra.mxu0 %v5689
    %6667 = vmatprep.subr.bf16.mxu0 %v5698
    %6668 = vmatpush1.bf16.msra.mxu0 %v5697
    %6669 = vmatprep.subr.bf16.mxu0 %v5706
    %6670 = vmatpush1.bf16.msra.mxu0 %v5705
    %6671 = vmatprep.subr.bf16.mxu0 %v5714
    %6672 = vmatpush1.bf16.msra.mxu0 %v5713
    %6673 = vmatprep.subr.bf16.mxu0 %v5722
    %6674 = vmatpush1.bf16.msra.mxu0 %v5721
    %6675 = vmatprep.subr.bf16.mxu0 %v5730
    %6676 = vmatpush1.bf16.msra.mxu0 %v5729
    %6677 = vmatprep.subr.bf16.mxu0 %v5738
    %6678 = vmatpush1.bf16.msra.mxu0 %v5737
    %6679 = vmatprep.subr.bf16.mxu0 %v5746
    %6680 = vmatpush1.bf16.msra.mxu0 %v5745
    %6681 = vmatprep.subr.bf16.mxu0 %v5754
    %6682 = vmatpush1.bf16.msra.mxu0 %v5753
    %6683 = vmatprep.subr.bf16.mxu0 %v5762
    %6684 = vmatpush1.bf16.msra.mxu0 %v5761
    %6685 = vmatprep.mubr.bf16.mxu0 %v3290
    %6686 = vmatmul.mubr.bf16.gmra.mrb[0].mxu0 %v3289
    %v6687 = vpop.f32.mrb[0].mxu0
    %v6688 = vadd.f32 %v6647, %v6687
    %v6689 = vpop.f32.mrb[0].mxu0
    %v6690 = vadd.f32 %v6649, %v6689
    %v6691 = vpop.f32.mrb[0].mxu0
    %v6692 = vpop.f32.mrb[0].mxu0
    %6693 = vdwg.mxu0
    %6694 = vmatprep.subr.bf16.mxu0 %v5770
    %6695 = vmatpush1.bf16.msra.mxu0 %v5769
    %6696 = vmatprep.subr.bf16.mxu0 %v5778
    %6697 = vmatpush1.bf16.msra.mxu0 %v5777
    %6698 = vmatprep.subr.bf16.mxu0 %v5786
    %6699 = vmatpush1.bf16.msra.mxu0 %v5785
    %6700 = vmatprep.subr.bf16.mxu0 %v5794
    %6701 = vmatpush1.bf16.msra.mxu0 %v5793
    %6702 = vmatprep.subr.bf16.mxu0 %v5802
    %6703 = vmatpush1.bf16.msra.mxu0 %v5801
    %6704 = vmatprep.subr.bf16.mxu0 %v5810
    %6705 = vmatpush1.bf16.msra.mxu0 %v5809
    %6706 = vmatprep.subr.bf16.mxu0 %v5818
    %6707 = vmatpush1.bf16.msra.mxu0 %v5817
    %6708 = vmatprep.subr.bf16.mxu0 %v5826
    %6709 = vmatpush1.bf16.msra.mxu0 %v5825
    %6710 = vmatprep.subr.bf16.mxu0 %v5834
    %6711 = vmatpush1.bf16.msra.mxu0 %v5833
    %6712 = vmatprep.subr.bf16.mxu0 %v5842
    %6713 = vmatpush1.bf16.msra.mxu0 %v5841
    %6714 = vmatprep.subr.bf16.mxu0 %v5850
    %6715 = vmatpush1.bf16.msra.mxu0 %v5849
    %6716 = vmatprep.subr.bf16.mxu0 %v5858
    %6717 = vmatpush1.bf16.msra.mxu0 %v5857
    %6718 = vmatprep.subr.bf16.mxu0 %v5866
    %6719 = vmatpush1.bf16.msra.mxu0 %v5865
    %6720 = vmatprep.subr.bf16.mxu0 %v5874
    %6721 = vmatpush1.bf16.msra.mxu0 %v5873
    %6722 = vmatprep.subr.bf16.mxu0 %v5882
    %6723 = vmatpush1.bf16.msra.mxu0 %v5881
    %6724 = vmatprep.subr.bf16.mxu0 %v5890
    %6725 = vmatpush1.bf16.msra.mxu0 %v5889
    %6726 = vmatprep.mubr.bf16.mxu0 %v3292
    %6727 = vmatmul.mubr.bf16.gmra.mrb[0].mxu0 %v3291
    %v6728 = vpop.f32.mrb[0].mxu0
    %v6729 = vadd.f32 %v6688, %v6728
    %v6730 = vpop.f32.mrb[0].mxu0
    %v6731 = vadd.f32 %v6690, %v6730
    %v6732 = vpop.f32.mrb[0].mxu0
    %v6733 = vpop.f32.mrb[0].mxu0
    %6734 = vdwg.mxu0
    %6735 = vmatprep.subr.bf16.mxu0 %v5388
    %6736 = vmatpush1.bf16.msra.mxu0 %v5387
    %6737 = vmatprep.subr.bf16.mxu0 %v5396
    %6738 = vmatpush1.bf16.msra.mxu0 %v5395
    %6739 = vmatprep.subr.bf16.mxu0 %v5404
    %6740 = vmatpush1.bf16.msra.mxu0 %v5403
    %6741 = vmatprep.subr.bf16.mxu0 %v5412
    %6742 = vmatpush1.bf16.msra.mxu0 %v5411
    %6743 = vmatprep.subr.bf16.mxu0 %v5420
    %6744 = vmatpush1.bf16.msra.mxu0 %v5419
    %6745 = vmatprep.subr.bf16.mxu0 %v5428
    %6746 = vmatpush1.bf16.msra.mxu0 %v5427
    %6747 = vmatprep.subr.bf16.mxu0 %v5436
    %6748 = vmatpush1.bf16.msra.mxu0 %v5435
    %6749 = vmatprep.subr.bf16.mxu0 %v5444
    %6750 = vmatpush1.bf16.msra.mxu0 %v5443
    %6751 = vmatprep.subr.bf16.mxu0 %v5452
    %6752 = vmatpush1.bf16.msra.mxu0 %v5451
    %6753 = vmatprep.subr.bf16.mxu0 %v5460
    %6754 = vmatpush1.bf16.msra.mxu0 %v5459
    %6755 = vmatprep.subr.bf16.mxu0 %v5468
    %6756 = vmatpush1.bf16.msra.mxu0 %v5467
    %6757 = vmatprep.subr.bf16.mxu0 %v5476
    %6758 = vmatpush1.bf16.msra.mxu0 %v5475
    %6759 = vmatprep.subr.bf16.mxu0 %v5484
    %6760 = vmatpush1.bf16.msra.mxu0 %v5483
    %6761 = vmatprep.subr.bf16.mxu0 %v5492
    %6762 = vmatpush1.bf16.msra.mxu0 %v5491
    %6763 = vmatprep.subr.bf16.mxu0 %v5500
    %6764 = vmatpush1.bf16.msra.mxu0 %v5499
    %6765 = vmatprep.subr.bf16.mxu0 %v5508
    %6766 = vmatpush1.bf16.msra.mxu0 %v5507
    %6767 = vmatprep.mubr.bf16.mxu0 %v3286
    %6768 = vmatmul.mubr.bf16.gmra.mrb[0].mxu0 %v3285
    %v6769 = vpop.f32.mrb[0].mxu0
    %v6770 = vadd.f32 %v3826, %v6769
    %v6771 = vpop.f32.mrb[0].mxu0
    %v6772 = vadd.f32 %v3830, %v6771
    %v6773 = vpop.f32.mrb[0].mxu0
    %v6774 = vpop.f32.mrb[0].mxu0
    %6775 = vdwg.mxu0
    %6776 = vmatprep.subr.bf16.mxu0 %v5516
    %6777 = vmatpush1.bf16.msra.mxu0 %v5515
    %6778 = vmatprep.subr.bf16.mxu0 %v5524
    %6779 = vmatpush1.bf16.msra.mxu0 %v5523
    %6780 = vmatprep.subr.bf16.mxu0 %v5532
    %6781 = vmatpush1.bf16.msra.mxu0 %v5531
    %6782 = vmatprep.subr.bf16.mxu0 %v5540
    %6783 = vmatpush1.bf16.msra.mxu0 %v5539
    %6784 = vmatprep.subr.bf16.mxu0 %v5548
    %6785 = vmatpush1.bf16.msra.mxu0 %v5547
    %6786 = vmatprep.subr.bf16.mxu0 %v5556
    %6787 = vmatpush1.bf16.msra.mxu0 %v5555
    %6788 = vmatprep.subr.bf16.mxu0 %v5564
    %6789 = vmatpush1.bf16.msra.mxu0 %v5563
    %6790 = vmatprep.subr.bf16.mxu0 %v5572
    %6791 = vmatpush1.bf16.msra.mxu0 %v5571
    %6792 = vmatprep.subr.bf16.mxu0 %v5580
    %6793 = vmatpush1.bf16.msra.mxu0 %v5579
    %6794 = vmatprep.subr.bf16.mxu0 %v5588
    %6795 = vmatpush1.bf16.msra.mxu0 %v5587
    %6796 = vmatprep.subr.bf16.mxu0 %v5596
    %6797 = vmatpush1.bf16.msra.mxu0 %v5595
    %6798 = vmatprep.subr.bf16.mxu0 %v5604
    %6799 = vmatpush1.bf16.msra.mxu0 %v5603
    %6800 = vmatprep.subr.bf16.mxu0 %v5612
    %6801 = vmatpush1.bf16.msra.mxu0 %v5611
    %6802 = vmatprep.subr.bf16.mxu0 %v5620
    %6803 = vmatpush1.bf16.msra.mxu0 %v5619
    %6804 = vmatprep.subr.bf16.mxu0 %v5628
    %6805 = vmatpush1.bf16.msra.mxu0 %v5627
    %6806 = vmatprep.subr.bf16.mxu0 %v5636
    %6807 = vmatpush1.bf16.msra.mxu0 %v5635
    %6808 = vmatprep.mubr.bf16.mxu0 %v3288
    %6809 = vmatmul.mubr.bf16.gmra.mrb[0].mxu0 %v3287
    %v6810 = vpop.f32.mrb[0].mxu0
    %v6811 = vadd.f32 %v6770, %v6810
    %v6812 = vpop.f32.mrb[0].mxu0
    %v6813 = vadd.f32 %v6772, %v6812
    %v6814 = vpop.f32.mrb[0].mxu0
    %v6815 = vpop.f32.mrb[0].mxu0
    %6816 = vdwg.mxu0
    %6817 = vmatprep.subr.bf16.mxu0 %v5644
    %6818 = vmatpush1.bf16.msra.mxu0 %v5643
    %6819 = vmatprep.subr.bf16.mxu0 %v5652
    %6820 = vmatpush1.bf16.msra.mxu0 %v5651
    %6821 = vmatprep.subr.bf16.mxu0 %v5660
    %6822 = vmatpush1.bf16.msra.mxu0 %v5659
    %6823 = vmatprep.subr.bf16.mxu0 %v5668
    %6824 = vmatpush1.bf16.msra.mxu0 %v5667
    %6825 = vmatprep.subr.bf16.mxu0 %v5676
    %6826 = vmatpush1.bf16.msra.mxu0 %v5675
    %6827 = vmatprep.subr.bf16.mxu0 %v5684
    %6828 = vmatpush1.bf16.msra.mxu0 %v5683
    %6829 = vmatprep.subr.bf16.mxu0 %v5692
    %6830 = vmatpush1.bf16.msra.mxu0 %v5691
    %6831 = vmatprep.subr.bf16.mxu0 %v5700
    %6832 = vmatpush1.bf16.msra.mxu0 %v5699
    %6833 = vmatprep.subr.bf16.mxu0 %v5708
    %6834 = vmatpush1.bf16.msra.mxu0 %v5707
    %6835 = vmatprep.subr.bf16.mxu0 %v5716
    %6836 = vmatpush1.bf16.msra.mxu0 %v5715
    %6837 = vmatprep.subr.bf16.mxu0 %v5724
    %6838 = vmatpush1.bf16.msra.mxu0 %v5723
    %6839 = vmatprep.subr.bf16.mxu0 %v5732
    %6840 = vmatpush1.bf16.msra.mxu0 %v5731
    %6841 = vmatprep.subr.bf16.mxu0 %v5740
    %6842 = vmatpush1.bf16.msra.mxu0 %v5739
    %6843 = vmatprep.subr.bf16.mxu0 %v5748
    %6844 = vmatpush1.bf16.msra.mxu0 %v5747
    %6845 = vmatprep.subr.bf16.mxu0 %v5756
    %6846 = vmatpush1.bf16.msra.mxu0 %v5755
    %6847 = vmatprep.subr.bf16.mxu0 %v5764
    %6848 = vmatpush1.bf16.msra.mxu0 %v5763
    %6849 = vmatprep.mubr.bf16.mxu0 %v3290
    %6850 = vmatmul.mubr.bf16.gmra.mrb[0].mxu0 %v3289
    %v6851 = vpop.f32.mrb[0].mxu0
    %v6852 = vadd.f32 %v6811, %v6851
    %v6853 = vpop.f32.mrb[0].mxu0
    %v6854 = vadd.f32 %v6813, %v6853
    %v6855 = vpop.f32.mrb[0].mxu0
    %v6856 = vpop.f32.mrb[0].mxu0
    %6857 = vdwg.mxu0
    %6858 = vmatprep.subr.bf16.mxu0 %v5772
    %6859 = vmatpush1.bf16.msra.mxu0 %v5771
    %6860 = vmatprep.subr.bf16.mxu0 %v5780
    %6861 = vmatpush1.bf16.msra.mxu0 %v5779
    %6862 = vmatprep.subr.bf16.mxu0 %v5788
    %6863 = vmatpush1.bf16.msra.mxu0 %v5787
    %6864 = vmatprep.subr.bf16.mxu0 %v5796
    %6865 = vmatpush1.bf16.msra.mxu0 %v5795
    %6866 = vmatprep.subr.bf16.mxu0 %v5804
    %6867 = vmatpush1.bf16.msra.mxu0 %v5803
    %6868 = vmatprep.subr.bf16.mxu0 %v5812
    %6869 = vmatpush1.bf16.msra.mxu0 %v5811
    %6870 = vmatprep.subr.bf16.mxu0 %v5820
    %6871 = vmatpush1.bf16.msra.mxu0 %v5819
    %6872 = vmatprep.subr.bf16.mxu0 %v5828
    %6873 = vmatpush1.bf16.msra.mxu0 %v5827
    %6874 = vmatprep.subr.bf16.mxu0 %v5836
    %6875 = vmatpush1.bf16.msra.mxu0 %v5835
    %6876 = vmatprep.subr.bf16.mxu0 %v5844
    %6877 = vmatpush1.bf16.msra.mxu0 %v5843
    %6878 = vmatprep.subr.bf16.mxu0 %v5852
    %6879 = vmatpush1.bf16.msra.mxu0 %v5851
    %6880 = vmatprep.subr.bf16.mxu0 %v5860
    %6881 = vmatpush1.bf16.msra.mxu0 %v5859
    %6882 = vmatprep.subr.bf16.mxu0 %v5868
    %6883 = vmatpush1.bf16.msra.mxu0 %v5867
    %6884 = vmatprep.subr.bf16.mxu0 %v5876
    %6885 = vmatpush1.bf16.msra.mxu0 %v5875
    %6886 = vmatprep.subr.bf16.mxu0 %v5884
    %6887 = vmatpush1.bf16.msra.mxu0 %v5883
    %6888 = vmatprep.subr.bf16.mxu0 %v5892
    %6889 = vmatpush1.bf16.msra.mxu0 %v5891
    %6890 = vmatprep.mubr.bf16.mxu0 %v3292
    %6891 = vmatmul.mubr.bf16.gmra.mrb[0].mxu0 %v3291
    %v6892 = vpop.f32.mrb[0].mxu0
    %v6893 = vadd.f32 %v6852, %v6892
    %v6894 = vpop.f32.mrb[0].mxu0
    %v6895 = vadd.f32 %v6854, %v6894
    %v6896 = vpop.f32.mrb[0].mxu0
    %v6897 = vpop.f32.mrb[0].mxu0
    %6898 = vdwg.mxu0
    %6899 = vmatprep.subr.bf16.mxu0 %v5390
    %6900 = vmatpush1.bf16.msra.mxu0 %v5389
    %6901 = vmatprep.subr.bf16.mxu0 %v5398
    %6902 = vmatpush1.bf16.msra.mxu0 %v5397
    %6903 = vmatprep.subr.bf16.mxu0 %v5406
    %6904 = vmatpush1.bf16.msra.mxu0 %v5405
    %6905 = vmatprep.subr.bf16.mxu0 %v5414
    %6906 = vmatpush1.bf16.msra.mxu0 %v5413
    %6907 = vmatprep.subr.bf16.mxu0 %v5422
    %6908 = vmatpush1.bf16.msra.mxu0 %v5421
    %6909 = vmatprep.subr.bf16.mxu0 %v5430
    %6910 = vmatpush1.bf16.msra.mxu0 %v5429
    %6911 = vmatprep.subr.bf16.mxu0 %v5438
    %6912 = vmatpush1.bf16.msra.mxu0 %v5437
    %6913 = vmatprep.subr.bf16.mxu0 %v5446
    %6914 = vmatpush1.bf16.msra.mxu0 %v5445
    %6915 = vmatprep.subr.bf16.mxu0 %v5454
    %6916 = vmatpush1.bf16.msra.mxu0 %v5453
    %6917 = vmatprep.subr.bf16.mxu0 %v5462
    %6918 = vmatpush1.bf16.msra.mxu0 %v5461
    %6919 = vmatprep.subr.bf16.mxu0 %v5470
    %6920 = vmatpush1.bf16.msra.mxu0 %v5469
    %6921 = vmatprep.subr.bf16.mxu0 %v5478
    %6922 = vmatpush1.bf16.msra.mxu0 %v5477
    %6923 = vmatprep.subr.bf16.mxu0 %v5486
    %6924 = vmatpush1.bf16.msra.mxu0 %v5485
    %6925 = vmatprep.subr.bf16.mxu0 %v5494
    %6926 = vmatpush1.bf16.msra.mxu0 %v5493
    %6927 = vmatprep.subr.bf16.mxu0 %v5502
    %6928 = vmatpush1.bf16.msra.mxu0 %v5501
    %6929 = vmatprep.subr.bf16.mxu0 %v5510
    %6930 = vmatpush1.bf16.msra.mxu0 %v5509
    %6931 = vmatprep.mubr.bf16.mxu0 %v3286
    %6932 = vmatmul.mubr.bf16.gmra.mrb[0].mxu0 %v3285
    %v6933 = vpop.f32.mrb[0].mxu0
    %v6934 = vadd.f32 %v3834, %v6933
    %v6935 = vpop.f32.mrb[0].mxu0
    %v6936 = vadd.f32 %v3838, %v6935
    %v6937 = vpop.f32.mrb[0].mxu0
    %v6938 = vpop.f32.mrb[0].mxu0
    %6939 = vdwg.mxu0
    %6940 = vmatprep.subr.bf16.mxu0 %v5518
    %6941 = vmatpush1.bf16.msra.mxu0 %v5517
    %6942 = vmatprep.subr.bf16.mxu0 %v5526
    %6943 = vmatpush1.bf16.msra.mxu0 %v5525
    %6944 = vmatprep.subr.bf16.mxu0 %v5534
    %6945 = vmatpush1.bf16.msra.mxu0 %v5533
    %6946 = vmatprep.subr.bf16.mxu0 %v5542
    %6947 = vmatpush1.bf16.msra.mxu0 %v5541
    %6948 = vmatprep.subr.bf16.mxu0 %v5550
    %6949 = vmatpush1.bf16.msra.mxu0 %v5549
    %6950 = vmatprep.subr.bf16.mxu0 %v5558
    %6951 = vmatpush1.bf16.msra.mxu0 %v5557
    %6952 = vmatprep.subr.bf16.mxu0 %v5566
    %6953 = vmatpush1.bf16.msra.mxu0 %v5565
    %6954 = vmatprep.subr.bf16.mxu0 %v5574
    %6955 = vmatpush1.bf16.msra.mxu0 %v5573
    %6956 = vmatprep.subr.bf16.mxu0 %v5582
    %6957 = vmatpush1.bf16.msra.mxu0 %v5581
    %6958 = vmatprep.subr.bf16.mxu0 %v5590
    %6959 = vmatpush1.bf16.msra.mxu0 %v5589
    %6960 = vmatprep.subr.bf16.mxu0 %v5598
    %6961 = vmatpush1.bf16.msra.mxu0 %v5597
    %6962 = vmatprep.subr.bf16.mxu0 %v5606
    %6963 = vmatpush1.bf16.msra.mxu0 %v5605
    %6964 = vmatprep.subr.bf16.mxu0 %v5614
    %6965 = vmatpush1.bf16.msra.mxu0 %v5613
    %6966 = vmatprep.subr.bf16.mxu0 %v5622
    %6967 = vmatpush1.bf16.msra.mxu0 %v5621
    %6968 = vmatprep.subr.bf16.mxu0 %v5630
    %6969 = vmatpush1.bf16.msra.mxu0 %v5629
    %6970 = vmatprep.subr.bf16.mxu0 %v5638
    %6971 = vmatpush1.bf16.msra.mxu0 %v5637
    %6972 = vmatprep.mubr.bf16.mxu0 %v3288
    %6973 = vmatmul.mubr.bf16.gmra.mrb[0].mxu0 %v3287
    %v6974 = vpop.f32.mrb[0].mxu0
    %v6975 = vadd.f32 %v6934, %v6974
    %v6976 = vpop.f32.mrb[0].mxu0
    %v6977 = vadd.f32 %v6936, %v6976
    %v6978 = vpop.f32.mrb[0].mxu0
    %v6979 = vpop.f32.mrb[0].mxu0
    %6980 = vdwg.mxu0
    %6981 = vmatprep.subr.bf16.mxu0 %v5646
    %6982 = vmatpush1.bf16.msra.mxu0 %v5645
    %6983 = vmatprep.subr.bf16.mxu0 %v5654
    %6984 = vmatpush1.bf16.msra.mxu0 %v5653
    %6985 = vmatprep.subr.bf16.mxu0 %v5662
    %6986 = vmatpush1.bf16.msra.mxu0 %v5661
    %6987 = vmatprep.subr.bf16.mxu0 %v5670
    %6988 = vmatpush1.bf16.msra.mxu0 %v5669
    %6989 = vmatprep.subr.bf16.mxu0 %v5678
    %6990 = vmatpush1.bf16.msra.mxu0 %v5677
    %6991 = vmatprep.subr.bf16.mxu0 %v5686
    %6992 = vmatpush1.bf16.msra.mxu0 %v5685
    %6993 = vmatprep.subr.bf16.mxu0 %v5694
    %6994 = vmatpush1.bf16.msra.mxu0 %v5693
    %6995 = vmatprep.subr.bf16.mxu0 %v5702
    %6996 = vmatpush1.bf16.msra.mxu0 %v5701
    %6997 = vmatprep.subr.bf16.mxu0 %v5710
    %6998 = vmatpush1.bf16.msra.mxu0 %v5709
    %6999 = vmatprep.subr.bf16.mxu0 %v5718
    %7000 = vmatpush1.bf16.msra.mxu0 %v5717
    %7001 = vmatprep.subr.bf16.mxu0 %v5726
    %7002 = vmatpush1.bf16.msra.mxu0 %v5725
    %7003 = vmatprep.subr.bf16.mxu0 %v5734
    %7004 = vmatpush1.bf16.msra.mxu0 %v5733
    %7005 = vmatprep.subr.bf16.mxu0 %v5742
    %7006 = vmatpush1.bf16.msra.mxu0 %v5741
    %7007 = vmatprep.subr.bf16.mxu0 %v5750
    %7008 = vmatpush1.bf16.msra.mxu0 %v5749
    %7009 = vmatprep.subr.bf16.mxu0 %v5758
    %7010 = vmatpush1.bf16.msra.mxu0 %v5757
    %7011 = vmatprep.subr.bf16.mxu0 %v5766
    %7012 = vmatpush1.bf16.msra.mxu0 %v5765
    %7013 = vmatprep.mubr.bf16.mxu0 %v3290
    %7014 = vmatmul.mubr.bf16.gmra.mrb[0].mxu0 %v3289
    %v7015 = vpop.f32.mrb[0].mxu0
    %v7016 = vadd.f32 %v6975, %v7015
    %v7017 = vpop.f32.mrb[0].mxu0
    %v7018 = vadd.f32 %v6977, %v7017
    %v7019 = vpop.f32.mrb[0].mxu0
    %v7020 = vpop.f32.mrb[0].mxu0
    %7021 = vdwg.mxu0
    %7022 = vmatprep.subr.bf16.mxu0 %v5774
    %7023 = vmatpush1.bf16.msra.mxu0 %v5773
    %7024 = vmatprep.subr.bf16.mxu0 %v5782
    %7025 = vmatpush1.bf16.msra.mxu0 %v5781
    %7026 = vmatprep.subr.bf16.mxu0 %v5790
    %7027 = vmatpush1.bf16.msra.mxu0 %v5789
    %7028 = vmatprep.subr.bf16.mxu0 %v5798
    %7029 = vmatpush1.bf16.msra.mxu0 %v5797
    %7030 = vmatprep.subr.bf16.mxu0 %v5806
    %7031 = vmatpush1.bf16.msra.mxu0 %v5805
    %7032 = vmatprep.subr.bf16.mxu0 %v5814
    %7033 = vmatpush1.bf16.msra.mxu0 %v5813
    %7034 = vmatprep.subr.bf16.mxu0 %v5822
    %7035 = vmatpush1.bf16.msra.mxu0 %v5821
    %7036 = vmatprep.subr.bf16.mxu0 %v5830
    %7037 = vmatpush1.bf16.msra.mxu0 %v5829
    %7038 = vmatprep.subr.bf16.mxu0 %v5838
    %7039 = vmatpush1.bf16.msra.mxu0 %v5837
    %7040 = vmatprep.subr.bf16.mxu0 %v5846
    %7041 = vmatpush1.bf16.msra.mxu0 %v5845
    %7042 = vmatprep.subr.bf16.mxu0 %v5854
    %7043 = vmatpush1.bf16.msra.mxu0 %v5853
    %7044 = vmatprep.subr.bf16.mxu0 %v5862
    %7045 = vmatpush1.bf16.msra.mxu0 %v5861
    %7046 = vmatprep.subr.bf16.mxu0 %v5870
    %7047 = vmatpush1.bf16.msra.mxu0 %v5869
    %7048 = vmatprep.subr.bf16.mxu0 %v5878
    %7049 = vmatpush1.bf16.msra.mxu0 %v5877
    %7050 = vmatprep.subr.bf16.mxu0 %v5886
    %7051 = vmatpush1.bf16.msra.mxu0 %v5885
    %7052 = vmatprep.subr.bf16.mxu0 %v5894
    %7053 = vmatpush1.bf16.msra.mxu0 %v5893
    %7054 = vmatprep.mubr.bf16.mxu0 %v3292
    %7055 = vmatmul.mubr.bf16.gmra.mrb[0].mxu0 %v3291
    %v7056 = vpop.f32.mrb[0].mxu0
    %v7057 = vadd.f32 %v7016, %v7056
    %v7058 = vpop.f32.mrb[0].mxu0
    %v7059 = vadd.f32 %v7018, %v7058
    %v7060 = vpop.f32.mrb[0].mxu0
    %v7061 = vpop.f32.mrb[0].mxu0
    %7062 = vdwg.mxu0
    %v7063 = vtanh.pop %v6565
    %v7064 = vtanh.pop %v6567
    %v7065 = vtanh.pop %v6729
    %v7066 = vtanh.pop %v6731
    %v7067 = vtanh.pop %v6893
    %v7068 = vtanh.pop %v6895
    %v7069 = vtanh.pop %v7057
    %v7070 = vtanh.pop %v7059
    %7071 = vst [vmem:[#allocation25] sm:$0xff] %v7063
    %7072 = vst [vmem:[#allocation25 + $0x8] sm:$0xff] %v7064
    %7073 = vst [vmem:[#allocation25 + $0x10] sm:$0xff] %v7065
    %7074 = vst [vmem:[#allocation25 + $0x18] sm:$0xff] %v7066
    %7075 = vst [vmem:[#allocation25 + $0x20] sm:$0xff] %v7067
    %7076 = vst [vmem:[#allocation25 + $0x28] sm:$0xff] %v7068
    %7077 = vst [vmem:[#allocation25 + $0x30] sm:$0xff] %v7069
    %7078 = vst [vmem:[#allocation25 + $0x38] sm:$0xff] %v7070
    // Predicated region
    $region114: #{tpu_custom_call.1} parent=1 // pred_check
      _
    $region115: #{tpu_custom_call.1} parent=1 // pred_check_branch
      %7080 = sbr.rel (0) target = $region117
    $region116: #{tpu_custom_call.1} parent=1 // pred_region
      %s7082 = ssub.s32 1024, 1024
      %7083 = vsyncadd [#allocation4], %s7082
      %s7085 = sshll.u32 [#allocation25], 4
      %s7086 = int_to_ptr.vmem [resolvable:$true] %s7085
      %7088 = dma.vmem_to_hbm [thread:$0]  %s7086, 1024, %s14, [#allocation4]
    $region117: #{tpu_custom_call.1} parent=1 // pred_fallthru
      _
    // Predicated region
    $region118: #{tpu_custom_call.1} parent=1 // pred_check
      _
    $region119: #{tpu_custom_call.1} parent=1 // pred_check_branch
      %7090 = sbr.rel (0) target = $region121
    $region120: #{tpu_custom_call.1} parent=1 // pred_region
      %7091 = dma.done [#allocation4], 1024
    $region121: #{tpu_custom_call.1} parent=1 // pred_fallthru
      _
    %7092 = vsyncpa [#allocation3], 1
    %7093 = vsyncpa [#allocation6], 1
    %7094 = vsyncpa [#allocation9], 1
    %7095 = vsyncpa [#allocation12], 1
    %7096 = vsyncpa [#allocation15], 1
    %7097 = vsyncpa [#allocation18], 1
    %7098 = vsyncpa [#allocation21], 1
    %7099 = vsyncpa [#allocation24], 1
    %7100 = vsyncpa [#allocation4], 1

</llo_original>
